<compile_context>
chip_gen: v5e
topology: v5e:2x2
jax: 0.10.0
libtpu: 0.0.40
codegen_flags: <defaults>
</compile_context>

<pallas_src>
import functools

import jax
import jax.numpy as jnp
from jax.experimental import pallas as pl
from jax.experimental.pallas import tpu as pltpu

EPS = 1e-5  # torch.nn.LayerNorm default eps


# ---------------------------------------------------------------------------
# math helpers
# ---------------------------------------------------------------------------
def _layernorm(x, gamma, beta):
    mu = jnp.mean(x, axis=-1, keepdims=True)
    var = jnp.mean((x - mu) ** 2, axis=-1, keepdims=True)
    return (x - mu) * jax.lax.rsqrt(var + EPS) * gamma + beta


def _gelu(x):
    # exact (erf) GELU == torch.nn.GELU() default
    return 0.5 * x * (1.0 + jax.lax.erf(x * 0.7071067811865476))


def _mm(a, b, dims=(((1,), (0,)), ((), ()))):
    """bf16 MXU matmul with f32 accumulation."""
    return jax.lax.dot_general(
        a.astype(jnp.bfloat16), b.astype(jnp.bfloat16), dims,
        preferred_element_type=jnp.float32)


def _mm_nt(a, b):
    """a @ b.T (contract last dims of both) without an explicit transpose."""
    return _mm(a, b, (((1,), (1,)), ((), ())))


# ---------------------------------------------------------------------------
# Fused ViT kernel: tokenize -> depth x transformer -> mlp_head
# ---------------------------------------------------------------------------
def vit_fused_kernel(
    # inputs ------------------------------------------------------------
    patches_ref,                                          # (1, N, patch_dim)
    tg1_ref, tb1_ref, tw_ref, tbw_ref, tg2_ref, tb2_ref,  # tokenization
    cls_ref, pos_ref,                                     # (3, D), (N+3, D)
    ga_ref, ba_ref, wq_ref, wk_ref, wv_ref, wo_ref, bo_ref,   # per-depth attn
    gf_ref, bf_ref, w1_ref, fb1_ref, w2_ref, fb2_ref,         # per-depth ffn
    hg_ref, hb_ref, hw1_ref, hb1_ref, hw2_ref, hb2_ref,       # mlp head
    # output ------------------------------------------------------------
    o_ref,                                                # (1, 1, num_classes)
    # scratch -----------------------------------------------------------
    x_scr,                                                # VMEM (S, D) f32
    *, heads, num_patches, seq_len, dim,
):
    d = pl.program_id(1)

    # ---- prologue (d == 0): tokenize, append cls tokens, add pos ----------
    @pl.when(d == 0)
    def _prologue():
        p = patches_ref[0]                                # (N, patch_dim)
        t = _layernorm(p, tg1_ref[...], tb1_ref[...])
        t = _mm(t, tw_ref[...]) + tbw_ref[...]
        t = _layernorm(t, tg2_ref[...], tb2_ref[...])
        x_scr[0:num_patches, :] = t + pos_ref[0:num_patches, :]
        x_scr[num_patches:seq_len, :] = cls_ref[...] + pos_ref[num_patches:seq_len, :]

    # ---- one transformer block (PreNorm attention + PreNorm FFN) ----------
    x = x_scr[...]                                        # (S, D) f32, VMEM-resident
    xa = _layernorm(x, ga_ref[0], ba_ref[0])

    acc = jnp.zeros((seq_len, dim), jnp.float32)
    for h in range(heads):                                # static unroll; 2-D MXU ops only
        qh = _mm(xa, wq_ref[0, h])                        # (S, dh); 1/sqrt(dh) pre-folded
        kh = _mm(xa, wk_ref[0, h])                        # (S, dh)
        vh = _mm(xa, wv_ref[0, h])                        # (S, dh)
        s = _mm_nt(qh, kh)                                # (S, S) scores
        s = s - jnp.max(s, axis=-1, keepdims=True)
        e = jnp.exp(s)
        p_h = e * pl.reciprocal(jnp.sum(e, axis=-1, keepdims=True), approx=True)
        oh = _mm(p_h, vh)                                 # (S, dh)
        acc = acc + _mm(oh, wo_ref[0, h])                 # (S, D)  == o_h @ Wo[h]
    x1 = x + acc + bo_ref[0]                              # attention residual

    xf = _layernorm(x1, gf_ref[0], bf_ref[0])
    hdn = _gelu(_mm(xf, w1_ref[0]) + fb1_ref[0])
    x2 = x1 + _mm(hdn, w2_ref[0]) + fb2_ref[0]            # FFN residual
    x_scr[...] = x2

    # ---- epilogue (last depth step): [steering, accel, speed] -> mlp_head --
    @pl.when(d == pl.num_programs(1) - 1)
    def _epilogue():
        rows = x_scr[seq_len - 3:seq_len, :]              # (3, D) = steering, accel, speed
        # LayerNorm over the flattened 3*D feature vector (torch cat order)
        mu = jnp.sum(jnp.sum(rows, axis=-1, keepdims=True),
                     axis=-2, keepdims=True) / (3.0 * dim)
        ctr = rows - mu
        var = jnp.sum(jnp.sum(ctr * ctr, axis=-1, keepdims=True),
                      axis=-2, keepdims=True) / (3.0 * dim)
        rn = ctr * jax.lax.rsqrt(var + EPS) * hg_ref[...] + hb_ref[...]
        # Linear(3*D, 128) expressed row-wise -> no lane concatenation needed
        hdn2 = (_mm(rn[0:1, :], hw1_ref[0]) + _mm(rn[1:2, :], hw1_ref[1])
                + _mm(rn[2:3, :], hw1_ref[2]) + hb1_ref[...])
        o_ref[0] = _mm(hdn2, hw2_ref[...]) + hb2_ref[...]  # Linear(128, num_classes)


# ---------------------------------------------------------------------------
# wrapper
# ---------------------------------------------------------------------------
def _const_spec(a):
    nd = a.ndim
    return pl.BlockSpec(a.shape, lambda b, d, nd=nd: (0,) * nd)


def _depth_spec(a):
    nd = a.ndim
    return pl.BlockSpec((1,) + tuple(a.shape[1:]),
                        lambda b, d, nd=nd: (d,) + (0,) * (nd - 1))


def vit_forward_pallas(img, kp, *, patch_size):
    B, CH, H, W = img.shape
    ph = pw = patch_size
    gh, gw = H // ph, W // pw
    # einops: 'b c (h p1) (w p2) -> b (h w) (p1 p2 c)'   (layout glue, plain JAX)
    patches = (img.reshape(B, CH, gh, ph, gw, pw)
               .transpose(0, 2, 4, 3, 5, 1)
               .reshape(B, gh * gw, ph * pw * CH))
    n_patches = gh * gw
    patch_dim = ph * pw * CH

    depth, heads, dim, _dh = kp["wq"].shape
    seq_len = n_patches + 3
    num_classes = kp["hw2"].shape[1]

    const_names = ("tg1", "tb1", "tw", "tbw", "tg2", "tb2", "cls", "pos")
    depth_names = ("ga", "ba", "wq", "wk", "wv", "wo", "bo",
                   "gf", "bf", "w1", "fb1", "w2", "fb2")
    head_names = ("hg", "hb", "hw1", "hb1", "hw2", "hb2")

    args = ([patches] + [kp[n] for n in const_names]
            + [kp[n] for n in depth_names] + [kp[n] for n in head_names])
    in_specs = ([pl.BlockSpec((1, n_patches, patch_dim), lambda b, d: (b, 0, 0))]
                + [_const_spec(kp[n]) for n in const_names]
                + [_depth_spec(kp[n]) for n in depth_names]
                + [_const_spec(kp[n]) for n in head_names])

    kern = functools.partial(vit_fused_kernel, heads=heads,
                             num_patches=n_patches, seq_len=seq_len, dim=dim)
    out = pl.pallas_call(
        kern,
        out_shape=jax.ShapeDtypeStruct((B, 1, num_classes), jnp.float32),
        grid=(B, depth),
        in_specs=in_specs,
        out_specs=pl.BlockSpec((1, 1, num_classes), lambda b, d: (b, 0, 0)),
        scratch_shapes=[pltpu.VMEM((seq_len, dim), jnp.float32)],
        compiler_params=pltpu.CompilerParams(
            dimension_semantics=("parallel", "arbitrary"),
            vmem_limit_bytes=32 * 1024 * 1024),
    )(*args)
    return out[:, 0, :]


# ---------------------------------------------------------------------------
# parameter prep: torch-style params -> kernel layout (bf16 weights, per-head
# split on leading axes, per-depth stacking, folded attention scale)
# ---------------------------------------------------------------------------
def prepare_kernel_params(params, *, heads, dim_head):
    inner = heads * dim_head
    scale = 1.0 / (dim_head ** 0.5)
    bf16 = jnp.bfloat16
    t = params["tok"]
    dim = t["w"].shape[1]
    row2 = lambda v: v.reshape(1, -1).astype(jnp.float32)

    kp = dict(
        tg1=row2(t["g1"]), tb1=row2(t["b1"]),
        tw=t["w"].astype(bf16), tbw=row2(t["bw"]),
        tg2=row2(t["g2"]), tb2=row2(t["b2"]),
        cls=params["cls_token"].astype(jnp.float32),
        pos=params["pos_embedding"].astype(jnp.float32),
    )

    def split_heads(w):  # (dim, inner) -> (heads, dim, dim_head)
        return w.reshape(dim, heads, dim_head).transpose(1, 0, 2)

    ga, ba, wq, wk, wv, wo, bo, gf, bf_, w1, fb1, w2, fb2 = ([] for _ in range(13))
    for blk in params["blocks"]:
        ga.append(blk["ga"].reshape(1, dim)); ba.append(blk["ba"].reshape(1, dim))
        wq.append(split_heads(blk["wqkv"][:, :inner]) * scale)
        wk.append(split_heads(blk["wqkv"][:, inner:2 * inner]))
        wv.append(split_heads(blk["wqkv"][:, 2 * inner:]))
        wo.append(blk["wo"].reshape(heads, dim_head, dim))
        bo.append(blk["bo"].reshape(1, dim))
        gf.append(blk["gf"].reshape(1, dim)); bf_.append(blk["bf"].reshape(1, dim))
        w1.append(blk["w1"]); fb1.append(blk["b1"].reshape(1, -1))
        w2.append(blk["w2"]); fb2.append(blk["b2"].reshape(1, dim))
    stk = lambda xs, dt=jnp.float32: jnp.stack(xs).astype(dt)
    kp.update(
        ga=stk(ga), ba=stk(ba),
        wq=stk(wq, bf16), wk=stk(wk, bf16), wv=stk(wv, bf16), wo=stk(wo, bf16),
        bo=stk(bo), gf=stk(gf), bf=stk(bf_),
        w1=stk(w1, bf16), fb1=stk(fb1), w2=stk(w2, bf16), fb2=stk(fb2),
    )

    hp = params["head"]
    hhid = hp["w1"].shape[1]
    kp.update(
        hg=hp["g"].reshape(3, dim).astype(jnp.float32),
        hb=hp["b"].reshape(3, dim).astype(jnp.float32),
        hw1=hp["w1"].reshape(3, dim, hhid).astype(bf16),
        hb1=hp["b1"].reshape(1, hhid).astype(jnp.float32),
        hw2=hp["w2"].astype(bf16),
        hb2=hp["b2"].reshape(1, -1).astype(jnp.float32),
    )
    return kp


# ---------------------------------------------------------------------------
# pure-JAX f32 reference (faithful to the PyTorch forward, B >= 2 so
# torch.squeeze is a no-op)
# ---------------------------------------------------------------------------
def vit_reference(img, params, *, patch_size, heads, dim_head):
    B, CH, H, W = img.shape
    ph = pw = patch_size
    gh, gw = H // ph, W // pw
    patches = (img.reshape(B, CH, gh, ph, gw, pw)
               .transpose(0, 2, 4, 3, 5, 1)
               .reshape(B, gh * gw, ph * pw * CH))
    dot = functools.partial(jnp.dot, precision=jax.lax.Precision.HIGHEST)

    t = params["tok"]
    x = _layernorm(patches, t["g1"], t["b1"])
    x = dot(x, t["w"]) + t["bw"]
    x = _layernorm(x, t["g2"], t["b2"])
    D = x.shape[-1]
    cls = jnp.broadcast_to(params["cls_token"][None], (B, 3, D))
    x = jnp.concatenate([x, cls], axis=1) + params["pos_embedding"][None]

    inner = heads * dim_head
    for blk in params["blocks"]:
        S = x.shape[1]
        xa = _layernorm(x, blk["ga"], blk["ba"])
        qkv = dot(xa, blk["wqkv"])
        q, k, v = qkv[..., :inner], qkv[..., inner:2 * inner], qkv[..., 2 * inner:]
        split = lambda u: u.reshape(B, S, heads, dim_head).transpose(0, 2, 1, 3)
        q, k, v = split(q), split(k), split(v)
        s = jnp.einsum("bhqd,bhkd->bhqk", q, k, precision="highest") / (dim_head ** 0.5)
        p = jax.nn.softmax(s, axis=-1)
        a = (jnp.einsum("bhqk,bhkd->bhqd", p, v, precision="highest")
             .transpose(0, 2, 1, 3).reshape(B, S, inner))
        x = x + dot(a, blk["wo"]) + blk["bo"]
        xf = _layernorm(x, blk["gf"], blk["bf"])
        x = x + dot(_gelu(dot(xf, blk["w1"]) + blk["b1"]), blk["w2"]) + blk["b2"]

    speed, accel, steering = x[:, -1, :], x[:, -2, :], x[:, -3, :]
    res = jnp.concatenate([steering, accel, speed], axis=-1)   # (B, 3*D)
    h = params["head"]
    r = _layernorm(res, h["g"], h["b"])
    r = dot(r, h["w1"]) + h["b1"]
    return dot(r, h["w2"]) + h["b2"]


# ---------------------------------------------------------------------------
# deterministic init (shapes implied by the PyTorch __init__)
# ---------------------------------------------------------------------------
def init_params(key, *, patch_dim, dim, depth, heads, dim_head, mlp_dim,
                num_classes, num_patches):
    inner = heads * dim_head
    k_it = iter(jax.random.split(key, 64))
    nrm = lambda shape, s=0.02: (s * jax.random.normal(next(k_it), shape)).astype(jnp.float32)
    gamma = lambda n: (1.0 + 0.1 * jax.random.normal(next(k_it), (n,))).astype(jnp.float32)
    beta = lambda n: (0.1 * jax.random.normal(next(k_it), (n,))).astype(jnp.float32)

    tok = dict(g1=gamma(patch_dim), b1=beta(patch_dim),
               w=nrm((patch_dim, dim)), bw=beta(dim),
               g2=gamma(dim), b2=beta(dim))
    blocks = []
    for _ in range(depth):
        blocks.append(dict(
            ga=gamma(dim), ba=beta(dim),
            wqkv=nrm((dim, 3 * inner)),                 # to_qkv (bias=False)
            wo=nrm((inner, dim)), bo=beta(dim),         # final_linear
            gf=gamma(dim), bf=beta(dim),
            w1=nrm((dim, mlp_dim)), b1=beta(mlp_dim),
            w2=nrm((mlp_dim, dim)), b2=beta(dim)))
    head = dict(g=gamma(3 * dim), b=beta(3 * dim),      # LayerNorm(3*dim)
                w1=nrm((3 * dim, 128)), b1=beta(128),   # Linear(3*dim, 128)
                w2=nrm((128, num_classes)), b2=beta(num_classes))
    pos_embedding = nrm((num_patches + 3, dim), 1.0)    # nn.Parameter(randn)
    cls_token = nrm((3, dim), 1.0)                      # nn.Parameter(randn((3, dim)))
    return dict(tok=tok, blocks=blocks, head=head,
                pos_embedding=pos_embedding, cls_token=cls_token)


# ---------------------------------------------------------------------------
if __name__ == "__main__":
    B, CH, IMG, PATCH = 2, 3, 16, 4
    DIM, DEPTH, HEADS, DIM_HEAD, MLP_DIM, NUM_CLASSES = 32, 2, 4, 8, 64, 10
    NUM_PATCHES = (IMG // PATCH) * (IMG // PATCH)       # 16  -> seq = 19
    PATCH_DIM = PATCH * PATCH * CH                      # 48

    key = jax.random.PRNGKey(0)
    k_img, k_par = jax.random.split(key)
    img = jax.random.normal(k_img, (B, CH, IMG, IMG), jnp.float32)
    params = init_params(k_par, patch_dim=PATCH_DIM, dim=DIM, depth=DEPTH,
                         heads=HEADS, dim_head=DIM_HEAD, mlp_dim=MLP_DIM,
                         num_classes=NUM_CLASSES, num_patches=NUM_PATCHES)
    kparams = prepare_kernel_params(params, heads=HEADS, dim_head=DIM_HEAD)

    fwd = jax.jit(functools.partial(vit_forward_pallas, patch_size=PATCH))
    out = fwd(img, kparams)
    jax.block_until_ready(out)

    ref = vit_reference(img, params, patch_size=PATCH, heads=HEADS, dim_head=DIM_HEAD)
    assert out.shape == (B, NUM_CLASSES), out.shape
    max_err = float(jnp.max(jnp.abs(out - ref)))
    # bf16 MXU inputs vs f32 reference -> relaxed tolerance
    assert jnp.allclose(out, ref, atol=3e-2, rtol=3e-2), max_err

    print("KERNEL_OK")
</pallas_src>

<mosaic_0001>
module attributes {stable_mosaic.version = 11 : i64} {
  func.func @vit_fused_kernel(%arg0: i32, %arg1: i32, %arg2: memref<1x16x48xf32, #tpu.memory_space<vmem>>, %arg3: memref<1x48xf32, #tpu.memory_space<vmem>>, %arg4: memref<1x48xf32, #tpu.memory_space<vmem>>, %arg5: memref<48x32xbf16, #tpu.memory_space<vmem>>, %arg6: memref<1x32xf32, #tpu.memory_space<vmem>>, %arg7: memref<1x32xf32, #tpu.memory_space<vmem>>, %arg8: memref<1x32xf32, #tpu.memory_space<vmem>>, %arg9: memref<3x32xf32, #tpu.memory_space<vmem>>, %arg10: memref<19x32xf32, #tpu.memory_space<vmem>>, %arg11: memref<1x1x32xf32, #tpu.memory_space<vmem>>, %arg12: memref<1x1x32xf32, #tpu.memory_space<vmem>>, %arg13: memref<1x4x32x8xbf16, #tpu.memory_space<vmem>>, %arg14: memref<1x4x32x8xbf16, #tpu.memory_space<vmem>>, %arg15: memref<1x4x32x8xbf16, #tpu.memory_space<vmem>>, %arg16: memref<1x4x8x32xbf16, #tpu.memory_space<vmem>>, %arg17: memref<1x1x32xf32, #tpu.memory_space<vmem>>, %arg18: memref<1x1x32xf32, #tpu.memory_space<vmem>>, %arg19: memref<1x1x32xf32, #tpu.memory_space<vmem>>, %arg20: memref<1x32x64xbf16, #tpu.memory_space<vmem>>, %arg21: memref<1x1x64xf32, #tpu.memory_space<vmem>>, %arg22: memref<1x64x32xbf16, #tpu.memory_space<vmem>>, %arg23: memref<1x1x32xf32, #tpu.memory_space<vmem>>, %arg24: memref<3x32xf32, #tpu.memory_space<vmem>>, %arg25: memref<3x32xf32, #tpu.memory_space<vmem>>, %arg26: memref<3x32x128xbf16, #tpu.memory_space<vmem>>, %arg27: memref<1x128xf32, #tpu.memory_space<vmem>>, %arg28: memref<128x10xbf16, #tpu.memory_space<vmem>>, %arg29: memref<1x10xf32, #tpu.memory_space<vmem>>, %arg30: memref<1x1x10xf32, #tpu.memory_space<vmem>>, %arg31: memref<19x32xf32, #tpu.memory_space<vmem>>) attributes {dimension_semantics = [#tpu.dimension_semantics<parallel>, #tpu.dimension_semantics<arbitrary>], iteration_bounds = array<i64: 2, 2>, scalar_prefetch = 0 : i64, scratch_operands = 1 : i64, tpu.core_type = #tpu.core_type<tc>, window_params = [{transform_indices = @transform_0, window_bounds = array<i64: 1, 16, 48>}, {pipeline_mode = #tpu.pipeline_mode<synchronous>, transform_indices = @transform_1, window_bounds = array<i64: 1, 48>}, {pipeline_mode = #tpu.pipeline_mode<synchronous>, transform_indices = @transform_2, window_bounds = array<i64: 1, 48>}, {pipeline_mode = #tpu.pipeline_mode<synchronous>, transform_indices = @transform_3, window_bounds = array<i64: 48, 32>}, {pipeline_mode = #tpu.pipeline_mode<synchronous>, transform_indices = @transform_4, window_bounds = array<i64: 1, 32>}, {pipeline_mode = #tpu.pipeline_mode<synchronous>, transform_indices = @transform_5, window_bounds = array<i64: 1, 32>}, {pipeline_mode = #tpu.pipeline_mode<synchronous>, transform_indices = @transform_6, window_bounds = array<i64: 1, 32>}, {pipeline_mode = #tpu.pipeline_mode<synchronous>, transform_indices = @transform_7, window_bounds = array<i64: 3, 32>}, {pipeline_mode = #tpu.pipeline_mode<synchronous>, transform_indices = @transform_8, window_bounds = array<i64: 19, 32>}, {transform_indices = @transform_9, window_bounds = array<i64: 1, 1, 32>}, {transform_indices = @transform_10, window_bounds = array<i64: 1, 1, 32>}, {transform_indices = @transform_11, window_bounds = array<i64: 1, 4, 32, 8>}, {transform_indices = @transform_12, window_bounds = array<i64: 1, 4, 32, 8>}, {transform_indices = @transform_13, window_bounds = array<i64: 1, 4, 32, 8>}, {transform_indices = @transform_14, window_bounds = array<i64: 1, 4, 8, 32>}, {transform_indices = @transform_15, window_bounds = array<i64: 1, 1, 32>}, {transform_indices = @transform_16, window_bounds = array<i64: 1, 1, 32>}, {transform_indices = @transform_17, window_bounds = array<i64: 1, 1, 32>}, {transform_indices = @transform_18, window_bounds = array<i64: 1, 32, 64>}, {transform_indices = @transform_19, window_bounds = array<i64: 1, 1, 64>}, {transform_indices = @transform_20, window_bounds = array<i64: 1, 64, 32>}, {transform_indices = @transform_21, window_bounds = array<i64: 1, 1, 32>}, {pipeline_mode = #tpu.pipeline_mode<synchronous>, transform_indices = @transform_22, window_bounds = array<i64: 3, 32>}, {pipeline_mode = #tpu.pipeline_mode<synchronous>, transform_indices = @transform_23, window_bounds = array<i64: 3, 32>}, {pipeline_mode = #tpu.pipeline_mode<synchronous>, transform_indices = @transform_24, window_bounds = array<i64: 3, 32, 128>}, {pipeline_mode = #tpu.pipeline_mode<synchronous>, transform_indices = @transform_25, window_bounds = array<i64: 1, 128>}, {pipeline_mode = #tpu.pipeline_mode<synchronous>, transform_indices = @transform_26, window_bounds = array<i64: 128, 10>}, {pipeline_mode = #tpu.pipeline_mode<synchronous>, transform_indices = @transform_27, window_bounds = array<i64: 1, 10>}, {transform_indices = @transform_28, window_bounds = array<i64: 1, 1, 10>}]} {
    %c0_i32 = arith.constant 0 : i32
    %0 = arith.cmpi eq, %arg1, %c0_i32 : i32
    %1 = arith.extui %0 : i1 to i32
    %c0_i32_0 = arith.constant 0 : i32
    %2 = arith.cmpi ne, %1, %c0_i32_0 : i32
    scf.if %2 {
      %c0_140 = arith.constant 0 : index
      %c0_141 = arith.constant 0 : index
      %c0_142 = arith.constant 0 : index
      %223 = vector.load %arg2[%c0_140, %c0_141, %c0_142] : memref<1x16x48xf32, #tpu.memory_space<vmem>>, vector<1x16x48xf32>
      %224 = vector.shape_cast %223 : vector<1x16x48xf32> to vector<16x48xf32>
      %c0_143 = arith.constant 0 : index
      %c0_144 = arith.constant 0 : index
      %225 = vector.load %arg3[%c0_143, %c0_144] : memref<1x48xf32, #tpu.memory_space<vmem>>, vector<1x48xf32>
      %c0_145 = arith.constant 0 : index
      %c0_146 = arith.constant 0 : index
      %226 = vector.load %arg4[%c0_145, %c0_146] : memref<1x48xf32, #tpu.memory_space<vmem>>, vector<1x48xf32>
      %cst_147 = arith.constant dense<0.000000e+00> : vector<16xf32>
      %227 = vector.multi_reduction <add>, %224, %cst_147 [1] : vector<16x48xf32> to vector<16xf32>
      %228 = vector.shape_cast %227 : vector<16xf32> to vector<16x1xf32>
      %cst_148 = arith.constant 4.800000e+01 : f32
      %229 = vector.broadcast %cst_148 : f32 to vector<16x1xf32>
      %230 = arith.divf %228, %229 : vector<16x1xf32>
      %231 = vector.broadcast %230 : vector<16x1xf32> to vector<16x48xf32>
      %232 = arith.subf %224, %231 : vector<16x48xf32>
      %233 = arith.mulf %232, %232 : vector<16x48xf32>
      %cst_149 = arith.constant dense<0.000000e+00> : vector<16xf32>
      %234 = vector.multi_reduction <add>, %233, %cst_149 [1] : vector<16x48xf32> to vector<16xf32>
      %235 = vector.shape_cast %234 : vector<16xf32> to vector<16x1xf32>
      %cst_150 = arith.constant 4.800000e+01 : f32
      %236 = vector.broadcast %cst_150 : f32 to vector<16x1xf32>
      %237 = arith.divf %235, %236 : vector<16x1xf32>
      %238 = vector.broadcast %230 : vector<16x1xf32> to vector<16x48xf32>
      %239 = arith.subf %224, %238 : vector<16x48xf32>
      %cst_151 = arith.constant 9.99999974E-6 : f32
      %240 = vector.broadcast %cst_151 : f32 to vector<16x1xf32>
      %241 = arith.addf %237, %240 : vector<16x1xf32>
      %242 = math.rsqrt %241 : vector<16x1xf32>
      %243 = vector.broadcast %242 : vector<16x1xf32> to vector<16x48xf32>
      %244 = arith.mulf %239, %243 : vector<16x48xf32>
      %245 = vector.broadcast %225 : vector<1x48xf32> to vector<16x48xf32>
      %246 = arith.mulf %244, %245 : vector<16x48xf32>
      %247 = vector.broadcast %226 : vector<1x48xf32> to vector<16x48xf32>
      %248 = arith.addf %246, %247 : vector<16x48xf32>
      %c0_152 = arith.constant 0 : index
      %c0_153 = arith.constant 0 : index
      %249 = vector.load %arg5[%c0_152, %c0_153] : memref<48x32xbf16, #tpu.memory_space<vmem>>, vector<48x32xbf16>
      %250 = arith.truncf %248 : vector<16x48xf32> to vector<16x48xbf16>
      %cst_154 = arith.constant dense<0.000000e+00> : vector<16x32xf32>
      %251 = tpu.matmul %250, %249, %cst_154 {dimension_numbers = #tpu.dot_dimension_numbers<[1], [0], [0], [1], [0, 0, 1, 1], [], []>} : vector<16x48xbf16>, vector<48x32xbf16>, vector<16x32xf32> -> vector<16x32xf32>
      %c0_155 = arith.constant 0 : index
      %c0_156 = arith.constant 0 : index
      %252 = vector.load %arg6[%c0_155, %c0_156] : memref<1x32xf32, #tpu.memory_space<vmem>>, vector<1x32xf32>
      %253 = vector.broadcast %252 : vector<1x32xf32> to vector<16x32xf32>
      %254 = arith.addf %251, %253 : vector<16x32xf32>
      %c0_157 = arith.constant 0 : index
      %c0_158 = arith.constant 0 : index
      %255 = vector.load %arg7[%c0_157, %c0_158] : memref<1x32xf32, #tpu.memory_space<vmem>>, vector<1x32xf32>
      %c0_159 = arith.constant 0 : index
      %c0_160 = arith.constant 0 : index
      %256 = vector.load %arg8[%c0_159, %c0_160] : memref<1x32xf32, #tpu.memory_space<vmem>>, vector<1x32xf32>
      %cst_161 = arith.constant dense<0.000000e+00> : vector<16xf32>
      %257 = vector.multi_reduction <add>, %254, %cst_161 [1] : vector<16x32xf32> to vector<16xf32>
      %258 = vector.shape_cast %257 : vector<16xf32> to vector<16x1xf32>
      %cst_162 = arith.constant 3.200000e+01 : f32
      %259 = vector.broadcast %cst_162 : f32 to vector<16x1xf32>
      %260 = arith.divf %258, %259 : vector<16x1xf32>
      %261 = vector.broadcast %260 : vector<16x1xf32> to vector<16x32xf32>
      %262 = arith.subf %254, %261 : vector<16x32xf32>
      %263 = arith.mulf %262, %262 : vector<16x32xf32>
      %cst_163 = arith.constant dense<0.000000e+00> : vector<16xf32>
      %264 = vector.multi_reduction <add>, %263, %cst_163 [1] : vector<16x32xf32> to vector<16xf32>
      %265 = vector.shape_cast %264 : vector<16xf32> to vector<16x1xf32>
      %cst_164 = arith.constant 3.200000e+01 : f32
      %266 = vector.broadcast %cst_164 : f32 to vector<16x1xf32>
      %267 = arith.divf %265, %266 : vector<16x1xf32>
      %268 = vector.broadcast %260 : vector<16x1xf32> to vector<16x32xf32>
      %269 = arith.subf %254, %268 : vector<16x32xf32>
      %cst_165 = arith.constant 9.99999974E-6 : f32
      %270 = vector.broadcast %cst_165 : f32 to vector<16x1xf32>
      %271 = arith.addf %267, %270 : vector<16x1xf32>
      %272 = math.rsqrt %271 : vector<16x1xf32>
      %273 = vector.broadcast %272 : vector<16x1xf32> to vector<16x32xf32>
      %274 = arith.mulf %269, %273 : vector<16x32xf32>
      %275 = vector.broadcast %255 : vector<1x32xf32> to vector<16x32xf32>
      %276 = arith.mulf %274, %275 : vector<16x32xf32>
      %277 = vector.broadcast %256 : vector<1x32xf32> to vector<16x32xf32>
      %278 = arith.addf %276, %277 : vector<16x32xf32>
      %c0_166 = arith.constant 0 : index
      %c0_167 = arith.constant 0 : index
      %279 = vector.load %arg10[%c0_166, %c0_167] : memref<19x32xf32, #tpu.memory_space<vmem>>, vector<16x32xf32>
      %280 = arith.addf %278, %279 : vector<16x32xf32>
      %c0_168 = arith.constant 0 : index
      %c0_169 = arith.constant 0 : index
      %281 = vector.load %arg31[%c0_168, %c0_169] : memref<19x32xf32, #tpu.memory_space<vmem>>, vector<16x32xf32>
      tpu.vector_store %arg31[%c0_168, %c0_169], %280 {strides = array<i32>} : memref<19x32xf32, #tpu.memory_space<vmem>>, vector<16x32xf32>,
      %c0_170 = arith.constant 0 : index
      %c0_171 = arith.constant 0 : index
      %282 = vector.load %arg9[%c0_170, %c0_171] : memref<3x32xf32, #tpu.memory_space<vmem>>, vector<3x32xf32>
      %c16 = arith.constant 16 : index
      %c0_172 = arith.constant 0 : index
      %283 = vector.load %arg10[%c16, %c0_172] : memref<19x32xf32, #tpu.memory_space<vmem>>, vector<3x32xf32>
      %284 = arith.addf %282, %283 : vector<3x32xf32>
      %c16_173 = arith.constant 16 : index
      %c0_174 = arith.constant 0 : index
      %285 = vector.load %arg31[%c16_173, %c0_174] : memref<19x32xf32, #tpu.memory_space<vmem>>, vector<3x32xf32>
      tpu.vector_store %arg31[%c16_173, %c0_174], %284 {strides = array<i32>} : memref<19x32xf32, #tpu.memory_space<vmem>>, vector<3x32xf32>,
    } else {
    }
    %c0 = arith.constant 0 : index
    %c0_1 = arith.constant 0 : index
    %3 = vector.load %arg31[%c0, %c0_1] : memref<19x32xf32, #tpu.memory_space<vmem>>, vector<19x32xf32>
    %c0_2 = arith.constant 0 : index
    %c0_3 = arith.constant 0 : index
    %c0_4 = arith.constant 0 : index
    %4 = vector.load %arg11[%c0_2, %c0_3, %c0_4] : memref<1x1x32xf32, #tpu.memory_space<vmem>>, vector<1x1x32xf32>
    %5 = vector.shape_cast %4 : vector<1x1x32xf32> to vector<1x32xf32>
    %c0_5 = arith.constant 0 : index
    %c0_6 = arith.constant 0 : index
    %c0_7 = arith.constant 0 : index
    %6 = vector.load %arg12[%c0_5, %c0_6, %c0_7] : memref<1x1x32xf32, #tpu.memory_space<vmem>>, vector<1x1x32xf32>
    %7 = vector.shape_cast %6 : vector<1x1x32xf32> to vector<1x32xf32>
    %cst = arith.constant dense<0.000000e+00> : vector<19xf32>
    %8 = vector.multi_reduction <add>, %3, %cst [1] : vector<19x32xf32> to vector<19xf32>
    %9 = vector.shape_cast %8 : vector<19xf32> to vector<19x1xf32>
    %cst_8 = arith.constant 3.200000e+01 : f32
    %10 = vector.broadcast %cst_8 : f32 to vector<19x1xf32>
    %11 = arith.divf %9, %10 : vector<19x1xf32>
    %12 = vector.broadcast %11 : vector<19x1xf32> to vector<19x32xf32>
    %13 = arith.subf %3, %12 : vector<19x32xf32>
    %14 = arith.mulf %13, %13 : vector<19x32xf32>
    %cst_9 = arith.constant dense<0.000000e+00> : vector<19xf32>
    %15 = vector.multi_reduction <add>, %14, %cst_9 [1] : vector<19x32xf32> to vector<19xf32>
    %16 = vector.shape_cast %15 : vector<19xf32> to vector<19x1xf32>
    %cst_10 = arith.constant 3.200000e+01 : f32
    %17 = vector.broadcast %cst_10 : f32 to vector<19x1xf32>
    %18 = arith.divf %16, %17 : vector<19x1xf32>
    %19 = vector.broadcast %11 : vector<19x1xf32> to vector<19x32xf32>
    %20 = arith.subf %3, %19 : vector<19x32xf32>
    %cst_11 = arith.constant 9.99999974E-6 : f32
    %21 = vector.broadcast %cst_11 : f32 to vector<19x1xf32>
    %22 = arith.addf %18, %21 : vector<19x1xf32>
    %23 = math.rsqrt %22 : vector<19x1xf32>
    %24 = vector.broadcast %23 : vector<19x1xf32> to vector<19x32xf32>
    %25 = arith.mulf %20, %24 : vector<19x32xf32>
    %26 = vector.broadcast %5 : vector<1x32xf32> to vector<19x32xf32>
    %27 = arith.mulf %25, %26 : vector<19x32xf32>
    %28 = vector.broadcast %7 : vector<1x32xf32> to vector<19x32xf32>
    %29 = arith.addf %27, %28 : vector<19x32xf32>
    %cst_12 = arith.constant 0.000000e+00 : f32
    %30 = vector.broadcast %cst_12 : f32 to vector<19x32xf32>
    %c0_13 = arith.constant 0 : index
    %c0_14 = arith.constant 0 : index
    %c0_15 = arith.constant 0 : index
    %c0_16 = arith.constant 0 : index
    %31 = vector.load %arg13[%c0_13, %c0_14, %c0_15, %c0_16] : memref<1x4x32x8xbf16, #tpu.memory_space<vmem>>, vector<1x1x32x8xbf16>
    %32 = vector.shape_cast %31 : vector<1x1x32x8xbf16> to vector<32x8xbf16>
    %33 = arith.truncf %29 : vector<19x32xf32> to vector<19x32xbf16>
    %cst_17 = arith.constant dense<0.000000e+00> : vector<19x8xf32>
    %34 = tpu.matmul %33, %32, %cst_17 {dimension_numbers = #tpu.dot_dimension_numbers<[1], [0], [0], [1], [0, 0, 1, 1], [], []>} : vector<19x32xbf16>, vector<32x8xbf16>, vector<19x8xf32> -> vector<19x8xf32>
    %c0_18 = arith.constant 0 : index
    %c0_19 = arith.constant 0 : index
    %c0_20 = arith.constant 0 : index
    %c0_21 = arith.constant 0 : index
    %35 = vector.load %arg14[%c0_18, %c0_19, %c0_20, %c0_21] : memref<1x4x32x8xbf16, #tpu.memory_space<vmem>>, vector<1x1x32x8xbf16>
    %36 = vector.shape_cast %35 : vector<1x1x32x8xbf16> to vector<32x8xbf16>
    %37 = arith.truncf %29 : vector<19x32xf32> to vector<19x32xbf16>
    %cst_22 = arith.constant dense<0.000000e+00> : vector<19x8xf32>
    %38 = tpu.matmul %37, %36, %cst_22 {dimension_numbers = #tpu.dot_dimension_numbers<[1], [0], [0], [1], [0, 0, 1, 1], [], []>} : vector<19x32xbf16>, vector<32x8xbf16>, vector<19x8xf32> -> vector<19x8xf32>
    %c0_23 = arith.constant 0 : index
    %c0_24 = arith.constant 0 : index
    %c0_25 = arith.constant 0 : index
    %c0_26 = arith.constant 0 : index
    %39 = vector.load %arg15[%c0_23, %c0_24, %c0_25, %c0_26] : memref<1x4x32x8xbf16, #tpu.memory_space<vmem>>, vector<1x1x32x8xbf16>
    %40 = vector.shape_cast %39 : vector<1x1x32x8xbf16> to vector<32x8xbf16>
    %41 = arith.truncf %29 : vector<19x32xf32> to vector<19x32xbf16>
    %cst_27 = arith.constant dense<0.000000e+00> : vector<19x8xf32>
    %42 = tpu.matmul %41, %40, %cst_27 {dimension_numbers = #tpu.dot_dimension_numbers<[1], [0], [0], [1], [0, 0, 1, 1], [], []>} : vector<19x32xbf16>, vector<32x8xbf16>, vector<19x8xf32> -> vector<19x8xf32>
    %43 = arith.truncf %34 : vector<19x8xf32> to vector<19x8xbf16>
    %44 = arith.truncf %38 : vector<19x8xf32> to vector<19x8xbf16>
    %cst_28 = arith.constant dense<0.000000e+00> : vector<19x19xf32>
    %45 = tpu.matmul %43, %44, %cst_28 {dimension_numbers = #tpu.dot_dimension_numbers<[1], [1], [0], [0], [0, 0, 1, 0], [], []>} : vector<19x8xbf16>, vector<19x8xbf16>, vector<19x19xf32> -> vector<19x19xf32>
    %cst_29 = arith.constant dense<0xFF800000> : vector<19xf32>
    %46 = vector.multi_reduction <maximumf>, %45, %cst_29 [1] : vector<19x19xf32> to vector<19xf32>
    %47 = vector.shape_cast %46 : vector<19xf32> to vector<19x1xf32>
    %48 = vector.broadcast %47 : vector<19x1xf32> to vector<19x19xf32>
    %49 = arith.subf %45, %48 : vector<19x19xf32>
    %50 = math.exp %49 : vector<19x19xf32>
    %cst_30 = arith.constant dense<0.000000e+00> : vector<19xf32>
    %51 = vector.multi_reduction <add>, %50, %cst_30 [1] : vector<19x19xf32> to vector<19xf32>
    %52 = vector.shape_cast %51 : vector<19xf32> to vector<19x1xf32>
    %53 = tpu.reciprocal %52 {approx = true} : vector<19x1xf32> -> vector<19x1xf32>
    %54 = vector.broadcast %53 : vector<19x1xf32> to vector<19x19xf32>
    %55 = arith.mulf %50, %54 : vector<19x19xf32>
    %56 = arith.truncf %55 : vector<19x19xf32> to vector<19x19xbf16>
    %57 = arith.truncf %42 : vector<19x8xf32> to vector<19x8xbf16>
    %cst_31 = arith.constant dense<0.000000e+00> : vector<19x8xf32>
    %58 = tpu.matmul %56, %57, %cst_31 {dimension_numbers = #tpu.dot_dimension_numbers<[1], [0], [0], [1], [0, 0, 1, 1], [], []>} : vector<19x19xbf16>, vector<19x8xbf16>, vector<19x8xf32> -> vector<19x8xf32>
    %c0_32 = arith.constant 0 : index
    %c0_33 = arith.constant 0 : index
    %c0_34 = arith.constant 0 : index
    %c0_35 = arith.constant 0 : index
    %59 = vector.load %arg16[%c0_32, %c0_33, %c0_34, %c0_35] : memref<1x4x8x32xbf16, #tpu.memory_space<vmem>>, vector<1x1x8x32xbf16>
    %60 = vector.shape_cast %59 : vector<1x1x8x32xbf16> to vector<8x32xbf16>
    %61 = arith.truncf %58 : vector<19x8xf32> to vector<19x8xbf16>
    %cst_36 = arith.constant dense<0.000000e+00> : vector<19x32xf32>
    %62 = tpu.matmul %61, %60, %cst_36 {dimension_numbers = #tpu.dot_dimension_numbers<[1], [0], [0], [1], [0, 0, 1, 1], [], []>} : vector<19x8xbf16>, vector<8x32xbf16>, vector<19x32xf32> -> vector<19x32xf32>
    %63 = arith.addf %30, %62 : vector<19x32xf32>
    %c0_37 = arith.constant 0 : index
    %c1 = arith.constant 1 : index
    %c0_38 = arith.constant 0 : index
    %c0_39 = arith.constant 0 : index
    %64 = vector.load %arg13[%c0_37, %c1, %c0_38, %c0_39] : memref<1x4x32x8xbf16, #tpu.memory_space<vmem>>, vector<1x1x32x8xbf16>
    %65 = vector.shape_cast %64 : vector<1x1x32x8xbf16> to vector<32x8xbf16>
    %66 = arith.truncf %29 : vector<19x32xf32> to vector<19x32xbf16>
    %cst_40 = arith.constant dense<0.000000e+00> : vector<19x8xf32>
    %67 = tpu.matmul %66, %65, %cst_40 {dimension_numbers = #tpu.dot_dimension_numbers<[1], [0], [0], [1], [0, 0, 1, 1], [], []>} : vector<19x32xbf16>, vector<32x8xbf16>, vector<19x8xf32> -> vector<19x8xf32>
    %c0_41 = arith.constant 0 : index
    %c1_42 = arith.constant 1 : index
    %c0_43 = arith.constant 0 : index
    %c0_44 = arith.constant 0 : index
    %68 = vector.load %arg14[%c0_41, %c1_42, %c0_43, %c0_44] : memref<1x4x32x8xbf16, #tpu.memory_space<vmem>>, vector<1x1x32x8xbf16>
    %69 = vector.shape_cast %68 : vector<1x1x32x8xbf16> to vector<32x8xbf16>
    %70 = arith.truncf %29 : vector<19x32xf32> to vector<19x32xbf16>
    %cst_45 = arith.constant dense<0.000000e+00> : vector<19x8xf32>
    %71 = tpu.matmul %70, %69, %cst_45 {dimension_numbers = #tpu.dot_dimension_numbers<[1], [0], [0], [1], [0, 0, 1, 1], [], []>} : vector<19x32xbf16>, vector<32x8xbf16>, vector<19x8xf32> -> vector<19x8xf32>
    %c0_46 = arith.constant 0 : index
    %c1_47 = arith.constant 1 : index
    %c0_48 = arith.constant 0 : index
    %c0_49 = arith.constant 0 : index
    %72 = vector.load %arg15[%c0_46, %c1_47, %c0_48, %c0_49] : memref<1x4x32x8xbf16, #tpu.memory_space<vmem>>, vector<1x1x32x8xbf16>
    %73 = vector.shape_cast %72 : vector<1x1x32x8xbf16> to vector<32x8xbf16>
    %74 = arith.truncf %29 : vector<19x32xf32> to vector<19x32xbf16>
    %cst_50 = arith.constant dense<0.000000e+00> : vector<19x8xf32>
    %75 = tpu.matmul %74, %73, %cst_50 {dimension_numbers = #tpu.dot_dimension_numbers<[1], [0], [0], [1], [0, 0, 1, 1], [], []>} : vector<19x32xbf16>, vector<32x8xbf16>, vector<19x8xf32> -> vector<19x8xf32>
    %76 = arith.truncf %67 : vector<19x8xf32> to vector<19x8xbf16>
    %77 = arith.truncf %71 : vector<19x8xf32> to vector<19x8xbf16>
    %cst_51 = arith.constant dense<0.000000e+00> : vector<19x19xf32>
    %78 = tpu.matmul %76, %77, %cst_51 {dimension_numbers = #tpu.dot_dimension_numbers<[1], [1], [0], [0], [0, 0, 1, 0], [], []>} : vector<19x8xbf16>, vector<19x8xbf16>, vector<19x19xf32> -> vector<19x19xf32>
    %cst_52 = arith.constant dense<0xFF800000> : vector<19xf32>
    %79 = vector.multi_reduction <maximumf>, %78, %cst_52 [1] : vector<19x19xf32> to vector<19xf32>
    %80 = vector.shape_cast %79 : vector<19xf32> to vector<19x1xf32>
    %81 = vector.broadcast %80 : vector<19x1xf32> to vector<19x19xf32>
    %82 = arith.subf %78, %81 : vector<19x19xf32>
    %83 = math.exp %82 : vector<19x19xf32>
    %cst_53 = arith.constant dense<0.000000e+00> : vector<19xf32>
    %84 = vector.multi_reduction <add>, %83, %cst_53 [1] : vector<19x19xf32> to vector<19xf32>
    %85 = vector.shape_cast %84 : vector<19xf32> to vector<19x1xf32>
    %86 = tpu.reciprocal %85 {approx = true} : vector<19x1xf32> -> vector<19x1xf32>
    %87 = vector.broadcast %86 : vector<19x1xf32> to vector<19x19xf32>
    %88 = arith.mulf %83, %87 : vector<19x19xf32>
    %89 = arith.truncf %88 : vector<19x19xf32> to vector<19x19xbf16>
    %90 = arith.truncf %75 : vector<19x8xf32> to vector<19x8xbf16>
    %cst_54 = arith.constant dense<0.000000e+00> : vector<19x8xf32>
    %91 = tpu.matmul %89, %90, %cst_54 {dimension_numbers = #tpu.dot_dimension_numbers<[1], [0], [0], [1], [0, 0, 1, 1], [], []>} : vector<19x19xbf16>, vector<19x8xbf16>, vector<19x8xf32> -> vector<19x8xf32>
    %c0_55 = arith.constant 0 : index
    %c1_56 = arith.constant 1 : index
    %c0_57 = arith.constant 0 : index
    %c0_58 = arith.constant 0 : index
    %92 = vector.load %arg16[%c0_55, %c1_56, %c0_57, %c0_58] : memref<1x4x8x32xbf16, #tpu.memory_space<vmem>>, vector<1x1x8x32xbf16>
    %93 = vector.shape_cast %92 : vector<1x1x8x32xbf16> to vector<8x32xbf16>
    %94 = arith.truncf %91 : vector<19x8xf32> to vector<19x8xbf16>
    %cst_59 = arith.constant dense<0.000000e+00> : vector<19x32xf32>
    %95 = tpu.matmul %94, %93, %cst_59 {dimension_numbers = #tpu.dot_dimension_numbers<[1], [0], [0], [1], [0, 0, 1, 1], [], []>} : vector<19x8xbf16>, vector<8x32xbf16>, vector<19x32xf32> -> vector<19x32xf32>
    %96 = arith.addf %63, %95 : vector<19x32xf32>
    %c0_60 = arith.constant 0 : index
    %c2 = arith.constant 2 : index
    %c0_61 = arith.constant 0 : index
    %c0_62 = arith.constant 0 : index
    %97 = vector.load %arg13[%c0_60, %c2, %c0_61, %c0_62] : memref<1x4x32x8xbf16, #tpu.memory_space<vmem>>, vector<1x1x32x8xbf16>
    %98 = vector.shape_cast %97 : vector<1x1x32x8xbf16> to vector<32x8xbf16>
    %99 = arith.truncf %29 : vector<19x32xf32> to vector<19x32xbf16>
    %cst_63 = arith.constant dense<0.000000e+00> : vector<19x8xf32>
    %100 = tpu.matmul %99, %98, %cst_63 {dimension_numbers = #tpu.dot_dimension_numbers<[1], [0], [0], [1], [0, 0, 1, 1], [], []>} : vector<19x32xbf16>, vector<32x8xbf16>, vector<19x8xf32> -> vector<19x8xf32>
    %c0_64 = arith.constant 0 : index
    %c2_65 = arith.constant 2 : index
    %c0_66 = arith.constant 0 : index
    %c0_67 = arith.constant 0 : index
    %101 = vector.load %arg14[%c0_64, %c2_65, %c0_66, %c0_67] : memref<1x4x32x8xbf16, #tpu.memory_space<vmem>>, vector<1x1x32x8xbf16>
    %102 = vector.shape_cast %101 : vector<1x1x32x8xbf16> to vector<32x8xbf16>
    %103 = arith.truncf %29 : vector<19x32xf32> to vector<19x32xbf16>
    %cst_68 = arith.constant dense<0.000000e+00> : vector<19x8xf32>
    %104 = tpu.matmul %103, %102, %cst_68 {dimension_numbers = #tpu.dot_dimension_numbers<[1], [0], [0], [1], [0, 0, 1, 1], [], []>} : vector<19x32xbf16>, vector<32x8xbf16>, vector<19x8xf32> -> vector<19x8xf32>
    %c0_69 = arith.constant 0 : index
    %c2_70 = arith.constant 2 : index
    %c0_71 = arith.constant 0 : index
    %c0_72 = arith.constant 0 : index
    %105 = vector.load %arg15[%c0_69, %c2_70, %c0_71, %c0_72] : memref<1x4x32x8xbf16, #tpu.memory_space<vmem>>, vector<1x1x32x8xbf16>
    %106 = vector.shape_cast %105 : vector<1x1x32x8xbf16> to vector<32x8xbf16>
    %107 = arith.truncf %29 : vector<19x32xf32> to vector<19x32xbf16>
    %cst_73 = arith.constant dense<0.000000e+00> : vector<19x8xf32>
    %108 = tpu.matmul %107, %106, %cst_73 {dimension_numbers = #tpu.dot_dimension_numbers<[1], [0], [0], [1], [0, 0, 1, 1], [], []>} : vector<19x32xbf16>, vector<32x8xbf16>, vector<19x8xf32> -> vector<19x8xf32>
    %109 = arith.truncf %100 : vector<19x8xf32> to vector<19x8xbf16>
    %110 = arith.truncf %104 : vector<19x8xf32> to vector<19x8xbf16>
    %cst_74 = arith.constant dense<0.000000e+00> : vector<19x19xf32>
    %111 = tpu.matmul %109, %110, %cst_74 {dimension_numbers = #tpu.dot_dimension_numbers<[1], [1], [0], [0], [0, 0, 1, 0], [], []>} : vector<19x8xbf16>, vector<19x8xbf16>, vector<19x19xf32> -> vector<19x19xf32>
    %cst_75 = arith.constant dense<0xFF800000> : vector<19xf32>
    %112 = vector.multi_reduction <maximumf>, %111, %cst_75 [1] : vector<19x19xf32> to vector<19xf32>
    %113 = vector.shape_cast %112 : vector<19xf32> to vector<19x1xf32>
    %114 = vector.broadcast %113 : vector<19x1xf32> to vector<19x19xf32>
    %115 = arith.subf %111, %114 : vector<19x19xf32>
    %116 = math.exp %115 : vector<19x19xf32>
    %cst_76 = arith.constant dense<0.000000e+00> : vector<19xf32>
    %117 = vector.multi_reduction <add>, %116, %cst_76 [1] : vector<19x19xf32> to vector<19xf32>
    %118 = vector.shape_cast %117 : vector<19xf32> to vector<19x1xf32>
    %119 = tpu.reciprocal %118 {approx = true} : vector<19x1xf32> -> vector<19x1xf32>
    %120 = vector.broadcast %119 : vector<19x1xf32> to vector<19x19xf32>
    %121 = arith.mulf %116, %120 : vector<19x19xf32>
    %122 = arith.truncf %121 : vector<19x19xf32> to vector<19x19xbf16>
    %123 = arith.truncf %108 : vector<19x8xf32> to vector<19x8xbf16>
    %cst_77 = arith.constant dense<0.000000e+00> : vector<19x8xf32>
    %124 = tpu.matmul %122, %123, %cst_77 {dimension_numbers = #tpu.dot_dimension_numbers<[1], [0], [0], [1], [0, 0, 1, 1], [], []>} : vector<19x19xbf16>, vector<19x8xbf16>, vector<19x8xf32> -> vector<19x8xf32>
    %c0_78 = arith.constant 0 : index
    %c2_79 = arith.constant 2 : index
    %c0_80 = arith.constant 0 : index
    %c0_81 = arith.constant 0 : index
    %125 = vector.load %arg16[%c0_78, %c2_79, %c0_80, %c0_81] : memref<1x4x8x32xbf16, #tpu.memory_space<vmem>>, vector<1x1x8x32xbf16>
    %126 = vector.shape_cast %125 : vector<1x1x8x32xbf16> to vector<8x32xbf16>
    %127 = arith.truncf %124 : vector<19x8xf32> to vector<19x8xbf16>
    %cst_82 = arith.constant dense<0.000000e+00> : vector<19x32xf32>
    %128 = tpu.matmul %127, %126, %cst_82 {dimension_numbers = #tpu.dot_dimension_numbers<[1], [0], [0], [1], [0, 0, 1, 1], [], []>} : vector<19x8xbf16>, vector<8x32xbf16>, vector<19x32xf32> -> vector<19x32xf32>
    %129 = arith.addf %96, %128 : vector<19x32xf32>
    %c0_83 = arith.constant 0 : index
    %c3 = arith.constant 3 : index
    %c0_84 = arith.constant 0 : index
    %c0_85 = arith.constant 0 : index
    %130 = vector.load %arg13[%c0_83, %c3, %c0_84, %c0_85] : memref<1x4x32x8xbf16, #tpu.memory_space<vmem>>, vector<1x1x32x8xbf16>
    %131 = vector.shape_cast %130 : vector<1x1x32x8xbf16> to vector<32x8xbf16>
    %132 = arith.truncf %29 : vector<19x32xf32> to vector<19x32xbf16>
    %cst_86 = arith.constant dense<0.000000e+00> : vector<19x8xf32>
    %133 = tpu.matmul %132, %131, %cst_86 {dimension_numbers = #tpu.dot_dimension_numbers<[1], [0], [0], [1], [0, 0, 1, 1], [], []>} : vector<19x32xbf16>, vector<32x8xbf16>, vector<19x8xf32> -> vector<19x8xf32>
    %c0_87 = arith.constant 0 : index
    %c3_88 = arith.constant 3 : index
    %c0_89 = arith.constant 0 : index
    %c0_90 = arith.constant 0 : index
    %134 = vector.load %arg14[%c0_87, %c3_88, %c0_89, %c0_90] : memref<1x4x32x8xbf16, #tpu.memory_space<vmem>>, vector<1x1x32x8xbf16>
    %135 = vector.shape_cast %134 : vector<1x1x32x8xbf16> to vector<32x8xbf16>
    %136 = arith.truncf %29 : vector<19x32xf32> to vector<19x32xbf16>
    %cst_91 = arith.constant dense<0.000000e+00> : vector<19x8xf32>
    %137 = tpu.matmul %136, %135, %cst_91 {dimension_numbers = #tpu.dot_dimension_numbers<[1], [0], [0], [1], [0, 0, 1, 1], [], []>} : vector<19x32xbf16>, vector<32x8xbf16>, vector<19x8xf32> -> vector<19x8xf32>
    %c0_92 = arith.constant 0 : index
    %c3_93 = arith.constant 3 : index
    %c0_94 = arith.constant 0 : index
    %c0_95 = arith.constant 0 : index
    %138 = vector.load %arg15[%c0_92, %c3_93, %c0_94, %c0_95] : memref<1x4x32x8xbf16, #tpu.memory_space<vmem>>, vector<1x1x32x8xbf16>
    %139 = vector.shape_cast %138 : vector<1x1x32x8xbf16> to vector<32x8xbf16>
    %140 = arith.truncf %29 : vector<19x32xf32> to vector<19x32xbf16>
    %cst_96 = arith.constant dense<0.000000e+00> : vector<19x8xf32>
    %141 = tpu.matmul %140, %139, %cst_96 {dimension_numbers = #tpu.dot_dimension_numbers<[1], [0], [0], [1], [0, 0, 1, 1], [], []>} : vector<19x32xbf16>, vector<32x8xbf16>, vector<19x8xf32> -> vector<19x8xf32>
    %142 = arith.truncf %133 : vector<19x8xf32> to vector<19x8xbf16>
    %143 = arith.truncf %137 : vector<19x8xf32> to vector<19x8xbf16>
    %cst_97 = arith.constant dense<0.000000e+00> : vector<19x19xf32>
    %144 = tpu.matmul %142, %143, %cst_97 {dimension_numbers = #tpu.dot_dimension_numbers<[1], [1], [0], [0], [0, 0, 1, 0], [], []>} : vector<19x8xbf16>, vector<19x8xbf16>, vector<19x19xf32> -> vector<19x19xf32>
    %cst_98 = arith.constant dense<0xFF800000> : vector<19xf32>
    %145 = vector.multi_reduction <maximumf>, %144, %cst_98 [1] : vector<19x19xf32> to vector<19xf32>
    %146 = vector.shape_cast %145 : vector<19xf32> to vector<19x1xf32>
    %147 = vector.broadcast %146 : vector<19x1xf32> to vector<19x19xf32>
    %148 = arith.subf %144, %147 : vector<19x19xf32>
    %149 = math.exp %148 : vector<19x19xf32>
    %cst_99 = arith.constant dense<0.000000e+00> : vector<19xf32>
    %150 = vector.multi_reduction <add>, %149, %cst_99 [1] : vector<19x19xf32> to vector<19xf32>
    %151 = vector.shape_cast %150 : vector<19xf32> to vector<19x1xf32>
    %152 = tpu.reciprocal %151 {approx = true} : vector<19x1xf32> -> vector<19x1xf32>
    %153 = vector.broadcast %152 : vector<19x1xf32> to vector<19x19xf32>
    %154 = arith.mulf %149, %153 : vector<19x19xf32>
    %155 = arith.truncf %154 : vector<19x19xf32> to vector<19x19xbf16>
    %156 = arith.truncf %141 : vector<19x8xf32> to vector<19x8xbf16>
    %cst_100 = arith.constant dense<0.000000e+00> : vector<19x8xf32>
    %157 = tpu.matmul %155, %156, %cst_100 {dimension_numbers = #tpu.dot_dimension_numbers<[1], [0], [0], [1], [0, 0, 1, 1], [], []>} : vector<19x19xbf16>, vector<19x8xbf16>, vector<19x8xf32> -> vector<19x8xf32>
    %c0_101 = arith.constant 0 : index
    %c3_102 = arith.constant 3 : index
    %c0_103 = arith.constant 0 : index
    %c0_104 = arith.constant 0 : index
    %158 = vector.load %arg16[%c0_101, %c3_102, %c0_103, %c0_104] : memref<1x4x8x32xbf16, #tpu.memory_space<vmem>>, vector<1x1x8x32xbf16>
    %159 = vector.shape_cast %158 : vector<1x1x8x32xbf16> to vector<8x32xbf16>
    %160 = arith.truncf %157 : vector<19x8xf32> to vector<19x8xbf16>
    %cst_105 = arith.constant dense<0.000000e+00> : vector<19x32xf32>
    %161 = tpu.matmul %160, %159, %cst_105 {dimension_numbers = #tpu.dot_dimension_numbers<[1], [0], [0], [1], [0, 0, 1, 1], [], []>} : vector<19x8xbf16>, vector<8x32xbf16>, vector<19x32xf32> -> vector<19x32xf32>
    %162 = arith.addf %129, %161 : vector<19x32xf32>
    %163 = arith.addf %3, %162 : vector<19x32xf32>
    %c0_106 = arith.constant 0 : index
    %c0_107 = arith.constant 0 : index
    %c0_108 = arith.constant 0 : index
    %164 = vector.load %arg17[%c0_106, %c0_107, %c0_108] : memref<1x1x32xf32, #tpu.memory_space<vmem>>, vector<1x1x32xf32>
    %165 = vector.shape_cast %164 : vector<1x1x32xf32> to vector<1x32xf32>
    %166 = vector.broadcast %165 : vector<1x32xf32> to vector<19x32xf32>
    %167 = arith.addf %163, %166 : vector<19x32xf32>
    %c0_109 = arith.constant 0 : index
    %c0_110 = arith.constant 0 : index
    %c0_111 = arith.constant 0 : index
    %168 = vector.load %arg18[%c0_109, %c0_110, %c0_111] : memref<1x1x32xf32, #tpu.memory_space<vmem>>, vector<1x1x32xf32>
    %169 = vector.shape_cast %168 : vector<1x1x32xf32> to vector<1x32xf32>
    %c0_112 = arith.constant 0 : index
    %c0_113 = arith.constant 0 : index
    %c0_114 = arith.constant 0 : index
    %170 = vector.load %arg19[%c0_112, %c0_113, %c0_114] : memref<1x1x32xf32, #tpu.memory_space<vmem>>, vector<1x1x32xf32>
    %171 = vector.shape_cast %170 : vector<1x1x32xf32> to vector<1x32xf32>
    %cst_115 = arith.constant dense<0.000000e+00> : vector<19xf32>
    %172 = vector.multi_reduction <add>, %167, %cst_115 [1] : vector<19x32xf32> to vector<19xf32>
    %173 = vector.shape_cast %172 : vector<19xf32> to vector<19x1xf32>
    %cst_116 = arith.constant 3.200000e+01 : f32
    %174 = vector.broadcast %cst_116 : f32 to vector<19x1xf32>
    %175 = arith.divf %173, %174 : vector<19x1xf32>
    %176 = vector.broadcast %175 : vector<19x1xf32> to vector<19x32xf32>
    %177 = arith.subf %167, %176 : vector<19x32xf32>
    %178 = arith.mulf %177, %177 : vector<19x32xf32>
    %cst_117 = arith.constant dense<0.000000e+00> : vector<19xf32>
    %179 = vector.multi_reduction <add>, %178, %cst_117 [1] : vector<19x32xf32> to vector<19xf32>
    %180 = vector.shape_cast %179 : vector<19xf32> to vector<19x1xf32>
    %cst_118 = arith.constant 3.200000e+01 : f32
    %181 = vector.broadcast %cst_118 : f32 to vector<19x1xf32>
    %182 = arith.divf %180, %181 : vector<19x1xf32>
    %183 = vector.broadcast %175 : vector<19x1xf32> to vector<19x32xf32>
    %184 = arith.subf %167, %183 : vector<19x32xf32>
    %cst_119 = arith.constant 9.99999974E-6 : f32
    %185 = vector.broadcast %cst_119 : f32 to vector<19x1xf32>
    %186 = arith.addf %182, %185 : vector<19x1xf32>
    %187 = math.rsqrt %186 : vector<19x1xf32>
    %188 = vector.broadcast %187 : vector<19x1xf32> to vector<19x32xf32>
    %189 = arith.mulf %184, %188 : vector<19x32xf32>
    %190 = vector.broadcast %169 : vector<1x32xf32> to vector<19x32xf32>
    %191 = arith.mulf %189, %190 : vector<19x32xf32>
    %192 = vector.broadcast %171 : vector<1x32xf32> to vector<19x32xf32>
    %193 = arith.addf %191, %192 : vector<19x32xf32>
    %c0_120 = arith.constant 0 : index
    %c0_121 = arith.constant 0 : index
    %c0_122 = arith.constant 0 : index
    %194 = vector.load %arg20[%c0_120, %c0_121, %c0_122] : memref<1x32x64xbf16, #tpu.memory_space<vmem>>, vector<1x32x64xbf16>
    %195 = vector.shape_cast %194 : vector<1x32x64xbf16> to vector<32x64xbf16>
    %196 = arith.truncf %193 : vector<19x32xf32> to vector<19x32xbf16>
    %cst_123 = arith.constant dense<0.000000e+00> : vector<19x64xf32>
    %197 = tpu.matmul %196, %195, %cst_123 {dimension_numbers = #tpu.dot_dimension_numbers<[1], [0], [0], [1], [0, 0, 1, 1], [], []>} : vector<19x32xbf16>, vector<32x64xbf16>, vector<19x64xf32> -> vector<19x64xf32>
    %c0_124 = arith.constant 0 : index
    %c0_125 = arith.constant 0 : index
    %c0_126 = arith.constant 0 : index
    %198 = vector.load %arg21[%c0_124, %c0_125, %c0_126] : memref<1x1x64xf32, #tpu.memory_space<vmem>>, vector<1x1x64xf32>
    %199 = vector.shape_cast %198 : vector<1x1x64xf32> to vector<1x64xf32>
    %200 = vector.broadcast %199 : vector<1x64xf32> to vector<19x64xf32>
    %201 = arith.addf %197, %200 : vector<19x64xf32>
    %cst_127 = arith.constant 5.000000e-01 : f32
    %202 = vector.broadcast %cst_127 : f32 to vector<19x64xf32>
    %203 = arith.mulf %202, %201 : vector<19x64xf32>
    %cst_128 = arith.constant 0.707106769 : f32
    %204 = vector.broadcast %cst_128 : f32 to vector<19x64xf32>
    %205 = arith.mulf %201, %204 : vector<19x64xf32>
    %206 = math.erf %205 : vector<19x64xf32>
    %cst_129 = arith.constant 1.000000e+00 : f32
    %207 = vector.broadcast %cst_129 : f32 to vector<19x64xf32>
    %208 = arith.addf %207, %206 : vector<19x64xf32>
    %209 = arith.mulf %203, %208 : vector<19x64xf32>
    %c0_130 = arith.constant 0 : index
    %c0_131 = arith.constant 0 : index
    %c0_132 = arith.constant 0 : index
    %210 = vector.load %arg22[%c0_130, %c0_131, %c0_132] : memref<1x64x32xbf16, #tpu.memory_space<vmem>>, vector<1x64x32xbf16>
    %211 = vector.shape_cast %210 : vector<1x64x32xbf16> to vector<64x32xbf16>
    %212 = arith.truncf %209 : vector<19x64xf32> to vector<19x64xbf16>
    %cst_133 = arith.constant dense<0.000000e+00> : vector<19x32xf32>
    %213 = tpu.matmul %212, %211, %cst_133 {dimension_numbers = #tpu.dot_dimension_numbers<[1], [0], [0], [1], [0, 0, 1, 1], [], []>} : vector<19x64xbf16>, vector<64x32xbf16>, vector<19x32xf32> -> vector<19x32xf32>
    %214 = arith.addf %167, %213 : vector<19x32xf32>
    %c0_134 = arith.constant 0 : index
    %c0_135 = arith.constant 0 : index
    %c0_136 = arith.constant 0 : index
    %215 = vector.load %arg23[%c0_134, %c0_135, %c0_136] : memref<1x1x32xf32, #tpu.memory_space<vmem>>, vector<1x1x32xf32>
    %216 = vector.shape_cast %215 : vector<1x1x32xf32> to vector<1x32xf32>
    %217 = vector.broadcast %216 : vector<1x32xf32> to vector<19x32xf32>
    %218 = arith.addf %214, %217 : vector<19x32xf32>
    %c0_137 = arith.constant 0 : index
    %c0_138 = arith.constant 0 : index
    %219 = vector.load %arg31[%c0_137, %c0_138] : memref<19x32xf32, #tpu.memory_space<vmem>>, vector<19x32xf32>
    tpu.vector_store %arg31[%c0_137, %c0_138], %218 {strides = array<i32>} : memref<19x32xf32, #tpu.memory_space<vmem>>, vector<19x32xf32>,
    %c1_i32 = arith.constant 1 : i32
    %220 = arith.cmpi eq, %arg1, %c1_i32 : i32
    %221 = arith.extui %220 : i1 to i32
    %c0_i32_139 = arith.constant 0 : i32
    %222 = arith.cmpi ne, %221, %c0_i32_139 : i32
    scf.if %222 {
      %c16 = arith.constant 16 : index
      %c0_140 = arith.constant 0 : index
      %223 = vector.load %arg31[%c16, %c0_140] : memref<19x32xf32, #tpu.memory_space<vmem>>, vector<3x32xf32>
      %cst_141 = arith.constant dense<0.000000e+00> : vector<3xf32>
      %224 = vector.multi_reduction <add>, %223, %cst_141 [1] : vector<3x32xf32> to vector<3xf32>
      %225 = vector.shape_cast %224 : vector<3xf32> to vector<3x1xf32>
      %cst_142 = arith.constant dense<0.000000e+00> : vector<1xf32>
      %226 = vector.multi_reduction <add>, %225, %cst_142 [0] : vector<3x1xf32> to vector<1xf32>
      %227 = vector.shape_cast %226 : vector<1xf32> to vector<1x1xf32>
      %cst_143 = arith.constant 9.600000e+01 : f32
      %228 = vector.broadcast %cst_143 : f32 to vector<1x1xf32>
      %229 = arith.divf %227, %228 : vector<1x1xf32>
      %230 = vector.broadcast %229 : vector<1x1xf32> to vector<3x32xf32>
      %231 = arith.subf %223, %230 : vector<3x32xf32>
      %232 = arith.mulf %231, %231 : vector<3x32xf32>
      %cst_144 = arith.constant dense<0.000000e+00> : vector<3xf32>
      %233 = vector.multi_reduction <add>, %232, %cst_144 [1] : vector<3x32xf32> to vector<3xf32>
      %234 = vector.shape_cast %233 : vector<3xf32> to vector<3x1xf32>
      %cst_145 = arith.constant dense<0.000000e+00> : vector<1xf32>
      %235 = vector.multi_reduction <add>, %234, %cst_145 [0] : vector<3x1xf32> to vector<1xf32>
      %236 = vector.shape_cast %235 : vector<1xf32> to vector<1x1xf32>
      %cst_146 = arith.constant 9.600000e+01 : f32
      %237 = vector.broadcast %cst_146 : f32 to vector<1x1xf32>
      %238 = arith.divf %236, %237 : vector<1x1xf32>
      %cst_147 = arith.constant 9.99999974E-6 : f32
      %239 = vector.broadcast %cst_147 : f32 to vector<1x1xf32>
      %240 = arith.addf %238, %239 : vector<1x1xf32>
      %241 = math.rsqrt %240 : vector<1x1xf32>
      %242 = vector.broadcast %241 : vector<1x1xf32> to vector<3x32xf32>
      %243 = arith.mulf %231, %242 : vector<3x32xf32>
      %c0_148 = arith.constant 0 : index
      %c0_149 = arith.constant 0 : index
      %244 = vector.load %arg24[%c0_148, %c0_149] : memref<3x32xf32, #tpu.memory_space<vmem>>, vector<3x32xf32>
      %245 = arith.mulf %243, %244 : vector<3x32xf32>
      %c0_150 = arith.constant 0 : index
      %c0_151 = arith.constant 0 : index
      %246 = vector.load %arg25[%c0_150, %c0_151] : memref<3x32xf32, #tpu.memory_space<vmem>>, vector<3x32xf32>
      %247 = arith.addf %245, %246 : vector<3x32xf32>
      %248 = vector.extract_strided_slice %247 {offsets = [0, 0], sizes = [1, 32], strides = [1, 1]} : vector<3x32xf32> to vector<1x32xf32>
      %c0_152 = arith.constant 0 : index
      %c0_153 = arith.constant 0 : index
      %c0_154 = arith.constant 0 : index
      %249 = vector.load %arg26[%c0_152, %c0_153, %c0_154] : memref<3x32x128xbf16, #tpu.memory_space<vmem>>, vector<1x32x128xbf16>
      %250 = vector.shape_cast %249 : vector<1x32x128xbf16> to vector<32x128xbf16>
      %251 = arith.truncf %248 : vector<1x32xf32> to vector<1x32xbf16>
      %cst_155 = arith.constant dense<0.000000e+00> : vector<1x128xf32>
      %252 = tpu.matmul %251, %250, %cst_155 {dimension_numbers = #tpu.dot_dimension_numbers<[1], [0], [0], [1], [0, 0, 1, 1], [], []>} : vector<1x32xbf16>, vector<32x128xbf16>, vector<1x128xf32> -> vector<1x128xf32>
      %253 = vector.extract_strided_slice %247 {offsets = [1, 0], sizes = [1, 32], strides = [1, 1]} : vector<3x32xf32> to vector<1x32xf32>
      %c1_156 = arith.constant 1 : index
      %c0_157 = arith.constant 0 : index
      %c0_158 = arith.constant 0 : index
      %254 = vector.load %arg26[%c1_156, %c0_157, %c0_158] : memref<3x32x128xbf16, #tpu.memory_space<vmem>>, vector<1x32x128xbf16>
      %255 = vector.shape_cast %254 : vector<1x32x128xbf16> to vector<32x128xbf16>
      %256 = arith.truncf %253 : vector<1x32xf32> to vector<1x32xbf16>
      %cst_159 = arith.constant dense<0.000000e+00> : vector<1x128xf32>
      %257 = tpu.matmul %256, %255, %cst_159 {dimension_numbers = #tpu.dot_dimension_numbers<[1], [0], [0], [1], [0, 0, 1, 1], [], []>} : vector<1x32xbf16>, vector<32x128xbf16>, vector<1x128xf32> -> vector<1x128xf32>
      %258 = arith.addf %252, %257 : vector<1x128xf32>
      %259 = vector.extract_strided_slice %247 {offsets = [2, 0], sizes = [1, 32], strides = [1, 1]} : vector<3x32xf32> to vector<1x32xf32>
      %c2_160 = arith.constant 2 : index
      %c0_161 = arith.constant 0 : index
      %c0_162 = arith.constant 0 : index
      %260 = vector.load %arg26[%c2_160, %c0_161, %c0_162] : memref<3x32x128xbf16, #tpu.memory_space<vmem>>, vector<1x32x128xbf16>
      %261 = vector.shape_cast %260 : vector<1x32x128xbf16> to vector<32x128xbf16>
      %262 = arith.truncf %259 : vector<1x32xf32> to vector<1x32xbf16>
      %cst_163 = arith.constant dense<0.000000e+00> : vector<1x128xf32>
      %263 = tpu.matmul %262, %261, %cst_163 {dimension_numbers = #tpu.dot_dimension_numbers<[1], [0], [0], [1], [0, 0, 1, 1], [], []>} : vector<1x32xbf16>, vector<32x128xbf16>, vector<1x128xf32> -> vector<1x128xf32>
      %264 = arith.addf %258, %263 : vector<1x128xf32>
      %c0_164 = arith.constant 0 : index
      %c0_165 = arith.constant 0 : index
      %265 = vector.load %arg27[%c0_164, %c0_165] : memref<1x128xf32, #tpu.memory_space<vmem>>, vector<1x128xf32>
      %266 = arith.addf %264, %265 : vector<1x128xf32>
      %c0_166 = arith.constant 0 : index
      %c0_167 = arith.constant 0 : index
      %267 = vector.load %arg28[%c0_166, %c0_167] : memref<128x10xbf16, #tpu.memory_space<vmem>>, vector<128x10xbf16>
      %268 = arith.truncf %266 : vector<1x128xf32> to vector<1x128xbf16>
      %cst_168 = arith.constant dense<0.000000e+00> : vector<1x10xf32>
      %269 = tpu.matmul %268, %267, %cst_168 {dimension_numbers = #tpu.dot_dimension_numbers<[1], [0], [0], [1], [0, 0, 1, 1], [], []>} : vector<1x128xbf16>, vector<128x10xbf16>, vector<1x10xf32> -> vector<1x10xf32>
      %c0_169 = arith.constant 0 : index
      %c0_170 = arith.constant 0 : index
      %270 = vector.load %arg29[%c0_169, %c0_170] : memref<1x10xf32, #tpu.memory_space<vmem>>, vector<1x10xf32>
      %271 = arith.addf %269, %270 : vector<1x10xf32>
      %c0_171 = arith.constant 0 : index
      %c0_172 = arith.constant 0 : index
      %c0_173 = arith.constant 0 : index
      %272 = vector.load %arg30[%c0_171, %c0_172, %c0_173] : memref<1x1x10xf32, #tpu.memory_space<vmem>>, vector<1x1x10xf32>
      %273 = vector.shape_cast %272 : vector<1x1x10xf32> to vector<1x10xf32>
      %274 = vector.shape_cast %271 : vector<1x10xf32> to vector<1x1x10xf32>
      tpu.vector_store %arg30[%c0_171, %c0_172, %c0_173], %274 {strides = array<i32>} : memref<1x1x10xf32, #tpu.memory_space<vmem>>, vector<1x1x10xf32>,
    } else {
    }
    return
  }
  func.func @transform_0(%arg0: i32, %arg1: i32) -> (i32, i32, i32) {
    %c0_i32 = arith.constant 0 : i32
    %c0_i32_0 = arith.constant 0 : i32
    %c0_i32_1 = arith.constant 0 : i32
    return %arg0, %c0_i32, %c0_i32_0 : i32, i32, i32
  }
  func.func @transform_1(%arg0: i32, %arg1: i32) -> (i32, i32) {
    %c0_i32 = arith.constant 0 : i32
    %c0_i32_0 = arith.constant 0 : i32
    %c0_i32_1 = arith.constant 0 : i32
    return %c0_i32, %c0_i32_0 : i32, i32
  }
  func.func @transform_2(%arg0: i32, %arg1: i32) -> (i32, i32) {
    %c0_i32 = arith.constant 0 : i32
    %c0_i32_0 = arith.constant 0 : i32
    %c0_i32_1 = arith.constant 0 : i32
    return %c0_i32, %c0_i32_0 : i32, i32
  }
  func.func @transform_3(%arg0: i32, %arg1: i32) -> (i32, i32) {
    %c0_i32 = arith.constant 0 : i32
    %c0_i32_0 = arith.constant 0 : i32
    %c0_i32_1 = arith.constant 0 : i32
    return %c0_i32, %c0_i32_0 : i32, i32
  }
  func.func @transform_4(%arg0: i32, %arg1: i32) -> (i32, i32) {
    %c0_i32 = arith.constant 0 : i32
    %c0_i32_0 = arith.constant 0 : i32
    %c0_i32_1 = arith.constant 0 : i32
    return %c0_i32, %c0_i32_0 : i32, i32
  }
  func.func @transform_5(%arg0: i32, %arg1: i32) -> (i32, i32) {
    %c0_i32 = arith.constant 0 : i32
    %c0_i32_0 = arith.constant 0 : i32
    %c0_i32_1 = arith.constant 0 : i32
    return %c0_i32, %c0_i32_0 : i32, i32
  }
  func.func @transform_6(%arg0: i32, %arg1: i32) -> (i32, i32) {
    %c0_i32 = arith.constant 0 : i32
    %c0_i32_0 = arith.constant 0 : i32
    %c0_i32_1 = arith.constant 0 : i32
    return %c0_i32, %c0_i32_0 : i32, i32
  }
  func.func @transform_7(%arg0: i32, %arg1: i32) -> (i32, i32) {
    %c0_i32 = arith.constant 0 : i32
    %c0_i32_0 = arith.constant 0 : i32
    %c0_i32_1 = arith.constant 0 : i32
    return %c0_i32, %c0_i32_0 : i32, i32
  }
  func.func @transform_8(%arg0: i32, %arg1: i32) -> (i32, i32) {
    %c0_i32 = arith.constant 0 : i32
    %c0_i32_0 = arith.constant 0 : i32
    %c0_i32_1 = arith.constant 0 : i32
    return %c0_i32, %c0_i32_0 : i32, i32
  }
  func.func @transform_9(%arg0: i32, %arg1: i32) -> (i32, i32, i32) {
    %c0_i32 = arith.constant 0 : i32
    %c0_i32_0 = arith.constant 0 : i32
    %c0_i32_1 = arith.constant 0 : i32
    return %arg1, %c0_i32, %c0_i32_0 : i32, i32, i32
  }
  func.func @transform_10(%arg0: i32, %arg1: i32) -> (i32, i32, i32) {
    %c0_i32 = arith.constant 0 : i32
    %c0_i32_0 = arith.constant 0 : i32
    %c0_i32_1 = arith.constant 0 : i32
    return %arg1, %c0_i32, %c0_i32_0 : i32, i32, i32
  }
  func.func @transform_11(%arg0: i32, %arg1: i32) -> (i32, i32, i32, i32) {
    %c0_i32 = arith.constant 0 : i32
    %c0_i32_0 = arith.constant 0 : i32
    %c0_i32_1 = arith.constant 0 : i32
    %c0_i32_2 = arith.constant 0 : i32
    return %arg1, %c0_i32, %c0_i32_0, %c0_i32_1 : i32, i32, i32, i32
  }
  func.func @transform_12(%arg0: i32, %arg1: i32) -> (i32, i32, i32, i32) {
    %c0_i32 = arith.constant 0 : i32
    %c0_i32_0 = arith.constant 0 : i32
    %c0_i32_1 = arith.constant 0 : i32
    %c0_i32_2 = arith.constant 0 : i32
    return %arg1, %c0_i32, %c0_i32_0, %c0_i32_1 : i32, i32, i32, i32
  }
  func.func @transform_13(%arg0: i32, %arg1: i32) -> (i32, i32, i32, i32) {
    %c0_i32 = arith.constant 0 : i32
    %c0_i32_0 = arith.constant 0 : i32
    %c0_i32_1 = arith.constant 0 : i32
    %c0_i32_2 = arith.constant 0 : i32
    return %arg1, %c0_i32, %c0_i32_0, %c0_i32_1 : i32, i32, i32, i32
  }
  func.func @transform_14(%arg0: i32, %arg1: i32) -> (i32, i32, i32, i32) {
    %c0_i32 = arith.constant 0 : i32
    %c0_i32_0 = arith.constant 0 : i32
    %c0_i32_1 = arith.constant 0 : i32
    %c0_i32_2 = arith.constant 0 : i32
    return %arg1, %c0_i32, %c0_i32_0, %c0_i32_1 : i32, i32, i32, i32
  }
  func.func @transform_15(%arg0: i32, %arg1: i32) -> (i32, i32, i32) {
    %c0_i32 = arith.constant 0 : i32
    %c0_i32_0 = arith.constant 0 : i32
    %c0_i32_1 = arith.constant 0 : i32
    return %arg1, %c0_i32, %c0_i32_0 : i32, i32, i32
  }
  func.func @transform_16(%arg0: i32, %arg1: i32) -> (i32, i32, i32) {
    %c0_i32 = arith.constant 0 : i32
    %c0_i32_0 = arith.constant 0 : i32
    %c0_i32_1 = arith.constant 0 : i32
    return %arg1, %c0_i32, %c0_i32_0 : i32, i32, i32
  }
  func.func @transform_17(%arg0: i32, %arg1: i32) -> (i32, i32, i32) {
    %c0_i32 = arith.constant 0 : i32
    %c0_i32_0 = arith.constant 0 : i32
    %c0_i32_1 = arith.constant 0 : i32
    return %arg1, %c0_i32, %c0_i32_0 : i32, i32, i32
  }
  func.func @transform_18(%arg0: i32, %arg1: i32) -> (i32, i32, i32) {
    %c0_i32 = arith.constant 0 : i32
    %c0_i32_0 = arith.constant 0 : i32
    %c0_i32_1 = arith.constant 0 : i32
    return %arg1, %c0_i32, %c0_i32_0 : i32, i32, i32
  }
  func.func @transform_19(%arg0: i32, %arg1: i32) -> (i32, i32, i32) {
    %c0_i32 = arith.constant 0 : i32
    %c0_i32_0 = arith.constant 0 : i32
    %c0_i32_1 = arith.constant 0 : i32
    return %arg1, %c0_i32, %c0_i32_0 : i32, i32, i32
  }
  func.func @transform_20(%arg0: i32, %arg1: i32) -> (i32, i32, i32) {
    %c0_i32 = arith.constant 0 : i32
    %c0_i32_0 = arith.constant 0 : i32
    %c0_i32_1 = arith.constant 0 : i32
    return %arg1, %c0_i32, %c0_i32_0 : i32, i32, i32
  }
  func.func @transform_21(%arg0: i32, %arg1: i32) -> (i32, i32, i32) {
    %c0_i32 = arith.constant 0 : i32
    %c0_i32_0 = arith.constant 0 : i32
    %c0_i32_1 = arith.constant 0 : i32
    return %arg1, %c0_i32, %c0_i32_0 : i32, i32, i32
  }
  func.func @transform_22(%arg0: i32, %arg1: i32) -> (i32, i32) {
    %c0_i32 = arith.constant 0 : i32
    %c0_i32_0 = arith.constant 0 : i32
    %c0_i32_1 = arith.constant 0 : i32
    return %c0_i32, %c0_i32_0 : i32, i32
  }
  func.func @transform_23(%arg0: i32, %arg1: i32) -> (i32, i32) {
    %c0_i32 = arith.constant 0 : i32
    %c0_i32_0 = arith.constant 0 : i32
    %c0_i32_1 = arith.constant 0 : i32
    return %c0_i32, %c0_i32_0 : i32, i32
  }
  func.func @transform_24(%arg0: i32, %arg1: i32) -> (i32, i32, i32) {
    %c0_i32 = arith.constant 0 : i32
    %c0_i32_0 = arith.constant 0 : i32
    %c0_i32_1 = arith.constant 0 : i32
    %c0_i32_2 = arith.constant 0 : i32
    return %c0_i32, %c0_i32_0, %c0_i32_1 : i32, i32, i32
  }
  func.func @transform_25(%arg0: i32, %arg1: i32) -> (i32, i32) {
    %c0_i32 = arith.constant 0 : i32
    %c0_i32_0 = arith.constant 0 : i32
    %c0_i32_1 = arith.constant 0 : i32
    return %c0_i32, %c0_i32_0 : i32, i32
  }
  func.func @transform_26(%arg0: i32, %arg1: i32) -> (i32, i32) {
    %c0_i32 = arith.constant 0 : i32
    %c0_i32_0 = arith.constant 0 : i32
    %c0_i32_1 = arith.constant 0 : i32
    return %c0_i32, %c0_i32_0 : i32, i32
  }
  func.func @transform_27(%arg0: i32, %arg1: i32) -> (i32, i32) {
    %c0_i32 = arith.constant 0 : i32
    %c0_i32_0 = arith.constant 0 : i32
    %c0_i32_1 = arith.constant 0 : i32
    return %c0_i32, %c0_i32_0 : i32, i32
  }
  func.func @transform_28(%arg0: i32, %arg1: i32) -> (i32, i32, i32) {
    %c0_i32 = arith.constant 0 : i32
    %c0_i32_0 = arith.constant 0 : i32
    %c0_i32_1 = arith.constant 0 : i32
    return %arg0, %c0_i32, %c0_i32_0 : i32, i32, i32
  }
}

</mosaic_0001>

<llo_original>
// kernel: vit_forward_pallas.1
$region0: #{vit_forward_pallas.1}
  #allocation0 [shape = 'u32[]', space=smem, size = 0x4, offset = 0x4, fixed_abs, tag = 'smem constant byte address 0x4 - core index']
  #allocation1 [shape = 'u32[72,128]{1,0:T(1,128)}', space=vmem, size = 0x9000, scoped, tag = 'internal scratch']
  #allocation2 [shape = 'f32[19,32]{1,0:T(8,128)}', space=vmem, size = 0x3000, scoped, tag = 'scratch operand']
  %s0 = inlined_call_operand.vmem [shape: f32[2,16,48], index: 0, kind: input, shape index: {}]
  %s1 = inlined_call_operand.vmem [shape: f32[1,48], index: 1, kind: input, shape index: {}]
  %s2 = inlined_call_operand.vmem [shape: f32[1,48], index: 2, kind: input, shape index: {}]
  %s3 = inlined_call_operand.vmem [shape: bf16[48,32], index: 3, kind: input, shape index: {}]
  %s4 = inlined_call_operand.vmem [shape: f32[1,32], index: 4, kind: input, shape index: {}]
  %s5 = inlined_call_operand.vmem [shape: f32[1,32], index: 5, kind: input, shape index: {}]
  %s6 = inlined_call_operand.vmem [shape: f32[1,32], index: 6, kind: input, shape index: {}]
  %s7 = inlined_call_operand.vmem [shape: f32[3,32], index: 7, kind: input, shape index: {}]
  %s8 = inlined_call_operand.vmem [shape: f32[19,32], index: 8, kind: input, shape index: {}]
  %s9 = inlined_call_operand.vmem [shape: f32[2,1,32], index: 9, kind: input, shape index: {}]
  %s10 = inlined_call_operand.vmem [shape: f32[2,1,32], index: 10, kind: input, shape index: {}]
  %s11 = inlined_call_operand.vmem [shape: bf16[2,4,32,8], index: 11, kind: input, shape index: {}]
  %s12 = inlined_call_operand.vmem [shape: bf16[2,4,32,8], index: 12, kind: input, shape index: {}]
  %s13 = inlined_call_operand.vmem [shape: bf16[2,4,32,8], index: 13, kind: input, shape index: {}]
  %s14 = inlined_call_operand.vmem [shape: bf16[2,4,8,32], index: 14, kind: input, shape index: {}]
  %s15 = inlined_call_operand.vmem [shape: f32[2,1,32], index: 15, kind: input, shape index: {}]
  %s16 = inlined_call_operand.vmem [shape: f32[2,1,32], index: 16, kind: input, shape index: {}]
  %s17 = inlined_call_operand.vmem [shape: f32[2,1,32], index: 17, kind: input, shape index: {}]
  %s18 = inlined_call_operand.vmem [shape: bf16[2,32,64], index: 18, kind: input, shape index: {}]
  %s19 = inlined_call_operand.vmem [shape: f32[2,1,64], index: 19, kind: input, shape index: {}]
  %s20 = inlined_call_operand.vmem [shape: bf16[2,64,32], index: 20, kind: input, shape index: {}]
  %s21 = inlined_call_operand.vmem [shape: f32[2,1,32], index: 21, kind: input, shape index: {}]
  %s22 = inlined_call_operand.vmem [shape: f32[3,32], index: 22, kind: input, shape index: {}]
  %s23 = inlined_call_operand.vmem [shape: f32[3,32], index: 23, kind: input, shape index: {}]
  %s24 = inlined_call_operand.vmem [shape: bf16[3,32,128], index: 24, kind: input, shape index: {}]
  %s25 = inlined_call_operand.vmem [shape: f32[1,128], index: 25, kind: input, shape index: {}]
  %s26 = inlined_call_operand.vmem [shape: bf16[128,10], index: 26, kind: input, shape index: {}]
  %s27 = inlined_call_operand.vmem [shape: f32[1,10], index: 27, kind: input, shape index: {}]
  %s28 = inlined_call_operand.hbm [shape: f32[2,1,10], index: 28, kind: output, shape index: {}]
  %s29 = sld [smem:[#allocation0]]
  $region153: #{vit_forward_pallas.1} parent=0
    _
  %s31 = ssub.s32 1, %s29
  %s32 = scalar_select 0, %s31, %s29
  $region1: #{vit_forward_pallas.1} parent=0
    #allocation3 [shape = 'u8[1024]{0}', space=vmem, size = 0x400, scoped, tag = 'output window, operand 0']
    #allocation4 [shape = 's32[2]{0}', space=sflag, size = 0x8, scoped, tag = 'scoped memory for vit_forward_pallas.1']
    %33 = vsyncpa [#allocation4], 0
    %s34 = scalar_lea.sflag [#allocation4], 1
    %35 = vsyncpa %s34, 0
    loop: start=0, step=1, limit=6
    $region2: #{vit_forward_pallas.1} parent=1 // loop_pre_header
      _
    $region3: #{vit_forward_pallas.1} parent=1 // loop_header
      %s37 = sphi 0, %s41
      %p38 = scmp.ge.s32.totalorder %s37, 6
      %s44 = sphi 0, %s56
      %s45 = sphi 0, %s52
      %s46 = sphi 0, %s44
      %s47 = sphi 0, %s45
      %s48 = sphi 0, %s46
      %s49 = sphi 0, %s47
      %s59 = sphi 0, %s61
      %s62 = sphi 0, %s59
      %s63 = sphi 0, %s62
      %s79 = sphi 0, %s63
      %s83 = sphi 0, %s83
      %s85 = sphi 0, %s83
      %s86 = sphi 0, %s85
      %s100 = sphi 0, %s86
      %s104 = sphi 0, %s104
      %s106 = sphi 0, %s104
      %s107 = sphi 0, %s106
      %s121 = sphi 0, %s107
      %s125 = sphi 0, %s125
      %s127 = sphi 0, %s125
      %s128 = sphi 0, %s127
      %s142 = sphi 0, %s128
      %s146 = sphi 0, %s146
      %s148 = sphi 0, %s146
      %s149 = sphi 0, %s148
      %s163 = sphi 0, %s149
      %s167 = sphi 0, %s167
      %s169 = sphi 0, %s167
      %s170 = sphi 0, %s169
      %s184 = sphi 0, %s170
      %s188 = sphi 0, %s188
      %s190 = sphi 0, %s188
      %s191 = sphi 0, %s190
      %s205 = sphi 0, %s191
      %s209 = sphi 0, %s209
      %s211 = sphi 0, %s209
      %s212 = sphi 0, %s211
      %s226 = sphi 0, %s212
      %s230 = sphi 0, %s230
      %s232 = sphi 0, %s230
      %s233 = sphi 0, %s232
      %s247 = sphi 0, %s233
      %s253 = sphi 0, %s255
      %s256 = sphi 0, %s253
      %s257 = sphi 0, %s256
      %s273 = sphi 0, %s257
      %s279 = sphi 0, %s281
      %s282 = sphi 0, %s279
      %s283 = sphi 0, %s282
      %s299 = sphi 0, %s283
      %s305 = sphi 0, %s307
      %s308 = sphi 0, %s305
      %s309 = sphi 0, %s308
      %s325 = sphi 0, %s309
      %s331 = sphi 0, %s333
      %s334 = sphi 0, %s331
      %s335 = sphi 0, %s334
      %s351 = sphi 0, %s335
      %s357 = sphi 0, %s359
      %s360 = sphi 0, %s357
      %s361 = sphi 0, %s360
      %s377 = sphi 0, %s361
      %s383 = sphi 0, %s385
      %s386 = sphi 0, %s383
      %s387 = sphi 0, %s386
      %s403 = sphi 0, %s387
      %s409 = sphi 0, %s411
      %s412 = sphi 0, %s409
      %s413 = sphi 0, %s412
      %s429 = sphi 0, %s413
      %s435 = sphi 0, %s437
      %s438 = sphi 0, %s435
      %s439 = sphi 0, %s438
      %s455 = sphi 0, %s439
      %s461 = sphi 0, %s463
      %s464 = sphi 0, %s461
      %s465 = sphi 0, %s464
      %s481 = sphi 0, %s465
      %s487 = sphi 0, %s489
      %s490 = sphi 0, %s487
      %s491 = sphi 0, %s490
      %s507 = sphi 0, %s491
      %s513 = sphi 0, %s515
      %s516 = sphi 0, %s513
      %s517 = sphi 0, %s516
      %s533 = sphi 0, %s517
      %s539 = sphi 0, %s541
      %s542 = sphi 0, %s539
      %s543 = sphi 0, %s542
      %s559 = sphi 0, %s543
      %s565 = sphi 0, %s567
      %s568 = sphi 0, %s565
      %s569 = sphi 0, %s568
      %s585 = sphi 0, %s569
      %s589 = sphi 0, %s589
      %s591 = sphi 0, %s589
      %s592 = sphi 0, %s591
      %s606 = sphi 0, %s592
      %s610 = sphi 0, %s610
      %s612 = sphi 0, %s610
      %s613 = sphi 0, %s612
      %s627 = sphi 0, %s613
      %s631 = sphi 0, %s631
      %s633 = sphi 0, %s631
      %s634 = sphi 0, %s633
      %s648 = sphi 0, %s634
      %s652 = sphi 0, %s652
      %s654 = sphi 0, %s652
      %s655 = sphi 0, %s654
      %s669 = sphi 0, %s655
      %s673 = sphi 0, %s673
      %s675 = sphi 0, %s673
      %s676 = sphi 0, %s675
      %s690 = sphi 0, %s676
      %s694 = sphi 0, %s694
      %s696 = sphi 0, %s694
      %s697 = sphi 0, %s696
      %s711 = sphi 0, %s697
      %s717 = sphi 0, %s719
      %s720 = sphi 0, %s717
      %s721 = sphi 0, %s720
      %s737 = sphi 0, %s721
    $region4: #{vit_forward_pallas.1} parent=1 // loop_header_branch
      %40 = sbr.rel (%p38) target = $region8
    $region5: #{vit_forward_pallas.1} parent=1 // loop_body
      %s42 = ssub.s32 %s37, 1
      %s43 = ssub.s32 %s37, 2
      %s50 = sadd.s32 1, %s45
      %p51 = scmp.ge.s32.totalorder %s50, 2
      %s52 = scalar_select %p51, 0, %s50
      %s53 = sadd.s32 1, %s44
      %s54 = scalar_select %p51, %s53, %s44
      %p55 = scmp.ge.s32.totalorder %s54, 2
      %s56 = scalar_select %p55, 0, %s54
      %s57 = ssub.s32 %s44, %s56
      %p58 = scmp.eq.s32.totalorder %s57, 0
      %s60 = sadd.s32 %s59, 1
      %s61 = scalar_select %p58, %s59, %s60
      %p64 = pneg %p58
      %p65 = scmp.eq.s32.totalorder %s37, 3
      %p66 = por %p64, %p65
      %p67 = scmp.ne.s32.totalorder %s59, %s62
      %p68 = scmp.eq.s32.totalorder %s37, 0
      %p69 = por %p67, %p68
      %p70 = scmp.ne.s32.totalorder %s59, %s62
      %p71 = scmp.eq.s32.totalorder %s42, 3
      %p72 = por %p70, %p71
      %p73 = scmp.ne.s32.totalorder %s62, %s63
      %p74 = scmp.eq.s32.totalorder %s42, 0
      %p75 = por %p73, %p74
      %p76 = scmp.ne.s32.totalorder %s62, %s63
      %p77 = scmp.eq.s32.totalorder %s43, 3
      %p78 = por %p76, %p77
      %p80 = scmp.ne.s32.totalorder %s63, %s79
      %p81 = scmp.eq.s32.totalorder %s43, 0
      %p82 = por %p80, %p81
      %s84 = sadd.s32 %s83, 1
      %p87 = scmp.eq.s32.totalorder %s37, 3
      %p88 = scmp.ne.s32.totalorder %s83, %s85
      %p89 = scmp.eq.s32.totalorder %s37, 0
      %p90 = por %p88, %p89
      %p91 = scmp.ne.s32.totalorder %s83, %s85
      %p92 = scmp.eq.s32.totalorder %s42, 3
      %p93 = por %p91, %p92
      %p94 = scmp.ne.s32.totalorder %s85, %s86
      %p95 = scmp.eq.s32.totalorder %s42, 0
      %p96 = por %p94, %p95
      %p97 = scmp.ne.s32.totalorder %s85, %s86
      %p98 = scmp.eq.s32.totalorder %s43, 3
      %p99 = por %p97, %p98
      %p101 = scmp.ne.s32.totalorder %s86, %s100
      %p102 = scmp.eq.s32.totalorder %s43, 0
      %p103 = por %p101, %p102
      %s105 = sadd.s32 %s104, 1
      %p108 = scmp.eq.s32.totalorder %s37, 3
      %p109 = scmp.ne.s32.totalorder %s104, %s106
      %p110 = scmp.eq.s32.totalorder %s37, 0
      %p111 = por %p109, %p110
      %p112 = scmp.ne.s32.totalorder %s104, %s106
      %p113 = scmp.eq.s32.totalorder %s42, 3
      %p114 = por %p112, %p113
      %p115 = scmp.ne.s32.totalorder %s106, %s107
      %p116 = scmp.eq.s32.totalorder %s42, 0
      %p117 = por %p115, %p116
      %p118 = scmp.ne.s32.totalorder %s106, %s107
      %p119 = scmp.eq.s32.totalorder %s43, 3
      %p120 = por %p118, %p119
      %p122 = scmp.ne.s32.totalorder %s107, %s121
      %p123 = scmp.eq.s32.totalorder %s43, 0
      %p124 = por %p122, %p123
      %s126 = sadd.s32 %s125, 1
      %p129 = scmp.eq.s32.totalorder %s37, 3
      %p130 = scmp.ne.s32.totalorder %s125, %s127
      %p131 = scmp.eq.s32.totalorder %s37, 0
      %p132 = por %p130, %p131
      %p133 = scmp.ne.s32.totalorder %s125, %s127
      %p134 = scmp.eq.s32.totalorder %s42, 3
      %p135 = por %p133, %p134
      %p136 = scmp.ne.s32.totalorder %s127, %s128
      %p137 = scmp.eq.s32.totalorder %s42, 0
      %p138 = por %p136, %p137
      %p139 = scmp.ne.s32.totalorder %s127, %s128
      %p140 = scmp.eq.s32.totalorder %s43, 3
      %p141 = por %p139, %p140
      %p143 = scmp.ne.s32.totalorder %s128, %s142
      %p144 = scmp.eq.s32.totalorder %s43, 0
      %p145 = por %p143, %p144
      %s147 = sadd.s32 %s146, 1
      %p150 = scmp.eq.s32.totalorder %s37, 3
      %p151 = scmp.ne.s32.totalorder %s146, %s148
      %p152 = scmp.eq.s32.totalorder %s37, 0
      %p153 = por %p151, %p152
      %p154 = scmp.ne.s32.totalorder %s146, %s148
      %p155 = scmp.eq.s32.totalorder %s42, 3
      %p156 = por %p154, %p155
      %p157 = scmp.ne.s32.totalorder %s148, %s149
      %p158 = scmp.eq.s32.totalorder %s42, 0
      %p159 = por %p157, %p158
      %p160 = scmp.ne.s32.totalorder %s148, %s149
      %p161 = scmp.eq.s32.totalorder %s43, 3
      %p162 = por %p160, %p161
      %p164 = scmp.ne.s32.totalorder %s149, %s163
      %p165 = scmp.eq.s32.totalorder %s43, 0
      %p166 = por %p164, %p165
      %s168 = sadd.s32 %s167, 1
      %p171 = scmp.eq.s32.totalorder %s37, 3
      %p172 = scmp.ne.s32.totalorder %s167, %s169
      %p173 = scmp.eq.s32.totalorder %s37, 0
      %p174 = por %p172, %p173
      %p175 = scmp.ne.s32.totalorder %s167, %s169
      %p176 = scmp.eq.s32.totalorder %s42, 3
      %p177 = por %p175, %p176
      %p178 = scmp.ne.s32.totalorder %s169, %s170
      %p179 = scmp.eq.s32.totalorder %s42, 0
      %p180 = por %p178, %p179
      %p181 = scmp.ne.s32.totalorder %s169, %s170
      %p182 = scmp.eq.s32.totalorder %s43, 3
      %p183 = por %p181, %p182
      %p185 = scmp.ne.s32.totalorder %s170, %s184
      %p186 = scmp.eq.s32.totalorder %s43, 0
      %p187 = por %p185, %p186
      %s189 = sadd.s32 %s188, 1
      %p192 = scmp.eq.s32.totalorder %s37, 3
      %p193 = scmp.ne.s32.totalorder %s188, %s190
      %p194 = scmp.eq.s32.totalorder %s37, 0
      %p195 = por %p193, %p194
      %p196 = scmp.ne.s32.totalorder %s188, %s190
      %p197 = scmp.eq.s32.totalorder %s42, 3
      %p198 = por %p196, %p197
      %p199 = scmp.ne.s32.totalorder %s190, %s191
      %p200 = scmp.eq.s32.totalorder %s42, 0
      %p201 = por %p199, %p200
      %p202 = scmp.ne.s32.totalorder %s190, %s191
      %p203 = scmp.eq.s32.totalorder %s43, 3
      %p204 = por %p202, %p203
      %p206 = scmp.ne.s32.totalorder %s191, %s205
      %p207 = scmp.eq.s32.totalorder %s43, 0
      %p208 = por %p206, %p207
      %s210 = sadd.s32 %s209, 1
      %p213 = scmp.eq.s32.totalorder %s37, 3
      %p214 = scmp.ne.s32.totalorder %s209, %s211
      %p215 = scmp.eq.s32.totalorder %s37, 0
      %p216 = por %p214, %p215
      %p217 = scmp.ne.s32.totalorder %s209, %s211
      %p218 = scmp.eq.s32.totalorder %s42, 3
      %p219 = por %p217, %p218
      %p220 = scmp.ne.s32.totalorder %s211, %s212
      %p221 = scmp.eq.s32.totalorder %s42, 0
      %p222 = por %p220, %p221
      %p223 = scmp.ne.s32.totalorder %s211, %s212
      %p224 = scmp.eq.s32.totalorder %s43, 3
      %p225 = por %p223, %p224
      %p227 = scmp.ne.s32.totalorder %s212, %s226
      %p228 = scmp.eq.s32.totalorder %s43, 0
      %p229 = por %p227, %p228
      %s231 = sadd.s32 %s230, 1
      %p234 = scmp.eq.s32.totalorder %s37, 3
      %p235 = scmp.ne.s32.totalorder %s230, %s232
      %p236 = scmp.eq.s32.totalorder %s37, 0
      %p237 = por %p235, %p236
      %p238 = scmp.ne.s32.totalorder %s230, %s232
      %p239 = scmp.eq.s32.totalorder %s42, 3
      %p240 = por %p238, %p239
      %p241 = scmp.ne.s32.totalorder %s232, %s233
      %p242 = scmp.eq.s32.totalorder %s42, 0
      %p243 = por %p241, %p242
      %p244 = scmp.ne.s32.totalorder %s232, %s233
      %p245 = scmp.eq.s32.totalorder %s43, 3
      %p246 = por %p244, %p245
      %p248 = scmp.ne.s32.totalorder %s233, %s247
      %p249 = scmp.eq.s32.totalorder %s43, 0
      %p250 = por %p248, %p249
      %s251 = ssub.s32 %s45, %s52
      %p252 = scmp.eq.s32.totalorder %s251, 0
      %s254 = sadd.s32 %s253, 1
      %s255 = scalar_select %p252, %s253, %s254
      %p258 = pneg %p252
      %p259 = scmp.eq.s32.totalorder %s37, 3
      %p260 = por %p258, %p259
      %p261 = scmp.ne.s32.totalorder %s253, %s256
      %p262 = scmp.eq.s32.totalorder %s37, 0
      %p263 = por %p261, %p262
      %p264 = scmp.ne.s32.totalorder %s253, %s256
      %p265 = scmp.eq.s32.totalorder %s42, 3
      %p266 = por %p264, %p265
      %p267 = scmp.ne.s32.totalorder %s256, %s257
      %p268 = scmp.eq.s32.totalorder %s42, 0
      %p269 = por %p267, %p268
      %p270 = scmp.ne.s32.totalorder %s256, %s257
      %p271 = scmp.eq.s32.totalorder %s43, 3
      %p272 = por %p270, %p271
      %p274 = scmp.ne.s32.totalorder %s257, %s273
      %p275 = scmp.eq.s32.totalorder %s43, 0
      %p276 = por %p274, %p275
      %s277 = ssub.s32 %s45, %s52
      %p278 = scmp.eq.s32.totalorder %s277, 0
      %s280 = sadd.s32 %s279, 1
      %s281 = scalar_select %p278, %s279, %s280
      %p284 = pneg %p278
      %p285 = scmp.eq.s32.totalorder %s37, 3
      %p286 = por %p284, %p285
      %p287 = scmp.ne.s32.totalorder %s279, %s282
      %p288 = scmp.eq.s32.totalorder %s37, 0
      %p289 = por %p287, %p288
      %p290 = scmp.ne.s32.totalorder %s279, %s282
      %p291 = scmp.eq.s32.totalorder %s42, 3
      %p292 = por %p290, %p291
      %p293 = scmp.ne.s32.totalorder %s282, %s283
      %p294 = scmp.eq.s32.totalorder %s42, 0
      %p295 = por %p293, %p294
      %p296 = scmp.ne.s32.totalorder %s282, %s283
      %p297 = scmp.eq.s32.totalorder %s43, 3
      %p298 = por %p296, %p297
      %p300 = scmp.ne.s32.totalorder %s283, %s299
      %p301 = scmp.eq.s32.totalorder %s43, 0
      %p302 = por %p300, %p301
      %s303 = ssub.s32 %s45, %s52
      %p304 = scmp.eq.s32.totalorder %s303, 0
      %s306 = sadd.s32 %s305, 1
      %s307 = scalar_select %p304, %s305, %s306
      %p310 = pneg %p304
      %p311 = scmp.eq.s32.totalorder %s37, 3
      %p312 = por %p310, %p311
      %p313 = scmp.ne.s32.totalorder %s305, %s308
      %p314 = scmp.eq.s32.totalorder %s37, 0
      %p315 = por %p313, %p314
      %p316 = scmp.ne.s32.totalorder %s305, %s308
      %p317 = scmp.eq.s32.totalorder %s42, 3
      %p318 = por %p316, %p317
      %p319 = scmp.ne.s32.totalorder %s308, %s309
      %p320 = scmp.eq.s32.totalorder %s42, 0
      %p321 = por %p319, %p320
      %p322 = scmp.ne.s32.totalorder %s308, %s309
      %p323 = scmp.eq.s32.totalorder %s43, 3
      %p324 = por %p322, %p323
      %p326 = scmp.ne.s32.totalorder %s309, %s325
      %p327 = scmp.eq.s32.totalorder %s43, 0
      %p328 = por %p326, %p327
      %s329 = ssub.s32 %s45, %s52
      %p330 = scmp.eq.s32.totalorder %s329, 0
      %s332 = sadd.s32 %s331, 1
      %s333 = scalar_select %p330, %s331, %s332
      %p336 = pneg %p330
      %p337 = scmp.eq.s32.totalorder %s37, 3
      %p338 = por %p336, %p337
      %p339 = scmp.ne.s32.totalorder %s331, %s334
      %p340 = scmp.eq.s32.totalorder %s37, 0
      %p341 = por %p339, %p340
      %p342 = scmp.ne.s32.totalorder %s331, %s334
      %p343 = scmp.eq.s32.totalorder %s42, 3
      %p344 = por %p342, %p343
      %p345 = scmp.ne.s32.totalorder %s334, %s335
      %p346 = scmp.eq.s32.totalorder %s42, 0
      %p347 = por %p345, %p346
      %p348 = scmp.ne.s32.totalorder %s334, %s335
      %p349 = scmp.eq.s32.totalorder %s43, 3
      %p350 = por %p348, %p349
      %p352 = scmp.ne.s32.totalorder %s335, %s351
      %p353 = scmp.eq.s32.totalorder %s43, 0
      %p354 = por %p352, %p353
      %s355 = ssub.s32 %s45, %s52
      %p356 = scmp.eq.s32.totalorder %s355, 0
      %s358 = sadd.s32 %s357, 1
      %s359 = scalar_select %p356, %s357, %s358
      %p362 = pneg %p356
      %p363 = scmp.eq.s32.totalorder %s37, 3
      %p364 = por %p362, %p363
      %p365 = scmp.ne.s32.totalorder %s357, %s360
      %p366 = scmp.eq.s32.totalorder %s37, 0
      %p367 = por %p365, %p366
      %p368 = scmp.ne.s32.totalorder %s357, %s360
      %p369 = scmp.eq.s32.totalorder %s42, 3
      %p370 = por %p368, %p369
      %p371 = scmp.ne.s32.totalorder %s360, %s361
      %p372 = scmp.eq.s32.totalorder %s42, 0
      %p373 = por %p371, %p372
      %p374 = scmp.ne.s32.totalorder %s360, %s361
      %p375 = scmp.eq.s32.totalorder %s43, 3
      %p376 = por %p374, %p375
      %p378 = scmp.ne.s32.totalorder %s361, %s377
      %p379 = scmp.eq.s32.totalorder %s43, 0
      %p380 = por %p378, %p379
      %s381 = ssub.s32 %s45, %s52
      %p382 = scmp.eq.s32.totalorder %s381, 0
      %s384 = sadd.s32 %s383, 1
      %s385 = scalar_select %p382, %s383, %s384
      %p388 = pneg %p382
      %p389 = scmp.eq.s32.totalorder %s37, 3
      %p390 = por %p388, %p389
      %p391 = scmp.ne.s32.totalorder %s383, %s386
      %p392 = scmp.eq.s32.totalorder %s37, 0
      %p393 = por %p391, %p392
      %p394 = scmp.ne.s32.totalorder %s383, %s386
      %p395 = scmp.eq.s32.totalorder %s42, 3
      %p396 = por %p394, %p395
      %p397 = scmp.ne.s32.totalorder %s386, %s387
      %p398 = scmp.eq.s32.totalorder %s42, 0
      %p399 = por %p397, %p398
      %p400 = scmp.ne.s32.totalorder %s386, %s387
      %p401 = scmp.eq.s32.totalorder %s43, 3
      %p402 = por %p400, %p401
      %p404 = scmp.ne.s32.totalorder %s387, %s403
      %p405 = scmp.eq.s32.totalorder %s43, 0
      %p406 = por %p404, %p405
      %s407 = ssub.s32 %s45, %s52
      %p408 = scmp.eq.s32.totalorder %s407, 0
      %s410 = sadd.s32 %s409, 1
      %s411 = scalar_select %p408, %s409, %s410
      %p414 = pneg %p408
      %p415 = scmp.eq.s32.totalorder %s37, 3
      %p416 = por %p414, %p415
      %p417 = scmp.ne.s32.totalorder %s409, %s412
      %p418 = scmp.eq.s32.totalorder %s37, 0
      %p419 = por %p417, %p418
      %p420 = scmp.ne.s32.totalorder %s409, %s412
      %p421 = scmp.eq.s32.totalorder %s42, 3
      %p422 = por %p420, %p421
      %p423 = scmp.ne.s32.totalorder %s412, %s413
      %p424 = scmp.eq.s32.totalorder %s42, 0
      %p425 = por %p423, %p424
      %p426 = scmp.ne.s32.totalorder %s412, %s413
      %p427 = scmp.eq.s32.totalorder %s43, 3
      %p428 = por %p426, %p427
      %p430 = scmp.ne.s32.totalorder %s413, %s429
      %p431 = scmp.eq.s32.totalorder %s43, 0
      %p432 = por %p430, %p431
      %s433 = ssub.s32 %s45, %s52
      %p434 = scmp.eq.s32.totalorder %s433, 0
      %s436 = sadd.s32 %s435, 1
      %s437 = scalar_select %p434, %s435, %s436
      %p440 = pneg %p434
      %p441 = scmp.eq.s32.totalorder %s37, 3
      %p442 = por %p440, %p441
      %p443 = scmp.ne.s32.totalorder %s435, %s438
      %p444 = scmp.eq.s32.totalorder %s37, 0
      %p445 = por %p443, %p444
      %p446 = scmp.ne.s32.totalorder %s435, %s438
      %p447 = scmp.eq.s32.totalorder %s42, 3
      %p448 = por %p446, %p447
      %p449 = scmp.ne.s32.totalorder %s438, %s439
      %p450 = scmp.eq.s32.totalorder %s42, 0
      %p451 = por %p449, %p450
      %p452 = scmp.ne.s32.totalorder %s438, %s439
      %p453 = scmp.eq.s32.totalorder %s43, 3
      %p454 = por %p452, %p453
      %p456 = scmp.ne.s32.totalorder %s439, %s455
      %p457 = scmp.eq.s32.totalorder %s43, 0
      %p458 = por %p456, %p457
      %s459 = ssub.s32 %s45, %s52
      %p460 = scmp.eq.s32.totalorder %s459, 0
      %s462 = sadd.s32 %s461, 1
      %s463 = scalar_select %p460, %s461, %s462
      %p466 = pneg %p460
      %p467 = scmp.eq.s32.totalorder %s37, 3
      %p468 = por %p466, %p467
      %p469 = scmp.ne.s32.totalorder %s461, %s464
      %p470 = scmp.eq.s32.totalorder %s37, 0
      %p471 = por %p469, %p470
      %p472 = scmp.ne.s32.totalorder %s461, %s464
      %p473 = scmp.eq.s32.totalorder %s42, 3
      %p474 = por %p472, %p473
      %p475 = scmp.ne.s32.totalorder %s464, %s465
      %p476 = scmp.eq.s32.totalorder %s42, 0
      %p477 = por %p475, %p476
      %p478 = scmp.ne.s32.totalorder %s464, %s465
      %p479 = scmp.eq.s32.totalorder %s43, 3
      %p480 = por %p478, %p479
      %p482 = scmp.ne.s32.totalorder %s465, %s481
      %p483 = scmp.eq.s32.totalorder %s43, 0
      %p484 = por %p482, %p483
      %s485 = ssub.s32 %s45, %s52
      %p486 = scmp.eq.s32.totalorder %s485, 0
      %s488 = sadd.s32 %s487, 1
      %s489 = scalar_select %p486, %s487, %s488
      %p492 = pneg %p486
      %p493 = scmp.eq.s32.totalorder %s37, 3
      %p494 = por %p492, %p493
      %p495 = scmp.ne.s32.totalorder %s487, %s490
      %p496 = scmp.eq.s32.totalorder %s37, 0
      %p497 = por %p495, %p496
      %p498 = scmp.ne.s32.totalorder %s487, %s490
      %p499 = scmp.eq.s32.totalorder %s42, 3
      %p500 = por %p498, %p499
      %p501 = scmp.ne.s32.totalorder %s490, %s491
      %p502 = scmp.eq.s32.totalorder %s42, 0
      %p503 = por %p501, %p502
      %p504 = scmp.ne.s32.totalorder %s490, %s491
      %p505 = scmp.eq.s32.totalorder %s43, 3
      %p506 = por %p504, %p505
      %p508 = scmp.ne.s32.totalorder %s491, %s507
      %p509 = scmp.eq.s32.totalorder %s43, 0
      %p510 = por %p508, %p509
      %s511 = ssub.s32 %s45, %s52
      %p512 = scmp.eq.s32.totalorder %s511, 0
      %s514 = sadd.s32 %s513, 1
      %s515 = scalar_select %p512, %s513, %s514
      %p518 = pneg %p512
      %p519 = scmp.eq.s32.totalorder %s37, 3
      %p520 = por %p518, %p519
      %p521 = scmp.ne.s32.totalorder %s513, %s516
      %p522 = scmp.eq.s32.totalorder %s37, 0
      %p523 = por %p521, %p522
      %p524 = scmp.ne.s32.totalorder %s513, %s516
      %p525 = scmp.eq.s32.totalorder %s42, 3
      %p526 = por %p524, %p525
      %p527 = scmp.ne.s32.totalorder %s516, %s517
      %p528 = scmp.eq.s32.totalorder %s42, 0
      %p529 = por %p527, %p528
      %p530 = scmp.ne.s32.totalorder %s516, %s517
      %p531 = scmp.eq.s32.totalorder %s43, 3
      %p532 = por %p530, %p531
      %p534 = scmp.ne.s32.totalorder %s517, %s533
      %p535 = scmp.eq.s32.totalorder %s43, 0
      %p536 = por %p534, %p535
      %s537 = ssub.s32 %s45, %s52
      %p538 = scmp.eq.s32.totalorder %s537, 0
      %s540 = sadd.s32 %s539, 1
      %s541 = scalar_select %p538, %s539, %s540
      %p544 = pneg %p538
      %p545 = scmp.eq.s32.totalorder %s37, 3
      %p546 = por %p544, %p545
      %p547 = scmp.ne.s32.totalorder %s539, %s542
      %p548 = scmp.eq.s32.totalorder %s37, 0
      %p549 = por %p547, %p548
      %p550 = scmp.ne.s32.totalorder %s539, %s542
      %p551 = scmp.eq.s32.totalorder %s42, 3
      %p552 = por %p550, %p551
      %p553 = scmp.ne.s32.totalorder %s542, %s543
      %p554 = scmp.eq.s32.totalorder %s42, 0
      %p555 = por %p553, %p554
      %p556 = scmp.ne.s32.totalorder %s542, %s543
      %p557 = scmp.eq.s32.totalorder %s43, 3
      %p558 = por %p556, %p557
      %p560 = scmp.ne.s32.totalorder %s543, %s559
      %p561 = scmp.eq.s32.totalorder %s43, 0
      %p562 = por %p560, %p561
      %s563 = ssub.s32 %s45, %s52
      %p564 = scmp.eq.s32.totalorder %s563, 0
      %s566 = sadd.s32 %s565, 1
      %s567 = scalar_select %p564, %s565, %s566
      %p570 = pneg %p564
      %p571 = scmp.eq.s32.totalorder %s37, 3
      %p572 = por %p570, %p571
      %p573 = scmp.ne.s32.totalorder %s565, %s568
      %p574 = scmp.eq.s32.totalorder %s37, 0
      %p575 = por %p573, %p574
      %p576 = scmp.ne.s32.totalorder %s565, %s568
      %p577 = scmp.eq.s32.totalorder %s42, 3
      %p578 = por %p576, %p577
      %p579 = scmp.ne.s32.totalorder %s568, %s569
      %p580 = scmp.eq.s32.totalorder %s42, 0
      %p581 = por %p579, %p580
      %p582 = scmp.ne.s32.totalorder %s568, %s569
      %p583 = scmp.eq.s32.totalorder %s43, 3
      %p584 = por %p582, %p583
      %p586 = scmp.ne.s32.totalorder %s569, %s585
      %p587 = scmp.eq.s32.totalorder %s43, 0
      %p588 = por %p586, %p587
      %s590 = sadd.s32 %s589, 1
      %p593 = scmp.eq.s32.totalorder %s37, 3
      %p594 = scmp.ne.s32.totalorder %s589, %s591
      %p595 = scmp.eq.s32.totalorder %s37, 0
      %p596 = por %p594, %p595
      %p597 = scmp.ne.s32.totalorder %s589, %s591
      %p598 = scmp.eq.s32.totalorder %s42, 3
      %p599 = por %p597, %p598
      %p600 = scmp.ne.s32.totalorder %s591, %s592
      %p601 = scmp.eq.s32.totalorder %s42, 0
      %p602 = por %p600, %p601
      %p603 = scmp.ne.s32.totalorder %s591, %s592
      %p604 = scmp.eq.s32.totalorder %s43, 3
      %p605 = por %p603, %p604
      %p607 = scmp.ne.s32.totalorder %s592, %s606
      %p608 = scmp.eq.s32.totalorder %s43, 0
      %p609 = por %p607, %p608
      %s611 = sadd.s32 %s610, 1
      %p614 = scmp.eq.s32.totalorder %s37, 3
      %p615 = scmp.ne.s32.totalorder %s610, %s612
      %p616 = scmp.eq.s32.totalorder %s37, 0
      %p617 = por %p615, %p616
      %p618 = scmp.ne.s32.totalorder %s610, %s612
      %p619 = scmp.eq.s32.totalorder %s42, 3
      %p620 = por %p618, %p619
      %p621 = scmp.ne.s32.totalorder %s612, %s613
      %p622 = scmp.eq.s32.totalorder %s42, 0
      %p623 = por %p621, %p622
      %p624 = scmp.ne.s32.totalorder %s612, %s613
      %p625 = scmp.eq.s32.totalorder %s43, 3
      %p626 = por %p624, %p625
      %p628 = scmp.ne.s32.totalorder %s613, %s627
      %p629 = scmp.eq.s32.totalorder %s43, 0
      %p630 = por %p628, %p629
      %s632 = sadd.s32 %s631, 1
      %p635 = scmp.eq.s32.totalorder %s37, 3
      %p636 = scmp.ne.s32.totalorder %s631, %s633
      %p637 = scmp.eq.s32.totalorder %s37, 0
      %p638 = por %p636, %p637
      %p639 = scmp.ne.s32.totalorder %s631, %s633
      %p640 = scmp.eq.s32.totalorder %s42, 3
      %p641 = por %p639, %p640
      %p642 = scmp.ne.s32.totalorder %s633, %s634
      %p643 = scmp.eq.s32.totalorder %s42, 0
      %p644 = por %p642, %p643
      %p645 = scmp.ne.s32.totalorder %s633, %s634
      %p646 = scmp.eq.s32.totalorder %s43, 3
      %p647 = por %p645, %p646
      %p649 = scmp.ne.s32.totalorder %s634, %s648
      %p650 = scmp.eq.s32.totalorder %s43, 0
      %p651 = por %p649, %p650
      %s653 = sadd.s32 %s652, 1
      %p656 = scmp.eq.s32.totalorder %s37, 3
      %p657 = scmp.ne.s32.totalorder %s652, %s654
      %p658 = scmp.eq.s32.totalorder %s37, 0
      %p659 = por %p657, %p658
      %p660 = scmp.ne.s32.totalorder %s652, %s654
      %p661 = scmp.eq.s32.totalorder %s42, 3
      %p662 = por %p660, %p661
      %p663 = scmp.ne.s32.totalorder %s654, %s655
      %p664 = scmp.eq.s32.totalorder %s42, 0
      %p665 = por %p663, %p664
      %p666 = scmp.ne.s32.totalorder %s654, %s655
      %p667 = scmp.eq.s32.totalorder %s43, 3
      %p668 = por %p666, %p667
      %p670 = scmp.ne.s32.totalorder %s655, %s669
      %p671 = scmp.eq.s32.totalorder %s43, 0
      %p672 = por %p670, %p671
      %s674 = sadd.s32 %s673, 1
      %p677 = scmp.eq.s32.totalorder %s37, 3
      %p678 = scmp.ne.s32.totalorder %s673, %s675
      %p679 = scmp.eq.s32.totalorder %s37, 0
      %p680 = por %p678, %p679
      %p681 = scmp.ne.s32.totalorder %s673, %s675
      %p682 = scmp.eq.s32.totalorder %s42, 3
      %p683 = por %p681, %p682
      %p684 = scmp.ne.s32.totalorder %s675, %s676
      %p685 = scmp.eq.s32.totalorder %s42, 0
      %p686 = por %p684, %p685
      %p687 = scmp.ne.s32.totalorder %s675, %s676
      %p688 = scmp.eq.s32.totalorder %s43, 3
      %p689 = por %p687, %p688
      %p691 = scmp.ne.s32.totalorder %s676, %s690
      %p692 = scmp.eq.s32.totalorder %s43, 0
      %p693 = por %p691, %p692
      %s695 = sadd.s32 %s694, 1
      %p698 = scmp.eq.s32.totalorder %s37, 3
      %p699 = scmp.ne.s32.totalorder %s694, %s696
      %p700 = scmp.eq.s32.totalorder %s37, 0
      %p701 = por %p699, %p700
      %p702 = scmp.ne.s32.totalorder %s694, %s696
      %p703 = scmp.eq.s32.totalorder %s42, 3
      %p704 = por %p702, %p703
      %p705 = scmp.ne.s32.totalorder %s696, %s697
      %p706 = scmp.eq.s32.totalorder %s42, 0
      %p707 = por %p705, %p706
      %p708 = scmp.ne.s32.totalorder %s696, %s697
      %p709 = scmp.eq.s32.totalorder %s43, 3
      %p710 = por %p708, %p709
      %p712 = scmp.ne.s32.totalorder %s697, %s711
      %p713 = scmp.eq.s32.totalorder %s43, 0
      %p714 = por %p712, %p713
      %s715 = ssub.s32 %s44, %s56
      %p716 = scmp.eq.s32.totalorder %s715, 0
      %s718 = sadd.s32 %s717, 1
      %s719 = scalar_select %p716, %s717, %s718
      %p722 = pneg %p716
      %p723 = scmp.eq.s32.totalorder %s37, 3
      %p724 = por %p722, %p723
      %p725 = scmp.ne.s32.totalorder %s717, %s720
      %p726 = scmp.eq.s32.totalorder %s37, 0
      %p727 = por %p725, %p726
      %p728 = scmp.ne.s32.totalorder %s717, %s720
      %p729 = scmp.eq.s32.totalorder %s42, 3
      %p730 = por %p728, %p729
      %p731 = scmp.ne.s32.totalorder %s720, %s721
      %p732 = scmp.eq.s32.totalorder %s42, 0
      %p733 = por %p731, %p732
      %p734 = scmp.ne.s32.totalorder %s720, %s721
      %p735 = scmp.eq.s32.totalorder %s43, 3
      %p736 = por %p734, %p735
      %p738 = scmp.ne.s32.totalorder %s721, %s737
      %p739 = scmp.eq.s32.totalorder %s43, 0
      %p740 = por %p738, %p739
      %p741 = scmp.le.s32.totalorder 1, %s37
      %p742 = scmp.lt.s32.totalorder %s37, 5
      %p743 = pnand %p741, %p742
      %p744 = pneg %p743
      // Predicated region
      $region9: #{vit_forward_pallas.1} parent=5 // pred_check
        _
      $region10: #{vit_forward_pallas.1} parent=5 // pred_check_branch
        %746 = sbr.rel (%p743) target = $region12
      $region11: #{vit_forward_pallas.1} parent=5 // pred_region
        %s747 = ssub.s32 %s37, 1
        // Predicated region
        $region13: #{vit_forward_pallas.1} parent=11 // pred_check
          %p748 = pneg %p96
        $region14: #{vit_forward_pallas.1} parent=11 // pred_check_branch
          %750 = sbr.rel (%p748) target = $region16
        $region15: #{vit_forward_pallas.1} parent=11 // pred_region
          _
        $region16: #{vit_forward_pallas.1} parent=11 // pred_fallthru
          _
        // Predicated region
        $region17: #{vit_forward_pallas.1} parent=11 // pred_check
          %p751 = pneg %p117
        $region18: #{vit_forward_pallas.1} parent=11 // pred_check_branch
          %753 = sbr.rel (%p751) target = $region20
        $region19: #{vit_forward_pallas.1} parent=11 // pred_region
          _
        $region20: #{vit_forward_pallas.1} parent=11 // pred_fallthru
          _
        // Predicated region
        $region21: #{vit_forward_pallas.1} parent=11 // pred_check
          %p754 = pneg %p138
        $region22: #{vit_forward_pallas.1} parent=11 // pred_check_branch
          %756 = sbr.rel (%p754) target = $region24
        $region23: #{vit_forward_pallas.1} parent=11 // pred_region
          _
        $region24: #{vit_forward_pallas.1} parent=11 // pred_fallthru
          _
        // Predicated region
        $region25: #{vit_forward_pallas.1} parent=11 // pred_check
          %p757 = pneg %p159
        $region26: #{vit_forward_pallas.1} parent=11 // pred_check_branch
          %759 = sbr.rel (%p757) target = $region28
        $region27: #{vit_forward_pallas.1} parent=11 // pred_region
          _
        $region28: #{vit_forward_pallas.1} parent=11 // pred_fallthru
          _
        // Predicated region
        $region29: #{vit_forward_pallas.1} parent=11 // pred_check
          %p760 = pneg %p180
        $region30: #{vit_forward_pallas.1} parent=11 // pred_check_branch
          %762 = sbr.rel (%p760) target = $region32
        $region31: #{vit_forward_pallas.1} parent=11 // pred_region
          _
        $region32: #{vit_forward_pallas.1} parent=11 // pred_fallthru
          _
        // Predicated region
        $region33: #{vit_forward_pallas.1} parent=11 // pred_check
          %p763 = pneg %p201
        $region34: #{vit_forward_pallas.1} parent=11 // pred_check_branch
          %765 = sbr.rel (%p763) target = $region36
        $region35: #{vit_forward_pallas.1} parent=11 // pred_region
          _
        $region36: #{vit_forward_pallas.1} parent=11 // pred_fallthru
          _
        // Predicated region
        $region37: #{vit_forward_pallas.1} parent=11 // pred_check
          %p766 = pneg %p222
        $region38: #{vit_forward_pallas.1} parent=11 // pred_check_branch
          %768 = sbr.rel (%p766) target = $region40
        $region39: #{vit_forward_pallas.1} parent=11 // pred_region
          _
        $region40: #{vit_forward_pallas.1} parent=11 // pred_fallthru
          _
        // Predicated region
        $region41: #{vit_forward_pallas.1} parent=11 // pred_check
          %p769 = pneg %p243
        $region42: #{vit_forward_pallas.1} parent=11 // pred_check_branch
          %771 = sbr.rel (%p769) target = $region44
        $region43: #{vit_forward_pallas.1} parent=11 // pred_region
          _
        $region44: #{vit_forward_pallas.1} parent=11 // pred_fallthru
          _
        // Predicated region
        $region45: #{vit_forward_pallas.1} parent=11 // pred_check
          %p772 = pneg %p602
        $region46: #{vit_forward_pallas.1} parent=11 // pred_check_branch
          %774 = sbr.rel (%p772) target = $region48
        $region47: #{vit_forward_pallas.1} parent=11 // pred_region
          _
        $region48: #{vit_forward_pallas.1} parent=11 // pred_fallthru
          _
        // Predicated region
        $region49: #{vit_forward_pallas.1} parent=11 // pred_check
          %p775 = pneg %p623
        $region50: #{vit_forward_pallas.1} parent=11 // pred_check_branch
          %777 = sbr.rel (%p775) target = $region52
        $region51: #{vit_forward_pallas.1} parent=11 // pred_region
          _
        $region52: #{vit_forward_pallas.1} parent=11 // pred_fallthru
          _
        // Predicated region
        $region53: #{vit_forward_pallas.1} parent=11 // pred_check
          %p778 = pneg %p644
        $region54: #{vit_forward_pallas.1} parent=11 // pred_check_branch
          %780 = sbr.rel (%p778) target = $region56
        $region55: #{vit_forward_pallas.1} parent=11 // pred_region
          _
        $region56: #{vit_forward_pallas.1} parent=11 // pred_fallthru
          _
        // Predicated region
        $region57: #{vit_forward_pallas.1} parent=11 // pred_check
          %p781 = pneg %p665
        $region58: #{vit_forward_pallas.1} parent=11 // pred_check_branch
          %783 = sbr.rel (%p781) target = $region60
        $region59: #{vit_forward_pallas.1} parent=11 // pred_region
          _
        $region60: #{vit_forward_pallas.1} parent=11 // pred_fallthru
          _
        // Predicated region
        $region61: #{vit_forward_pallas.1} parent=11 // pred_check
          %p784 = pneg %p686
        $region62: #{vit_forward_pallas.1} parent=11 // pred_check_branch
          %786 = sbr.rel (%p784) target = $region64
        $region63: #{vit_forward_pallas.1} parent=11 // pred_region
          _
        $region64: #{vit_forward_pallas.1} parent=11 // pred_fallthru
          _
        // Predicated region
        $region65: #{vit_forward_pallas.1} parent=11 // pred_check
          %p787 = pneg %p707
        $region66: #{vit_forward_pallas.1} parent=11 // pred_check_branch
          %789 = sbr.rel (%p787) target = $region68
        $region67: #{vit_forward_pallas.1} parent=11 // pred_region
          _
        $region68: #{vit_forward_pallas.1} parent=11 // pred_fallthru
          _
      $region12: #{vit_forward_pallas.1} parent=5 // pred_fallthru
        _
      %p790 = scmp.lt.s32.totalorder %s37, 4
      // Predicated region
      $region69: #{vit_forward_pallas.1} parent=5 // pred_check
        %p791 = pneg %p790
      $region70: #{vit_forward_pallas.1} parent=5 // pred_check_branch
        %793 = sbr.rel (%p791) target = $region72
      $region71: #{vit_forward_pallas.1} parent=5 // pred_region
        // Predicated region
        $region73: #{vit_forward_pallas.1} parent=71 // pred_check
          %p794 = pneg %p69
        $region74: #{vit_forward_pallas.1} parent=71 // pred_check_branch
          %796 = sbr.rel (%p794) target = $region76
        $region75: #{vit_forward_pallas.1} parent=71 // pred_region
          %p797 = scmp.lt.s32.totalorder %s44, 1
          %s798 = scalar_select %p797, %s44, 1
          %s799 = smul.addr %s798, 2
          %s800 = smul.addr %s799, 8
          %s801 = scalar_lea.vmem %s0, %s800
        $region76: #{vit_forward_pallas.1} parent=71 // pred_fallthru
          _
        // Predicated region
        $region77: #{vit_forward_pallas.1} parent=71 // pred_check
          %p802 = pneg %p263
        $region78: #{vit_forward_pallas.1} parent=71 // pred_check_branch
          %804 = sbr.rel (%p802) target = $region80
        $region79: #{vit_forward_pallas.1} parent=71 // pred_region
          %p805 = scmp.lt.s32.totalorder %s45, 1
          %s806 = scalar_select %p805, %s45, 1
          %s807 = scalar_lea.vmem %s9, %s806
        $region80: #{vit_forward_pallas.1} parent=71 // pred_fallthru
          _
        // Predicated region
        $region81: #{vit_forward_pallas.1} parent=71 // pred_check
          %p808 = pneg %p289
        $region82: #{vit_forward_pallas.1} parent=71 // pred_check_branch
          %810 = sbr.rel (%p808) target = $region84
        $region83: #{vit_forward_pallas.1} parent=71 // pred_region
          %p811 = scmp.lt.s32.totalorder %s45, 1
          %s812 = scalar_select %p811, %s45, 1
          %s813 = scalar_lea.vmem %s10, %s812
        $region84: #{vit_forward_pallas.1} parent=71 // pred_fallthru
          _
        // Predicated region
        $region85: #{vit_forward_pallas.1} parent=71 // pred_check
          %p814 = pneg %p315
        $region86: #{vit_forward_pallas.1} parent=71 // pred_check_branch
          %816 = sbr.rel (%p814) target = $region88
        $region87: #{vit_forward_pallas.1} parent=71 // pred_region
          %p817 = scmp.lt.s32.totalorder %s45, 1
          %s818 = scalar_select %p817, %s45, 1
          %s819 = smul.addr %s818, 16
          %s820 = smul.addr %s819, 4
          %s821 = scalar_lea.vmem %s11, %s820
        $region88: #{vit_forward_pallas.1} parent=71 // pred_fallthru
          _
        // Predicated region
        $region89: #{vit_forward_pallas.1} parent=71 // pred_check
          %p822 = pneg %p341
        $region90: #{vit_forward_pallas.1} parent=71 // pred_check_branch
          %824 = sbr.rel (%p822) target = $region92
        $region91: #{vit_forward_pallas.1} parent=71 // pred_region
          %p825 = scmp.lt.s32.totalorder %s45, 1
          %s826 = scalar_select %p825, %s45, 1
          %s827 = smul.addr %s826, 16
          %s828 = smul.addr %s827, 4
          %s829 = scalar_lea.vmem %s12, %s828
        $region92: #{vit_forward_pallas.1} parent=71 // pred_fallthru
          _
        // Predicated region
        $region93: #{vit_forward_pallas.1} parent=71 // pred_check
          %p830 = pneg %p367
        $region94: #{vit_forward_pallas.1} parent=71 // pred_check_branch
          %832 = sbr.rel (%p830) target = $region96
        $region95: #{vit_forward_pallas.1} parent=71 // pred_region
          %p833 = scmp.lt.s32.totalorder %s45, 1
          %s834 = scalar_select %p833, %s45, 1
          %s835 = smul.addr %s834, 16
          %s836 = smul.addr %s835, 4
          %s837 = scalar_lea.vmem %s13, %s836
        $region96: #{vit_forward_pallas.1} parent=71 // pred_fallthru
          _
        // Predicated region
        $region97: #{vit_forward_pallas.1} parent=71 // pred_check
          %p838 = pneg %p393
        $region98: #{vit_forward_pallas.1} parent=71 // pred_check_branch
          %840 = sbr.rel (%p838) target = $region100
        $region99: #{vit_forward_pallas.1} parent=71 // pred_region
          %p841 = scmp.lt.s32.totalorder %s45, 1
          %s842 = scalar_select %p841, %s45, 1
          %s843 = smul.addr %s842, 4
          %s844 = smul.addr %s843, 4
          %s845 = scalar_lea.vmem %s14, %s844
        $region100: #{vit_forward_pallas.1} parent=71 // pred_fallthru
          _
        // Predicated region
        $region101: #{vit_forward_pallas.1} parent=71 // pred_check
          %p846 = pneg %p419
        $region102: #{vit_forward_pallas.1} parent=71 // pred_check_branch
          %848 = sbr.rel (%p846) target = $region104
        $region103: #{vit_forward_pallas.1} parent=71 // pred_region
          %p849 = scmp.lt.s32.totalorder %s45, 1
          %s850 = scalar_select %p849, %s45, 1
          %s851 = scalar_lea.vmem %s15, %s850
        $region104: #{vit_forward_pallas.1} parent=71 // pred_fallthru
          _
        // Predicated region
        $region105: #{vit_forward_pallas.1} parent=71 // pred_check
          %p852 = pneg %p445
        $region106: #{vit_forward_pallas.1} parent=71 // pred_check_branch
          %854 = sbr.rel (%p852) target = $region108
        $region107: #{vit_forward_pallas.1} parent=71 // pred_region
          %p855 = scmp.lt.s32.totalorder %s45, 1
          %s856 = scalar_select %p855, %s45, 1
          %s857 = scalar_lea.vmem %s16, %s856
        $region108: #{vit_forward_pallas.1} parent=71 // pred_fallthru
          _
        // Predicated region
        $region109: #{vit_forward_pallas.1} parent=71 // pred_check
          %p858 = pneg %p471
        $region110: #{vit_forward_pallas.1} parent=71 // pred_check_branch
          %860 = sbr.rel (%p858) target = $region112
        $region111: #{vit_forward_pallas.1} parent=71 // pred_region
          %p861 = scmp.lt.s32.totalorder %s45, 1
          %s862 = scalar_select %p861, %s45, 1
          %s863 = scalar_lea.vmem %s17, %s862
        $region112: #{vit_forward_pallas.1} parent=71 // pred_fallthru
          _
        // Predicated region
        $region113: #{vit_forward_pallas.1} parent=71 // pred_check
          %p864 = pneg %p497
        $region114: #{vit_forward_pallas.1} parent=71 // pred_check_branch
          %866 = sbr.rel (%p864) target = $region116
        $region115: #{vit_forward_pallas.1} parent=71 // pred_region
          %p867 = scmp.lt.s32.totalorder %s45, 1
          %s868 = scalar_select %p867, %s45, 1
          %s869 = smul.addr %s868, 4
          %s870 = smul.addr %s869, 4
          %s871 = scalar_lea.vmem %s18, %s870
        $region116: #{vit_forward_pallas.1} parent=71 // pred_fallthru
          _
        // Predicated region
        $region117: #{vit_forward_pallas.1} parent=71 // pred_check
          %p872 = pneg %p523
        $region118: #{vit_forward_pallas.1} parent=71 // pred_check_branch
          %874 = sbr.rel (%p872) target = $region120
        $region119: #{vit_forward_pallas.1} parent=71 // pred_region
          %p875 = scmp.lt.s32.totalorder %s45, 1
          %s876 = scalar_select %p875, %s45, 1
          %s877 = scalar_lea.vmem %s19, %s876
        $region120: #{vit_forward_pallas.1} parent=71 // pred_fallthru
          _
        // Predicated region
        $region121: #{vit_forward_pallas.1} parent=71 // pred_check
          %p878 = pneg %p549
        $region122: #{vit_forward_pallas.1} parent=71 // pred_check_branch
          %880 = sbr.rel (%p878) target = $region124
        $region123: #{vit_forward_pallas.1} parent=71 // pred_region
          %p881 = scmp.lt.s32.totalorder %s45, 1
          %s882 = scalar_select %p881, %s45, 1
          %s883 = smul.addr %s882, 8
          %s884 = smul.addr %s883, 4
          %s885 = scalar_lea.vmem %s20, %s884
        $region124: #{vit_forward_pallas.1} parent=71 // pred_fallthru
          _
        // Predicated region
        $region125: #{vit_forward_pallas.1} parent=71 // pred_check
          %p886 = pneg %p575
        $region126: #{vit_forward_pallas.1} parent=71 // pred_check_branch
          %888 = sbr.rel (%p886) target = $region128
        $region127: #{vit_forward_pallas.1} parent=71 // pred_region
          %p889 = scmp.lt.s32.totalorder %s45, 1
          %s890 = scalar_select %p889, %s45, 1
          %s891 = scalar_lea.vmem %s21, %s890
        $region128: #{vit_forward_pallas.1} parent=71 // pred_fallthru
          _
      $region72: #{vit_forward_pallas.1} parent=5 // pred_fallthru
        _
      %p892 = scmp.le.s32.totalorder 1, %s37
      %p893 = scmp.lt.s32.totalorder %s37, 5
      %p894 = pnand %p892, %p893
      %p895 = pneg %p894
      // Predicated region
      $region129: #{vit_forward_pallas.1} parent=5 // pred_check
        _
      $region130: #{vit_forward_pallas.1} parent=5 // pred_check_branch
        %897 = sbr.rel (%p894) target = $region132
      $region131: #{vit_forward_pallas.1} parent=5 // pred_region
        %s898 = ssub.s32 %s37, 1
        %p899 = scmp.lt.s32.totalorder %s46, 1
        %s900 = scalar_select %p899, %s46, 1
        %s901 = smul.addr %s900, 2
        %s902 = smul.addr %s901, 8
        %s903 = scalar_lea.vmem %s0, %s902
        %p904 = pneg %p75
        %p905 = pneg %p72
        %p906 = pneg %p96
        %p907 = pneg %p93
        %p908 = pneg %p117
        %p909 = pneg %p114
        %p910 = pneg %p138
        %p911 = pneg %p135
        %p912 = pneg %p159
        %p913 = pneg %p156
        %p914 = pneg %p180
        %p915 = pneg %p177
        %p916 = pneg %p201
        %p917 = pneg %p198
        %p918 = pneg %p222
        %p919 = pneg %p219
        %p920 = pneg %p243
        %p921 = pneg %p240
        %p922 = scmp.lt.s32.totalorder %s47, 1
        %s923 = scalar_select %p922, %s47, 1
        %s924 = scalar_lea.vmem %s9, %s923
        %p925 = pneg %p269
        %p926 = pneg %p266
        %p927 = scmp.lt.s32.totalorder %s47, 1
        %s928 = scalar_select %p927, %s47, 1
        %s929 = scalar_lea.vmem %s10, %s928
        %p930 = pneg %p295
        %p931 = pneg %p292
        %p932 = scmp.lt.s32.totalorder %s47, 1
        %s933 = scalar_select %p932, %s47, 1
        %s934 = smul.addr %s933, 16
        %s935 = smul.addr %s934, 4
        %s936 = scalar_lea.vmem %s11, %s935
        %p937 = pneg %p321
        %p938 = pneg %p318
        %p939 = scmp.lt.s32.totalorder %s47, 1
        %s940 = scalar_select %p939, %s47, 1
        %s941 = smul.addr %s940, 16
        %s942 = smul.addr %s941, 4
        %s943 = scalar_lea.vmem %s12, %s942
        %p944 = pneg %p347
        %p945 = pneg %p344
        %p946 = scmp.lt.s32.totalorder %s47, 1
        %s947 = scalar_select %p946, %s47, 1
        %s948 = smul.addr %s947, 16
        %s949 = smul.addr %s948, 4
        %s950 = scalar_lea.vmem %s13, %s949
        %p951 = pneg %p373
        %p952 = pneg %p370
        %p953 = scmp.lt.s32.totalorder %s47, 1
        %s954 = scalar_select %p953, %s47, 1
        %s955 = smul.addr %s954, 4
        %s956 = smul.addr %s955, 4
        %s957 = scalar_lea.vmem %s14, %s956
        %p958 = pneg %p399
        %p959 = pneg %p396
        %p960 = scmp.lt.s32.totalorder %s47, 1
        %s961 = scalar_select %p960, %s47, 1
        %s962 = scalar_lea.vmem %s15, %s961
        %p963 = pneg %p425
        %p964 = pneg %p422
        %p965 = scmp.lt.s32.totalorder %s47, 1
        %s966 = scalar_select %p965, %s47, 1
        %s967 = scalar_lea.vmem %s16, %s966
        %p968 = pneg %p451
        %p969 = pneg %p448
        %p970 = scmp.lt.s32.totalorder %s47, 1
        %s971 = scalar_select %p970, %s47, 1
        %s972 = scalar_lea.vmem %s17, %s971
        %p973 = pneg %p477
        %p974 = pneg %p474
        %p975 = scmp.lt.s32.totalorder %s47, 1
        %s976 = scalar_select %p975, %s47, 1
        %s977 = smul.addr %s976, 4
        %s978 = smul.addr %s977, 4
        %s979 = scalar_lea.vmem %s18, %s978
        %p980 = pneg %p503
        %p981 = pneg %p500
        %p982 = scmp.lt.s32.totalorder %s47, 1
        %s983 = scalar_select %p982, %s47, 1
        %s984 = scalar_lea.vmem %s19, %s983
        %p985 = pneg %p529
        %p986 = pneg %p526
        %p987 = scmp.lt.s32.totalorder %s47, 1
        %s988 = scalar_select %p987, %s47, 1
        %s989 = smul.addr %s988, 8
        %s990 = smul.addr %s989, 4
        %s991 = scalar_lea.vmem %s20, %s990
        %p992 = pneg %p555
        %p993 = pneg %p552
        %p994 = scmp.lt.s32.totalorder %s47, 1
        %s995 = scalar_select %p994, %s47, 1
        %s996 = scalar_lea.vmem %s21, %s995
        %p997 = pneg %p581
        %p998 = pneg %p578
        %p999 = pneg %p602
        %p1000 = pneg %p599
        %p1001 = pneg %p623
        %p1002 = pneg %p620
        %p1003 = pneg %p644
        %p1004 = pneg %p641
        %p1005 = pneg %p665
        %p1006 = pneg %p662
        %p1007 = pneg %p686
        %p1008 = pneg %p683
        %p1009 = pneg %p707
        %p1010 = pneg %p704
        %p1011 = pneg %p733
        %p1012 = pneg %p730
        %s1013 = sand.u32 %s720, 1
        %s1014 = scalar_lea.sflag [#allocation4], %s1013
        %s1015 = sand.u32 %s720, 1
        %s1016 = scalar_lea.vmem [#allocation3], %s1015
        %p1017 = scmp.lt.s32.totalorder %s46, 1
        %s1018 = scalar_select %p1017, %s46, 1
        %s1019 = smul.addr %s1018, 2
        %s1020 = smul.addr %s1019, 8
        %s1021 = scalar_lea.vmem %s0, %s1020
        %p1022 = scmp.lt.s32.totalorder %s47, 1
        %s1023 = scalar_select %p1022, %s47, 1
        %s1024 = scalar_lea.vmem %s9, %s1023
        %p1025 = scmp.lt.s32.totalorder %s47, 1
        %s1026 = scalar_select %p1025, %s47, 1
        %s1027 = scalar_lea.vmem %s10, %s1026
        %p1028 = scmp.lt.s32.totalorder %s47, 1
        %s1029 = scalar_select %p1028, %s47, 1
        %s1030 = smul.addr %s1029, 16
        %s1031 = smul.addr %s1030, 4
        %s1032 = scalar_lea.vmem %s11, %s1031
        %p1033 = scmp.lt.s32.totalorder %s47, 1
        %s1034 = scalar_select %p1033, %s47, 1
        %s1035 = smul.addr %s1034, 16
        %s1036 = smul.addr %s1035, 4
        %s1037 = scalar_lea.vmem %s12, %s1036
        %p1038 = scmp.lt.s32.totalorder %s47, 1
        %s1039 = scalar_select %p1038, %s47, 1
        %s1040 = smul.addr %s1039, 16
        %s1041 = smul.addr %s1040, 4
        %s1042 = scalar_lea.vmem %s13, %s1041
        %p1043 = scmp.lt.s32.totalorder %s47, 1
        %s1044 = scalar_select %p1043, %s47, 1
        %s1045 = smul.addr %s1044, 4
        %s1046 = smul.addr %s1045, 4
        %s1047 = scalar_lea.vmem %s14, %s1046
        %p1048 = scmp.lt.s32.totalorder %s47, 1
        %s1049 = scalar_select %p1048, %s47, 1
        %s1050 = scalar_lea.vmem %s15, %s1049
        %p1051 = scmp.lt.s32.totalorder %s47, 1
        %s1052 = scalar_select %p1051, %s47, 1
        %s1053 = scalar_lea.vmem %s16, %s1052
        %p1054 = scmp.lt.s32.totalorder %s47, 1
        %s1055 = scalar_select %p1054, %s47, 1
        %s1056 = scalar_lea.vmem %s17, %s1055
        %p1057 = scmp.lt.s32.totalorder %s47, 1
        %s1058 = scalar_select %p1057, %s47, 1
        %s1059 = smul.addr %s1058, 4
        %s1060 = smul.addr %s1059, 4
        %s1061 = scalar_lea.vmem %s18, %s1060
        %p1062 = scmp.lt.s32.totalorder %s47, 1
        %s1063 = scalar_select %p1062, %s47, 1
        %s1064 = scalar_lea.vmem %s19, %s1063
        %p1065 = scmp.lt.s32.totalorder %s47, 1
        %s1066 = scalar_select %p1065, %s47, 1
        %s1067 = smul.addr %s1066, 8
        %s1068 = smul.addr %s1067, 4
        %s1069 = scalar_lea.vmem %s20, %s1068
        %p1070 = scmp.lt.s32.totalorder %s47, 1
        %s1071 = scalar_select %p1070, %s47, 1
        %s1072 = scalar_lea.vmem %s21, %s1071
        %p1074 = scmp.eq.s32.totalorder %s47, 0
        // Predicated region
        $region133: #{vit_forward_pallas.1} parent=131 // pred_check
          %p1075 = pneg %p1074
        $region134: #{vit_forward_pallas.1} parent=131 // pred_check_branch
          %1077 = sbr.rel (%p1075) target = $region136
        $region135: #{vit_forward_pallas.1} parent=131 // pred_region
          %v1078 = vld [vmem:[%s1021] sm:$0xff]
          %v1079 = vld [vmem:[%s1021 + $0x8] sm:$0xff]
          %v1080 = vld [vmem:[%s1] sm:$0x1]
          %v1081 = vld [vmem:[%s2] sm:$0x1]
          %vm1082 = vcmask 392192
          %v1083 = vsel %vm1082, %v1078, 0.0
          %1084 = vadd.xlane.f32.xlu0 %v1083
          %v1085 = vpop.xlane.xlu0 %1084
          %v1086 = vsel %vm1082, %v1079, 0.0
          %1087 = vadd.xlane.f32.xlu0 %v1086
          %v1088 = vpop.xlane.xlu0 %1087
          %v1089 = vrcp.pop 48.0
          %v1090 = vmul.f32 48.0, %v1089
          %v1091 = vsub.f32 1.0, %v1090
          %v1092 = vmul.f32 %v1089, %v1091
          %v1093 = vadd.f32 %v1089, %v1092
          %vm1094 = vweird.f32 %v1089
          %v1095 = vsel %vm1094, %v1089, %v1093
          %v1096 = vmul.f32 %v1085, %v1095
          %v1097 = vmul.f32 %v1088, %v1095
          %v1098 = vsub.f32 %v1078, %v1096
          %v1099 = vsub.f32 %v1079, %v1097
          %v1100 = vmul.f32 %v1098, %v1098
          %v1101 = vmul.f32 %v1099, %v1099
          %v1102 = vsel %vm1082, %v1100, 0.0
          %1103 = vadd.xlane.f32.xlu0 %v1102
          %v1104 = vpop.xlane.xlu0 %1103
          %v1105 = vsel %vm1082, %v1101, 0.0
          %1106 = vadd.xlane.f32.xlu0 %v1105
          %v1107 = vpop.xlane.xlu0 %1106
          %v1108 = vmul.f32 %v1104, %v1095
          %v1109 = vmul.f32 %v1107, %v1095
          %v1110 = vadd.f32 %v1108, 1e-05
          %v1111 = vadd.f32 %v1109, 1e-05
          %v1112 = vrsqrt.pop %v1110
          %v1113 = vmul.f32 %v1112, %v1110
          %v1114 = vmul.f32 %v1113, %v1112
          %v1115 = vmul.f32 0.5, %v1114
          %v1116 = vsub.f32 1.5, %v1115
          %v1117 = vmul.f32 %v1112, %v1116
          %vm1118 = vweird.f32 %v1110
          %vm1119 = vweird.f32 %v1112
          %vm1120 = vmor %vm1118, %vm1119
          %v1121 = vsel %vm1120, %v1112, %v1117
          %v1122 = vrsqrt.pop %v1111
          %v1123 = vmul.f32 %v1122, %v1111
          %v1124 = vmul.f32 %v1123, %v1122
          %v1125 = vmul.f32 0.5, %v1124
          %v1126 = vsub.f32 1.5, %v1125
          %v1127 = vmul.f32 %v1122, %v1126
          %vm1128 = vweird.f32 %v1111
          %vm1129 = vweird.f32 %v1122
          %vm1130 = vmor %vm1128, %vm1129
          %v1131 = vsel %vm1130, %v1122, %v1127
          %v1132 = vmul.f32 %v1098, %v1121
          %v1133 = vmul.f32 %v1099, %v1131
          %v1135 = vperm.slane %v1080, 0
          %v1137 = vmul.f32 %v1132, %v1135
          %v1138 = vmul.f32 %v1133, %v1135
          %v1140 = vperm.slane %v1081, 0
          %v1142 = vadd.f32 %v1137, %v1140
          %v1143 = vadd.f32 %v1138, %v1140
          %v1144 = vld [vmem:[%s3] sm:$0xf]
          %v1145 = vld [vmem:[%s3 + $0x4] sm:$0xf]
          %v1146 = vld [vmem:[%s3 + $0x8] sm:$0xf]
          %v1147 = vld [vmem:[%s3 + $0xc] sm:$0xf]
          %v1148 = vld [vmem:[%s3 + $0x10] sm:$0xf]
          %v1149 = vld [vmem:[%s3 + $0x14] sm:$0xf]
          %v1150 = vpack.c.bf16 %v1143, %v1142
          %v1151 = vld [vmem:[%s4] sm:$0x1]
          %v1153 = vperm.slane %v1151, 0
          %v1161 = vunpack.c.l.b16 %v1144
          %v1162 = vunpack.c.l.b16 %v1145
          %v1163 = vunpack.c.l.b16 %v1146
          %v1164 = vunpack.c.l.b16 %v1147
          %v1165 = vunpack.c.l.b16 %v1148
          %v1166 = vunpack.c.l.b16 %v1149
          %v1167 = vpack.c.b16 %v1162, %v1161
          %v1168 = vpack.c.b16 %v1164, %v1163
          %v1169 = vpack.c.b16 %v1166, %v1165
          %v1174 = vsel %vm1082, %v1150, 0
          %1176 = vmatpush.bf16.msra.mxu0 0
          %1177 = vmatpush.bf16.msra.mxu0 0
          %1178 = vmatpush.bf16.msra.mxu0 0
          %1179 = vmatpush.bf16.msra.mxu0 0
          %1180 = vmatpush.bf16.msra.mxu0 0
          %1181 = vmatpush.bf16.msra.mxu0 %v1169
          %1182 = vmatpush.bf16.msra.mxu0 %v1168
          %1183 = vmatpush.bf16.msra.mxu0 %v1167
          %1184 = vmatmul.bf16.gmra.mxu0 %v1174
          %v1185 = vpop.f32.mrf.mxu0
          %v1186 = vadd.f32 %v1153, %v1185
          %v1187 = vpop.f32.mrf.mxu0
          %v1188 = vadd.f32 %v1153, %v1187
          %1189 = vdwg.mxu0
          %v1190 = vld [vmem:[%s5] sm:$0x1]
          %v1191 = vld [vmem:[%s6] sm:$0x1]
          %vm1192 = vcmask 261120
          %v1193 = vsel %vm1192, %v1186, 0.0
          %1194 = vadd.xlane.f32.xlu0 %v1193
          %v1195 = vpop.xlane.xlu0 %1194
          %v1196 = vsel %vm1192, %v1188, 0.0
          %1197 = vadd.xlane.f32.xlu0 %v1196
          %v1198 = vpop.xlane.xlu0 %1197
          %v1199 = vrcp.pop 32.0
          %v1200 = vmul.f32 32.0, %v1199
          %v1201 = vsub.f32 1.0, %v1200
          %v1202 = vmul.f32 %v1199, %v1201
          %v1203 = vadd.f32 %v1199, %v1202
          %vm1204 = vweird.f32 %v1199
          %v1205 = vsel %vm1204, %v1199, %v1203
          %v1206 = vmul.f32 %v1195, %v1205
          %v1207 = vmul.f32 %v1198, %v1205
          %v1208 = vsub.f32 %v1186, %v1206
          %v1209 = vsub.f32 %v1188, %v1207
          %v1210 = vmul.f32 %v1208, %v1208
          %v1211 = vmul.f32 %v1209, %v1209
          %v1212 = vsel %vm1192, %v1210, 0.0
          %1213 = vadd.xlane.f32.xlu0 %v1212
          %v1214 = vpop.xlane.xlu0 %1213
          %v1215 = vsel %vm1192, %v1211, 0.0
          %1216 = vadd.xlane.f32.xlu0 %v1215
          %v1217 = vpop.xlane.xlu0 %1216
          %v1218 = vmul.f32 %v1214, %v1205
          %v1219 = vmul.f32 %v1217, %v1205
          %v1220 = vadd.f32 %v1218, 1e-05
          %v1221 = vadd.f32 %v1219, 1e-05
          %v1222 = vrsqrt.pop %v1220
          %v1223 = vmul.f32 %v1222, %v1220
          %v1224 = vmul.f32 %v1223, %v1222
          %v1225 = vmul.f32 0.5, %v1224
          %v1226 = vsub.f32 1.5, %v1225
          %v1227 = vmul.f32 %v1222, %v1226
          %vm1228 = vweird.f32 %v1220
          %vm1229 = vweird.f32 %v1222
          %vm1230 = vmor %vm1228, %vm1229
          %v1231 = vsel %vm1230, %v1222, %v1227
          %v1232 = vrsqrt.pop %v1221
          %v1233 = vmul.f32 %v1232, %v1221
          %v1234 = vmul.f32 %v1233, %v1232
          %v1235 = vmul.f32 0.5, %v1234
          %v1236 = vsub.f32 1.5, %v1235
          %v1237 = vmul.f32 %v1232, %v1236
          %vm1238 = vweird.f32 %v1221
          %vm1239 = vweird.f32 %v1232
          %vm1240 = vmor %vm1238, %vm1239
          %v1241 = vsel %vm1240, %v1232, %v1237
          %v1242 = vmul.f32 %v1208, %v1231
          %v1243 = vmul.f32 %v1209, %v1241
          %v1245 = vperm.slane %v1190, 0
          %v1247 = vmul.f32 %v1242, %v1245
          %v1248 = vmul.f32 %v1243, %v1245
          %v1250 = vperm.slane %v1191, 0
          %v1252 = vadd.f32 %v1247, %v1250
          %v1253 = vadd.f32 %v1248, %v1250
          %v1254 = vld [vmem:[%s8] sm:$0xff]
          %v1255 = vld [vmem:[%s8 + $0x8] sm:$0xff]
          %v1256 = vadd.f32 %v1252, %v1254
          %v1257 = vadd.f32 %v1253, %v1255
          %1258 = vst.msk [vmem:[#allocation2] sm:$0xff] %vm1192, %v1256
          %1259 = vst.msk [vmem:[#allocation2 + $0x8] sm:$0xff] %vm1192, %v1257
          %v1260 = vld [vmem:[%s7] sm:$0x7]
          %v1261 = vld [vmem:[%s8 + $0x10] sm:$0x7]
          %v1262 = vadd.f32 %v1260, %v1261
          %vm1263 = vcmask 256000
          %1264 = vst.msk [vmem:[#allocation2 + $0x10] sm:$0x7] %vm1263, %v1262
        $region136: #{vit_forward_pallas.1} parent=131 // pred_fallthru
          _
        %v1265 = vld [vmem:[#allocation2] sm:$0xff]
        %v1266 = vld [vmem:[#allocation2 + $0x8] sm:$0xff]
        %v1267 = vld [vmem:[#allocation2 + $0x10] sm:$0x7]
        %v1268 = vld [vmem:[%s1024] sm:$0x1]
        %v1269 = vld [vmem:[%s1027] sm:$0x1]
        %vm1270 = vcmask 261120
        %v1271 = vsel %vm1270, %v1265, 0.0
        %1272 = vadd.xlane.f32.xlu0 %v1271
        %v1273 = vpop.xlane.xlu0 %1272
        %v1274 = vsel %vm1270, %v1266, 0.0
        %1275 = vadd.xlane.f32.xlu0 %v1274
        %v1276 = vpop.xlane.xlu0 %1275
        %vm1277 = vcmask 256000
        %v1278 = vsel %vm1277, %v1267, 0.0
        %1279 = vadd.xlane.f32.xlu0 %v1278
        %v1280 = vpop.xlane.xlu0 %1279
        %v1281 = vrcp.pop 32.0
        %v1282 = vmul.f32 32.0, %v1281
        %v1283 = vsub.f32 1.0, %v1282
        %v1284 = vmul.f32 %v1281, %v1283
        %v1285 = vadd.f32 %v1281, %v1284
        %vm1286 = vweird.f32 %v1281
        %v1287 = vsel %vm1286, %v1281, %v1285
        %v1288 = vmul.f32 %v1273, %v1287
        %v1289 = vmul.f32 %v1276, %v1287
        %v1290 = vmul.f32 %v1280, %v1287
        %v1291 = vsub.f32 %v1265, %v1288
        %v1292 = vsub.f32 %v1266, %v1289
        %v1293 = vsub.f32 %v1267, %v1290
        %v1294 = vmul.f32 %v1291, %v1291
        %v1295 = vmul.f32 %v1292, %v1292
        %v1296 = vmul.f32 %v1293, %v1293
        %v1297 = vsel %vm1270, %v1294, 0.0
        %1298 = vadd.xlane.f32.xlu0 %v1297
        %v1299 = vpop.xlane.xlu0 %1298
        %v1300 = vsel %vm1270, %v1295, 0.0
        %1301 = vadd.xlane.f32.xlu0 %v1300
        %v1302 = vpop.xlane.xlu0 %1301
        %v1303 = vsel %vm1277, %v1296, 0.0
        %1304 = vadd.xlane.f32.xlu0 %v1303
        %v1305 = vpop.xlane.xlu0 %1304
        %v1306 = vmul.f32 %v1299, %v1287
        %v1307 = vmul.f32 %v1302, %v1287
        %v1308 = vmul.f32 %v1305, %v1287
        %v1309 = vadd.f32 %v1306, 1e-05
        %v1310 = vadd.f32 %v1307, 1e-05
        %v1311 = vadd.f32 %v1308, 1e-05
        %v1312 = vrsqrt.pop %v1309
        %v1313 = vmul.f32 %v1312, %v1309
        %v1314 = vmul.f32 %v1313, %v1312
        %v1315 = vmul.f32 0.5, %v1314
        %v1316 = vsub.f32 1.5, %v1315
        %v1317 = vmul.f32 %v1312, %v1316
        %vm1318 = vweird.f32 %v1309
        %vm1319 = vweird.f32 %v1312
        %vm1320 = vmor %vm1318, %vm1319
        %v1321 = vsel %vm1320, %v1312, %v1317
        %v1322 = vrsqrt.pop %v1310
        %v1323 = vmul.f32 %v1322, %v1310
        %v1324 = vmul.f32 %v1323, %v1322
        %v1325 = vmul.f32 0.5, %v1324
        %v1326 = vsub.f32 1.5, %v1325
        %v1327 = vmul.f32 %v1322, %v1326
        %vm1328 = vweird.f32 %v1310
        %vm1329 = vweird.f32 %v1322
        %vm1330 = vmor %vm1328, %vm1329
        %v1331 = vsel %vm1330, %v1322, %v1327
        %v1332 = vrsqrt.pop %v1311
        %v1333 = vmul.f32 %v1332, %v1311
        %v1334 = vmul.f32 %v1333, %v1332
        %v1335 = vmul.f32 0.5, %v1334
        %v1336 = vsub.f32 1.5, %v1335
        %v1337 = vmul.f32 %v1332, %v1336
        %vm1338 = vweird.f32 %v1311
        %vm1339 = vweird.f32 %v1332
        %vm1340 = vmor %vm1338, %vm1339
        %v1341 = vsel %vm1340, %v1332, %v1337
        %v1342 = vmul.f32 %v1291, %v1321
        %v1343 = vmul.f32 %v1292, %v1331
        %v1344 = vmul.f32 %v1293, %v1341
        %v1346 = vperm.slane %v1268, 0
        %v1348 = vmul.f32 %v1342, %v1346
        %v1349 = vmul.f32 %v1343, %v1346
        %v1350 = vmul.f32 %v1344, %v1346
        %v1352 = vperm.slane %v1269, 0
        %v1354 = vadd.f32 %v1348, %v1352
        %v1355 = vadd.f32 %v1349, %v1352
        %v1356 = vadd.f32 %v1350, %v1352
        %v1357 = vld [vmem:[%s1032] sm:$0xf]
        %v1358 = vld [vmem:[%s1032 + $0x4] sm:$0xf]
        %v1359 = vld [vmem:[%s1032 + $0x8] sm:$0xf]
        %v1360 = vld [vmem:[%s1032 + $0xc] sm:$0xf]
        %v1361 = vpack.c.bf16 %v1355, %v1354
        %v1362 = vpack.c.bf16 %v1356, %v1356
        %v1367 = vunpack.c.l.b16 %v1357
        %v1368 = vunpack.c.l.b16 %v1358
        %v1369 = vunpack.c.l.b16 %v1359
        %v1370 = vunpack.c.l.b16 %v1360
        %v1371 = vpack.c.b16 %v1368, %v1367
        %v1372 = vpack.c.b16 %v1370, %v1369
        %v1376 = vsel %vm1270, %v1361, 0
        %v1379 = vsel %vm1270, %v1362, 0
        %1381 = vmatpush.bf16.msra.mxu0 0
        %1382 = vmatpush.bf16.msra.mxu0 0
        %1383 = vmatpush.bf16.msra.mxu0 0
        %1384 = vmatpush.bf16.msra.mxu0 0
        %1385 = vmatpush.bf16.msra.mxu0 0
        %1386 = vmatpush.bf16.msra.mxu0 0
        %1387 = vmatpush.bf16.msra.mxu0 %v1372
        %1388 = vmatpush.bf16.msra.mxu0 %v1371
        %1389 = vmatmul.bf16.gmra.mxu0 %v1376
        %v1390 = vpop.f32.mrf.mxu0
        %v1391 = vadd.f32 0.0, %v1390
        %v1392 = vpop.f32.mrf.mxu0
        %v1393 = vadd.f32 0.0, %v1392
        %1394 = vmatmul.bf16.gmra.mxu0 %v1379
        %v1395 = vpop.f32.mrf.mxu0
        %v1396 = vadd.f32 0.0, %v1395
        %v1397 = vpop.f32.mrf.mxu0
        %1398 = vdwg.mxu0
        %v1399 = vld [vmem:[%s1037] sm:$0xf]
        %v1400 = vld [vmem:[%s1037 + $0x4] sm:$0xf]
        %v1401 = vld [vmem:[%s1037 + $0x8] sm:$0xf]
        %v1402 = vld [vmem:[%s1037 + $0xc] sm:$0xf]
        %v1407 = vunpack.c.l.b16 %v1399
        %v1408 = vunpack.c.l.b16 %v1400
        %v1409 = vunpack.c.l.b16 %v1401
        %v1410 = vunpack.c.l.b16 %v1402
        %v1411 = vpack.c.b16 %v1408, %v1407
        %v1412 = vpack.c.b16 %v1410, %v1409
        %1415 = vmatpush.bf16.msra.mxu0 0
        %1416 = vmatpush.bf16.msra.mxu0 0
        %1417 = vmatpush.bf16.msra.mxu0 0
        %1418 = vmatpush.bf16.msra.mxu0 0
        %1419 = vmatpush.bf16.msra.mxu0 0
        %1420 = vmatpush.bf16.msra.mxu0 0
        %1421 = vmatpush.bf16.msra.mxu0 %v1412
        %1422 = vmatpush.bf16.msra.mxu0 %v1411
        %1423 = vmatmul.bf16.gmra.mxu0 %v1376
        %v1424 = vpop.f32.mrf.mxu0
        %v1425 = vadd.f32 0.0, %v1424
        %v1426 = vpop.f32.mrf.mxu0
        %v1427 = vadd.f32 0.0, %v1426
        %1428 = vmatmul.bf16.gmra.mxu0 %v1379
        %v1429 = vpop.f32.mrf.mxu0
        %v1430 = vadd.f32 0.0, %v1429
        %v1431 = vpop.f32.mrf.mxu0
        %1432 = vdwg.mxu0
        %v1433 = vld [vmem:[%s1042] sm:$0xf]
        %v1434 = vld [vmem:[%s1042 + $0x4] sm:$0xf]
        %v1435 = vld [vmem:[%s1042 + $0x8] sm:$0xf]
        %v1436 = vld [vmem:[%s1042 + $0xc] sm:$0xf]
        %v1441 = vunpack.c.l.b16 %v1433
        %v1442 = vunpack.c.l.b16 %v1434
        %v1443 = vunpack.c.l.b16 %v1435
        %v1444 = vunpack.c.l.b16 %v1436
        %v1445 = vpack.c.b16 %v1442, %v1441
        %v1446 = vpack.c.b16 %v1444, %v1443
        %1449 = vmatpush.bf16.msra.mxu0 0
        %1450 = vmatpush.bf16.msra.mxu0 0
        %1451 = vmatpush.bf16.msra.mxu0 0
        %1452 = vmatpush.bf16.msra.mxu0 0
        %1453 = vmatpush.bf16.msra.mxu0 0
        %1454 = vmatpush.bf16.msra.mxu0 0
        %1455 = vmatpush.bf16.msra.mxu0 %v1446
        %1456 = vmatpush.bf16.msra.mxu0 %v1445
        %1457 = vmatmul.bf16.gmra.mxu0 %v1376
        %v1458 = vpop.f32.mrf.mxu0
        %v1459 = vadd.f32 0.0, %v1458
        %v1460 = vpop.f32.mrf.mxu0
        %v1461 = vadd.f32 0.0, %v1460
        %1462 = vmatmul.bf16.gmra.mxu0 %v1379
        %v1463 = vpop.f32.mrf.mxu0
        %v1464 = vadd.f32 0.0, %v1463
        %v1465 = vpop.f32.mrf.mxu0
        %1466 = vdwg.mxu0
        %v1467 = vpack.c.bf16 %v1393, %v1391
        %v1468 = vpack.c.bf16 %v1396, %v1396
        %v1469 = vpack.c.bf16 %v1427, %v1425
        %v1470 = vpack.c.bf16 %v1430, %v1430
        %vm1471 = vcmask 64512
        %v1473 = vsel %vm1471, %v1467, 0
        %v1476 = vsel %vm1471, %v1468, 0
        %v1479 = vsel %vm1471, %v1469, 0
        %v1482 = vsel %vm1471, %v1470, 0
        %1484 = vmatpush.bf16.xpose.msra.mxu0 0
        %1485 = vmatpush.bf16.xpose.msra.mxu0 0
        %1486 = vmatpush.bf16.xpose.msra.mxu0 0
        %1487 = vmatpush.bf16.xpose.msra.mxu0 0
        %1488 = vmatpush.bf16.xpose.msra.mxu0 0
        %1489 = vmatpush.bf16.xpose.msra.mxu0 0
        %1490 = vmatpush.bf16.xpose.msra.mxu0 %v1482
        %1491 = vmatpush.bf16.xpose.msra.mxu0 %v1479
        %1492 = vmatmul.bf16.gmra.mxu0 %v1473
        %v1493 = vpop.f32.mrf.mxu0
        %v1494 = vadd.f32 0.0, %v1493
        %v1495 = vpop.f32.mrf.mxu0
        %v1496 = vadd.f32 0.0, %v1495
        %1497 = vmatmul.bf16.gmra.mxu0 %v1476
        %v1498 = vpop.f32.mrf.mxu0
        %v1499 = vadd.f32 0.0, %v1498
        %v1500 = vpop.f32.mrf.mxu0
        %1501 = vdwg.mxu0
        %vm1502 = vcmask 154624
        %v1503 = vsel %vm1502, %v1494, -inf
        %1504 = vmax.xlane.f32.xlu0 %v1503
        %v1505 = vpop.xlane.xlu0 %1504
        %v1506 = vsel %vm1502, %v1496, -inf
        %1507 = vmax.xlane.f32.xlu0 %v1506
        %v1508 = vpop.xlane.xlu0 %1507
        %vm1509 = vcmask 149504
        %v1510 = vsel %vm1509, %v1499, -inf
        %1511 = vmax.xlane.f32.xlu0 %v1510
        %v1512 = vpop.xlane.xlu0 %1511
        %v1513 = vsub.f32 %v1494, %v1505
        %v1514 = vsub.f32 %v1496, %v1508
        %v1515 = vsub.f32 %v1499, %v1512
        %v1516 = vmul.f32 %v1513, 1.442695
        %v1517 = vpow.pop %v1516
        %v1518 = vmul.f32 %v1514, 1.442695
        %v1519 = vpow.pop %v1518
        %v1520 = vmul.f32 %v1515, 1.442695
        %v1521 = vpow.pop %v1520
        %v1522 = vsel %vm1502, %v1517, 0.0
        %1523 = vadd.xlane.f32.xlu0 %v1522
        %v1524 = vpop.xlane.xlu0 %1523
        %v1525 = vsel %vm1502, %v1519, 0.0
        %1526 = vadd.xlane.f32.xlu0 %v1525
        %v1527 = vpop.xlane.xlu0 %1526
        %v1528 = vsel %vm1509, %v1521, 0.0
        %1529 = vadd.xlane.f32.xlu0 %v1528
        %v1530 = vpop.xlane.xlu0 %1529
        %v1531 = vrcp.pop %v1524
        %v1532 = vrcp.pop %v1527
        %v1533 = vrcp.pop %v1530
        %v1534 = vmul.f32 %v1517, %v1531
        %v1535 = vmul.f32 %v1519, %v1532
        %v1536 = vmul.f32 %v1521, %v1533
        %v1537 = vpack.c.bf16 %v1535, %v1534
        %v1538 = vpack.c.bf16 %v1536, %v1536
        %v1539 = vpack.c.bf16 %v1461, %v1459
        %v1540 = vpack.c.bf16 %v1464, %v1464
        %v1542 = vsel %vm1502, %v1537, 0
        %v1545 = vsel %vm1502, %v1538, 0
        %vm1547 = vcmask 1040384
        %vm1548 = vcmask 1041408
        %v1549 = vsel %vm1547, 4294967295, 65535
        %v1550 = vsel %vm1548, %v1549, 0
        %v1552 = vand.u32 %v1540, %v1550
        %1554 = vmatpush.bf16.msra.mxu0 0
        %1555 = vmatpush.bf16.msra.mxu0 0
        %1556 = vmatpush.bf16.msra.mxu0 0
        %1557 = vmatpush.bf16.msra.mxu0 0
        %1558 = vmatpush.bf16.msra.mxu0 0
        %1559 = vmatpush.bf16.msra.mxu0 0
        %1560 = vmatpush.bf16.msra.mxu0 %v1552
        %1561 = vmatpush.bf16.msra.mxu0 %v1539
        %1562 = vmatmul.bf16.gmra.mxu0 %v1542
        %v1563 = vpop.f32.mrf.mxu0
        %v1564 = vadd.f32 0.0, %v1563
        %v1565 = vpop.f32.mrf.mxu0
        %v1566 = vadd.f32 0.0, %v1565
        %1567 = vmatmul.bf16.gmra.mxu0 %v1545
        %v1568 = vpop.f32.mrf.mxu0
        %v1569 = vadd.f32 0.0, %v1568
        %v1570 = vpop.f32.mrf.mxu0
        %1571 = vdwg.mxu0
        %v1572 = vld [vmem:[%s1047] sm:$0xf]
        %v1573 = vpack.c.bf16 %v1566, %v1564
        %v1574 = vpack.c.bf16 %v1569, %v1569
        %s1575 = scalar_lea.vmem %s1032, 16
        %v1576 = vld [vmem:[%s1575] sm:$0xf]
        %v1577 = vld [vmem:[%s1575 + $0x4] sm:$0xf]
        %v1578 = vld [vmem:[%s1575 + $0x8] sm:$0xf]
        %v1579 = vld [vmem:[%s1575 + $0xc] sm:$0xf]
        %v1584 = vunpack.c.l.b16 %v1576
        %v1585 = vunpack.c.l.b16 %v1577
        %v1586 = vunpack.c.l.b16 %v1578
        %v1587 = vunpack.c.l.b16 %v1579
        %v1588 = vpack.c.b16 %v1585, %v1584
        %v1589 = vpack.c.b16 %v1587, %v1586
        %1592 = vmatpush.bf16.msra.mxu0 0
        %1593 = vmatpush.bf16.msra.mxu0 0
        %1594 = vmatpush.bf16.msra.mxu0 0
        %1595 = vmatpush.bf16.msra.mxu0 0
        %1596 = vmatpush.bf16.msra.mxu0 0
        %1597 = vmatpush.bf16.msra.mxu0 0
        %1598 = vmatpush.bf16.msra.mxu0 %v1589
        %1599 = vmatpush.bf16.msra.mxu0 %v1588
        %1600 = vmatmul.bf16.gmra.mxu0 %v1376
        %v1601 = vpop.f32.mrf.mxu0
        %v1602 = vadd.f32 0.0, %v1601
        %v1603 = vpop.f32.mrf.mxu0
        %v1604 = vadd.f32 0.0, %v1603
        %1605 = vmatmul.bf16.gmra.mxu0 %v1379
        %v1606 = vpop.f32.mrf.mxu0
        %v1607 = vadd.f32 0.0, %v1606
        %v1608 = vpop.f32.mrf.mxu0
        %1609 = vdwg.mxu0
        %s1610 = scalar_lea.vmem %s1037, 16
        %v1611 = vld [vmem:[%s1610] sm:$0xf]
        %v1612 = vld [vmem:[%s1610 + $0x4] sm:$0xf]
        %v1613 = vld [vmem:[%s1610 + $0x8] sm:$0xf]
        %v1614 = vld [vmem:[%s1610 + $0xc] sm:$0xf]
        %v1619 = vunpack.c.l.b16 %v1611
        %v1620 = vunpack.c.l.b16 %v1612
        %v1621 = vunpack.c.l.b16 %v1613
        %v1622 = vunpack.c.l.b16 %v1614
        %v1623 = vpack.c.b16 %v1620, %v1619
        %v1624 = vpack.c.b16 %v1622, %v1621
        %1627 = vmatpush.bf16.msra.mxu0 0
        %1628 = vmatpush.bf16.msra.mxu0 0
        %1629 = vmatpush.bf16.msra.mxu0 0
        %1630 = vmatpush.bf16.msra.mxu0 0
        %1631 = vmatpush.bf16.msra.mxu0 0
        %1632 = vmatpush.bf16.msra.mxu0 0
        %1633 = vmatpush.bf16.msra.mxu0 %v1624
        %1634 = vmatpush.bf16.msra.mxu0 %v1623
        %1635 = vmatmul.bf16.gmra.mxu0 %v1376
        %v1636 = vpop.f32.mrf.mxu0
        %v1637 = vadd.f32 0.0, %v1636
        %v1638 = vpop.f32.mrf.mxu0
        %v1639 = vadd.f32 0.0, %v1638
        %1640 = vmatmul.bf16.gmra.mxu0 %v1379
        %v1641 = vpop.f32.mrf.mxu0
        %v1642 = vadd.f32 0.0, %v1641
        %v1643 = vpop.f32.mrf.mxu0
        %1644 = vdwg.mxu0
        %s1645 = scalar_lea.vmem %s1042, 16
        %v1646 = vld [vmem:[%s1645] sm:$0xf]
        %v1647 = vld [vmem:[%s1645 + $0x4] sm:$0xf]
        %v1648 = vld [vmem:[%s1645 + $0x8] sm:$0xf]
        %v1649 = vld [vmem:[%s1645 + $0xc] sm:$0xf]
        %v1654 = vunpack.c.l.b16 %v1646
        %v1655 = vunpack.c.l.b16 %v1647
        %v1656 = vunpack.c.l.b16 %v1648
        %v1657 = vunpack.c.l.b16 %v1649
        %v1658 = vpack.c.b16 %v1655, %v1654
        %v1659 = vpack.c.b16 %v1657, %v1656
        %1662 = vmatpush.bf16.msra.mxu0 0
        %1663 = vmatpush.bf16.msra.mxu0 0
        %1664 = vmatpush.bf16.msra.mxu0 0
        %1665 = vmatpush.bf16.msra.mxu0 0
        %1666 = vmatpush.bf16.msra.mxu0 0
        %1667 = vmatpush.bf16.msra.mxu0 0
        %1668 = vmatpush.bf16.msra.mxu0 %v1659
        %1669 = vmatpush.bf16.msra.mxu0 %v1658
        %1670 = vmatmul.bf16.gmra.mxu0 %v1376
        %v1671 = vpop.f32.mrf.mxu0
        %v1672 = vadd.f32 0.0, %v1671
        %v1673 = vpop.f32.mrf.mxu0
        %v1674 = vadd.f32 0.0, %v1673
        %1675 = vmatmul.bf16.gmra.mxu0 %v1379
        %v1676 = vpop.f32.mrf.mxu0
        %v1677 = vadd.f32 0.0, %v1676
        %v1678 = vpop.f32.mrf.mxu0
        %1679 = vdwg.mxu0
        %v1680 = vpack.c.bf16 %v1604, %v1602
        %v1681 = vpack.c.bf16 %v1607, %v1607
        %v1682 = vpack.c.bf16 %v1639, %v1637
        %v1683 = vpack.c.bf16 %v1642, %v1642
        %v1685 = vsel %vm1471, %v1680, 0
        %v1688 = vsel %vm1471, %v1681, 0
        %v1691 = vsel %vm1471, %v1682, 0
        %v1694 = vsel %vm1471, %v1683, 0
        %1696 = vmatpush.bf16.xpose.msra.mxu0 0
        %1697 = vmatpush.bf16.xpose.msra.mxu0 0
        %1698 = vmatpush.bf16.xpose.msra.mxu0 0
        %1699 = vmatpush.bf16.xpose.msra.mxu0 0
        %1700 = vmatpush.bf16.xpose.msra.mxu0 0
        %1701 = vmatpush.bf16.xpose.msra.mxu0 0
        %1702 = vmatpush.bf16.xpose.msra.mxu0 %v1694
        %1703 = vmatpush.bf16.xpose.msra.mxu0 %v1691
        %1704 = vmatmul.bf16.gmra.mxu0 %v1685
        %v1705 = vpop.f32.mrf.mxu0
        %v1706 = vadd.f32 0.0, %v1705
        %v1707 = vpop.f32.mrf.mxu0
        %v1708 = vadd.f32 0.0, %v1707
        %1709 = vmatmul.bf16.gmra.mxu0 %v1688
        %v1710 = vpop.f32.mrf.mxu0
        %v1711 = vadd.f32 0.0, %v1710
        %v1712 = vpop.f32.mrf.mxu0
        %1713 = vdwg.mxu0
        %v1714 = vsel %vm1502, %v1706, -inf
        %1715 = vmax.xlane.f32.xlu0 %v1714
        %v1716 = vpop.xlane.xlu0 %1715
        %v1717 = vsel %vm1502, %v1708, -inf
        %1718 = vmax.xlane.f32.xlu0 %v1717
        %v1719 = vpop.xlane.xlu0 %1718
        %v1720 = vsel %vm1509, %v1711, -inf
        %1721 = vmax.xlane.f32.xlu0 %v1720
        %v1722 = vpop.xlane.xlu0 %1721
        %v1723 = vsub.f32 %v1706, %v1716
        %v1724 = vsub.f32 %v1708, %v1719
        %v1725 = vsub.f32 %v1711, %v1722
        %v1726 = vmul.f32 %v1723, 1.442695
        %v1727 = vpow.pop %v1726
        %v1728 = vmul.f32 %v1724, 1.442695
        %v1729 = vpow.pop %v1728
        %v1730 = vmul.f32 %v1725, 1.442695
        %v1731 = vpow.pop %v1730
        %v1732 = vsel %vm1502, %v1727, 0.0
        %1733 = vadd.xlane.f32.xlu0 %v1732
        %v1734 = vpop.xlane.xlu0 %1733
        %v1735 = vsel %vm1502, %v1729, 0.0
        %1736 = vadd.xlane.f32.xlu0 %v1735
        %v1737 = vpop.xlane.xlu0 %1736
        %v1738 = vsel %vm1509, %v1731, 0.0
        %1739 = vadd.xlane.f32.xlu0 %v1738
        %v1740 = vpop.xlane.xlu0 %1739
        %v1741 = vrcp.pop %v1734
        %v1742 = vrcp.pop %v1737
        %v1743 = vrcp.pop %v1740
        %v1744 = vmul.f32 %v1727, %v1741
        %v1745 = vmul.f32 %v1729, %v1742
        %v1746 = vmul.f32 %v1731, %v1743
        %v1747 = vpack.c.bf16 %v1745, %v1744
        %v1748 = vpack.c.bf16 %v1746, %v1746
        %v1749 = vpack.c.bf16 %v1674, %v1672
        %v1750 = vpack.c.bf16 %v1677, %v1677
        %v1752 = vsel %vm1502, %v1747, 0
        %v1755 = vsel %vm1502, %v1748, 0
        %v1758 = vand.u32 %v1750, %v1550
        %1760 = vmatpush.bf16.msra.mxu0 0
        %1761 = vmatpush.bf16.msra.mxu0 0
        %1762 = vmatpush.bf16.msra.mxu0 0
        %1763 = vmatpush.bf16.msra.mxu0 0
        %1764 = vmatpush.bf16.msra.mxu0 0
        %1765 = vmatpush.bf16.msra.mxu0 0
        %1766 = vmatpush.bf16.msra.mxu0 %v1758
        %1767 = vmatpush.bf16.msra.mxu0 %v1749
        %1768 = vmatmul.bf16.gmra.mxu0 %v1752
        %v1769 = vpop.f32.mrf.mxu0
        %v1770 = vadd.f32 0.0, %v1769
        %v1771 = vpop.f32.mrf.mxu0
        %v1772 = vadd.f32 0.0, %v1771
        %1773 = vmatmul.bf16.gmra.mxu0 %v1755
        %v1774 = vpop.f32.mrf.mxu0
        %v1775 = vadd.f32 0.0, %v1774
        %v1776 = vpop.f32.mrf.mxu0
        %1777 = vdwg.mxu0
        %s1778 = scalar_lea.vmem %s1047, 4
        %v1779 = vld [vmem:[%s1778] sm:$0xf]
        %v1780 = vpack.c.bf16 %v1772, %v1770
        %v1781 = vpack.c.bf16 %v1775, %v1775
        %v1783 = vsel %vm1471, %v1780, 0
        %v1786 = vsel %vm1471, %v1781, 0
        %vm1788 = vcmask 1043456
        %v1790 = vsel %vm1788, %v1779, 0
        %1792 = vmatpush.bf16.msra.mxu0 0
        %1793 = vmatpush.bf16.msra.mxu0 0
        %1794 = vmatpush.bf16.msra.mxu0 0
        %1795 = vmatpush.bf16.msra.mxu0 0
        %1796 = vmatpush.bf16.msra.mxu0 0
        %1797 = vmatpush.bf16.msra.mxu0 0
        %1798 = vmatpush.bf16.msra.mxu0 0
        %1799 = vmatpush.bf16.msra.mxu0 %v1790
        %1800 = vmatmul.bf16.gmra.mxu0 %v1783
        %v1801 = vpop.f32.mrf.mxu0
        %v1802 = vadd.f32 0.0, %v1801
        %v1803 = vpop.f32.mrf.mxu0
        %v1804 = vadd.f32 0.0, %v1803
        %1805 = vmatmul.bf16.gmra.mxu0 %v1786
        %v1806 = vpop.f32.mrf.mxu0
        %v1807 = vadd.f32 0.0, %v1806
        %v1808 = vpop.f32.mrf.mxu0
        %1809 = vdwg.mxu0
        %v1811 = vsel %vm1471, %v1573, 0
        %v1814 = vsel %vm1471, %v1574, 0
        %v1817 = vsel %vm1788, %v1572, 0
        %1819 = vmatpush.bf16.msra.mxu0 0
        %1820 = vmatpush.bf16.msra.mxu0 0
        %1821 = vmatpush.bf16.msra.mxu0 0
        %1822 = vmatpush.bf16.msra.mxu0 0
        %1823 = vmatpush.bf16.msra.mxu0 0
        %1824 = vmatpush.bf16.msra.mxu0 0
        %1825 = vmatpush.bf16.msra.mxu0 0
        %1826 = vmatpush.bf16.msra.mxu0 %v1817
        %1827 = vmatmul.bf16.gmra.mxu0 %v1811
        %v1828 = vpop.f32.mrf.mxu0
        %v1829 = vadd.f32 %v1802, %v1828
        %v1830 = vpop.f32.mrf.mxu0
        %v1831 = vadd.f32 %v1804, %v1830
        %1832 = vmatmul.bf16.gmra.mxu0 %v1814
        %v1833 = vpop.f32.mrf.mxu0
        %v1834 = vadd.f32 %v1807, %v1833
        %v1835 = vpop.f32.mrf.mxu0
        %1836 = vdwg.mxu0
        %s1837 = scalar_lea.vmem %s1032, 32
        %v1838 = vld [vmem:[%s1837] sm:$0xf]
        %v1839 = vld [vmem:[%s1837 + $0x4] sm:$0xf]
        %v1840 = vld [vmem:[%s1837 + $0x8] sm:$0xf]
        %v1841 = vld [vmem:[%s1837 + $0xc] sm:$0xf]
        %v1846 = vunpack.c.l.b16 %v1838
        %v1847 = vunpack.c.l.b16 %v1839
        %v1848 = vunpack.c.l.b16 %v1840
        %v1849 = vunpack.c.l.b16 %v1841
        %v1850 = vpack.c.b16 %v1847, %v1846
        %v1851 = vpack.c.b16 %v1849, %v1848
        %1854 = vmatpush.bf16.msra.mxu0 0
        %1855 = vmatpush.bf16.msra.mxu0 0
        %1856 = vmatpush.bf16.msra.mxu0 0
        %1857 = vmatpush.bf16.msra.mxu0 0
        %1858 = vmatpush.bf16.msra.mxu0 0
        %1859 = vmatpush.bf16.msra.mxu0 0
        %1860 = vmatpush.bf16.msra.mxu0 %v1851
        %1861 = vmatpush.bf16.msra.mxu0 %v1850
        %1862 = vmatmul.bf16.gmra.mxu0 %v1376
        %v1863 = vpop.f32.mrf.mxu0
        %v1864 = vadd.f32 0.0, %v1863
        %v1865 = vpop.f32.mrf.mxu0
        %v1866 = vadd.f32 0.0, %v1865
        %1867 = vmatmul.bf16.gmra.mxu0 %v1379
        %v1868 = vpop.f32.mrf.mxu0
        %v1869 = vadd.f32 0.0, %v1868
        %v1870 = vpop.f32.mrf.mxu0
        %1871 = vdwg.mxu0
        %s1872 = scalar_lea.vmem %s1037, 32
        %v1873 = vld [vmem:[%s1872] sm:$0xf]
        %v1874 = vld [vmem:[%s1872 + $0x4] sm:$0xf]
        %v1875 = vld [vmem:[%s1872 + $0x8] sm:$0xf]
        %v1876 = vld [vmem:[%s1872 + $0xc] sm:$0xf]
        %v1881 = vunpack.c.l.b16 %v1873
        %v1882 = vunpack.c.l.b16 %v1874
        %v1883 = vunpack.c.l.b16 %v1875
        %v1884 = vunpack.c.l.b16 %v1876
        %v1885 = vpack.c.b16 %v1882, %v1881
        %v1886 = vpack.c.b16 %v1884, %v1883
        %1889 = vmatpush.bf16.msra.mxu0 0
        %1890 = vmatpush.bf16.msra.mxu0 0
        %1891 = vmatpush.bf16.msra.mxu0 0
        %1892 = vmatpush.bf16.msra.mxu0 0
        %1893 = vmatpush.bf16.msra.mxu0 0
        %1894 = vmatpush.bf16.msra.mxu0 0
        %1895 = vmatpush.bf16.msra.mxu0 %v1886
        %1896 = vmatpush.bf16.msra.mxu0 %v1885
        %1897 = vmatmul.bf16.gmra.mxu0 %v1376
        %v1898 = vpop.f32.mrf.mxu0
        %v1899 = vadd.f32 0.0, %v1898
        %v1900 = vpop.f32.mrf.mxu0
        %v1901 = vadd.f32 0.0, %v1900
        %1902 = vmatmul.bf16.gmra.mxu0 %v1379
        %v1903 = vpop.f32.mrf.mxu0
        %v1904 = vadd.f32 0.0, %v1903
        %v1905 = vpop.f32.mrf.mxu0
        %1906 = vdwg.mxu0
        %s1907 = scalar_lea.vmem %s1042, 32
        %v1908 = vld [vmem:[%s1907] sm:$0xf]
        %v1909 = vld [vmem:[%s1907 + $0x4] sm:$0xf]
        %v1910 = vld [vmem:[%s1907 + $0x8] sm:$0xf]
        %v1911 = vld [vmem:[%s1907 + $0xc] sm:$0xf]
        %v1916 = vunpack.c.l.b16 %v1908
        %v1917 = vunpack.c.l.b16 %v1909
        %v1918 = vunpack.c.l.b16 %v1910
        %v1919 = vunpack.c.l.b16 %v1911
        %v1920 = vpack.c.b16 %v1917, %v1916
        %v1921 = vpack.c.b16 %v1919, %v1918
        %1924 = vmatpush.bf16.msra.mxu0 0
        %1925 = vmatpush.bf16.msra.mxu0 0
        %1926 = vmatpush.bf16.msra.mxu0 0
        %1927 = vmatpush.bf16.msra.mxu0 0
        %1928 = vmatpush.bf16.msra.mxu0 0
        %1929 = vmatpush.bf16.msra.mxu0 0
        %1930 = vmatpush.bf16.msra.mxu0 %v1921
        %1931 = vmatpush.bf16.msra.mxu0 %v1920
        %1932 = vmatmul.bf16.gmra.mxu0 %v1376
        %v1933 = vpop.f32.mrf.mxu0
        %v1934 = vadd.f32 0.0, %v1933
        %v1935 = vpop.f32.mrf.mxu0
        %v1936 = vadd.f32 0.0, %v1935
        %1937 = vmatmul.bf16.gmra.mxu0 %v1379
        %v1938 = vpop.f32.mrf.mxu0
        %v1939 = vadd.f32 0.0, %v1938
        %v1940 = vpop.f32.mrf.mxu0
        %1941 = vdwg.mxu0
        %v1942 = vpack.c.bf16 %v1866, %v1864
        %v1943 = vpack.c.bf16 %v1869, %v1869
        %v1944 = vpack.c.bf16 %v1901, %v1899
        %v1945 = vpack.c.bf16 %v1904, %v1904
        %v1947 = vsel %vm1471, %v1942, 0
        %v1950 = vsel %vm1471, %v1943, 0
        %v1953 = vsel %vm1471, %v1944, 0
        %v1956 = vsel %vm1471, %v1945, 0
        %1958 = vmatpush.bf16.xpose.msra.mxu0 0
        %1959 = vmatpush.bf16.xpose.msra.mxu0 0
        %1960 = vmatpush.bf16.xpose.msra.mxu0 0
        %1961 = vmatpush.bf16.xpose.msra.mxu0 0
        %1962 = vmatpush.bf16.xpose.msra.mxu0 0
        %1963 = vmatpush.bf16.xpose.msra.mxu0 0
        %1964 = vmatpush.bf16.xpose.msra.mxu0 %v1956
        %1965 = vmatpush.bf16.xpose.msra.mxu0 %v1953
        %1966 = vmatmul.bf16.gmra.mxu0 %v1947
        %v1967 = vpop.f32.mrf.mxu0
        %v1968 = vadd.f32 0.0, %v1967
        %v1969 = vpop.f32.mrf.mxu0
        %v1970 = vadd.f32 0.0, %v1969
        %1971 = vmatmul.bf16.gmra.mxu0 %v1950
        %v1972 = vpop.f32.mrf.mxu0
        %v1973 = vadd.f32 0.0, %v1972
        %v1974 = vpop.f32.mrf.mxu0
        %1975 = vdwg.mxu0
        %v1976 = vsel %vm1502, %v1968, -inf
        %1977 = vmax.xlane.f32.xlu0 %v1976
        %v1978 = vpop.xlane.xlu0 %1977
        %v1979 = vsel %vm1502, %v1970, -inf
        %1980 = vmax.xlane.f32.xlu0 %v1979
        %v1981 = vpop.xlane.xlu0 %1980
        %v1982 = vsel %vm1509, %v1973, -inf
        %1983 = vmax.xlane.f32.xlu0 %v1982
        %v1984 = vpop.xlane.xlu0 %1983
        %v1985 = vsub.f32 %v1968, %v1978
        %v1986 = vsub.f32 %v1970, %v1981
        %v1987 = vsub.f32 %v1973, %v1984
        %v1988 = vmul.f32 %v1985, 1.442695
        %v1989 = vpow.pop %v1988
        %v1990 = vmul.f32 %v1986, 1.442695
        %v1991 = vpow.pop %v1990
        %v1992 = vmul.f32 %v1987, 1.442695
        %v1993 = vpow.pop %v1992
        %v1994 = vsel %vm1502, %v1989, 0.0
        %1995 = vadd.xlane.f32.xlu0 %v1994
        %v1996 = vpop.xlane.xlu0 %1995
        %v1997 = vsel %vm1502, %v1991, 0.0
        %1998 = vadd.xlane.f32.xlu0 %v1997
        %v1999 = vpop.xlane.xlu0 %1998
        %v2000 = vsel %vm1509, %v1993, 0.0
        %2001 = vadd.xlane.f32.xlu0 %v2000
        %v2002 = vpop.xlane.xlu0 %2001
        %v2003 = vrcp.pop %v1996
        %v2004 = vrcp.pop %v1999
        %v2005 = vrcp.pop %v2002
        %v2006 = vmul.f32 %v1989, %v2003
        %v2007 = vmul.f32 %v1991, %v2004
        %v2008 = vmul.f32 %v1993, %v2005
        %v2009 = vpack.c.bf16 %v2007, %v2006
        %v2010 = vpack.c.bf16 %v2008, %v2008
        %v2011 = vpack.c.bf16 %v1936, %v1934
        %v2012 = vpack.c.bf16 %v1939, %v1939
        %v2014 = vsel %vm1502, %v2009, 0
        %v2017 = vsel %vm1502, %v2010, 0
        %v2020 = vand.u32 %v2012, %v1550
        %2022 = vmatpush.bf16.msra.mxu0 0
        %2023 = vmatpush.bf16.msra.mxu0 0
        %2024 = vmatpush.bf16.msra.mxu0 0
        %2025 = vmatpush.bf16.msra.mxu0 0
        %2026 = vmatpush.bf16.msra.mxu0 0
        %2027 = vmatpush.bf16.msra.mxu0 0
        %2028 = vmatpush.bf16.msra.mxu0 %v2020
        %2029 = vmatpush.bf16.msra.mxu0 %v2011
        %2030 = vmatmul.bf16.gmra.mxu0 %v2014
        %v2031 = vpop.f32.mrf.mxu0
        %v2032 = vadd.f32 0.0, %v2031
        %v2033 = vpop.f32.mrf.mxu0
        %v2034 = vadd.f32 0.0, %v2033
        %2035 = vmatmul.bf16.gmra.mxu0 %v2017
        %v2036 = vpop.f32.mrf.mxu0
        %v2037 = vadd.f32 0.0, %v2036
        %v2038 = vpop.f32.mrf.mxu0
        %2039 = vdwg.mxu0
        %s2040 = scalar_lea.vmem %s1047, 8
        %v2041 = vld [vmem:[%s2040] sm:$0xf]
        %v2042 = vpack.c.bf16 %v2034, %v2032
        %v2043 = vpack.c.bf16 %v2037, %v2037
        %v2045 = vsel %vm1471, %v2042, 0
        %v2048 = vsel %vm1471, %v2043, 0
        %v2051 = vsel %vm1788, %v2041, 0
        %2053 = vmatpush.bf16.msra.mxu0 0
        %2054 = vmatpush.bf16.msra.mxu0 0
        %2055 = vmatpush.bf16.msra.mxu0 0
        %2056 = vmatpush.bf16.msra.mxu0 0
        %2057 = vmatpush.bf16.msra.mxu0 0
        %2058 = vmatpush.bf16.msra.mxu0 0
        %2059 = vmatpush.bf16.msra.mxu0 0
        %2060 = vmatpush.bf16.msra.mxu0 %v2051
        %2061 = vmatmul.bf16.gmra.mxu0 %v2045
        %v2062 = vpop.f32.mrf.mxu0
        %v2063 = vadd.f32 0.0, %v2062
        %v2064 = vpop.f32.mrf.mxu0
        %v2065 = vadd.f32 0.0, %v2064
        %2066 = vmatmul.bf16.gmra.mxu0 %v2048
        %v2067 = vpop.f32.mrf.mxu0
        %v2068 = vadd.f32 0.0, %v2067
        %v2069 = vpop.f32.mrf.mxu0
        %2070 = vdwg.mxu0
        %v2071 = vadd.f32 %v1829, %v2063
        %v2072 = vadd.f32 %v1831, %v2065
        %v2073 = vadd.f32 %v1834, %v2068
        %s2074 = scalar_lea.vmem %s1032, 48
        %v2075 = vld [vmem:[%s2074] sm:$0xf]
        %v2076 = vld [vmem:[%s2074 + $0x4] sm:$0xf]
        %v2077 = vld [vmem:[%s2074 + $0x8] sm:$0xf]
        %v2078 = vld [vmem:[%s2074 + $0xc] sm:$0xf]
        %v2083 = vunpack.c.l.b16 %v2075
        %v2084 = vunpack.c.l.b16 %v2076
        %v2085 = vunpack.c.l.b16 %v2077
        %v2086 = vunpack.c.l.b16 %v2078
        %v2087 = vpack.c.b16 %v2084, %v2083
        %v2088 = vpack.c.b16 %v2086, %v2085
        %2091 = vmatpush.bf16.msra.mxu0 0
        %2092 = vmatpush.bf16.msra.mxu0 0
        %2093 = vmatpush.bf16.msra.mxu0 0
        %2094 = vmatpush.bf16.msra.mxu0 0
        %2095 = vmatpush.bf16.msra.mxu0 0
        %2096 = vmatpush.bf16.msra.mxu0 0
        %2097 = vmatpush.bf16.msra.mxu0 %v2088
        %2098 = vmatpush.bf16.msra.mxu0 %v2087
        %2099 = vmatmul.bf16.gmra.mxu0 %v1376
        %v2100 = vpop.f32.mrf.mxu0
        %v2101 = vadd.f32 0.0, %v2100
        %v2102 = vpop.f32.mrf.mxu0
        %v2103 = vadd.f32 0.0, %v2102
        %2104 = vmatmul.bf16.gmra.mxu0 %v1379
        %v2105 = vpop.f32.mrf.mxu0
        %v2106 = vadd.f32 0.0, %v2105
        %v2107 = vpop.f32.mrf.mxu0
        %2108 = vdwg.mxu0
        %s2109 = scalar_lea.vmem %s1037, 48
        %v2110 = vld [vmem:[%s2109] sm:$0xf]
        %v2111 = vld [vmem:[%s2109 + $0x4] sm:$0xf]
        %v2112 = vld [vmem:[%s2109 + $0x8] sm:$0xf]
        %v2113 = vld [vmem:[%s2109 + $0xc] sm:$0xf]
        %v2118 = vunpack.c.l.b16 %v2110
        %v2119 = vunpack.c.l.b16 %v2111
        %v2120 = vunpack.c.l.b16 %v2112
        %v2121 = vunpack.c.l.b16 %v2113
        %v2122 = vpack.c.b16 %v2119, %v2118
        %v2123 = vpack.c.b16 %v2121, %v2120
        %2126 = vmatpush.bf16.msra.mxu0 0
        %2127 = vmatpush.bf16.msra.mxu0 0
        %2128 = vmatpush.bf16.msra.mxu0 0
        %2129 = vmatpush.bf16.msra.mxu0 0
        %2130 = vmatpush.bf16.msra.mxu0 0
        %2131 = vmatpush.bf16.msra.mxu0 0
        %2132 = vmatpush.bf16.msra.mxu0 %v2123
        %2133 = vmatpush.bf16.msra.mxu0 %v2122
        %2134 = vmatmul.bf16.gmra.mxu0 %v1376
        %v2135 = vpop.f32.mrf.mxu0
        %v2136 = vadd.f32 0.0, %v2135
        %v2137 = vpop.f32.mrf.mxu0
        %v2138 = vadd.f32 0.0, %v2137
        %2139 = vmatmul.bf16.gmra.mxu0 %v1379
        %v2140 = vpop.f32.mrf.mxu0
        %v2141 = vadd.f32 0.0, %v2140
        %v2142 = vpop.f32.mrf.mxu0
        %2143 = vdwg.mxu0
        %s2144 = scalar_lea.vmem %s1042, 48
        %v2145 = vld [vmem:[%s2144] sm:$0xf]
        %v2146 = vld [vmem:[%s2144 + $0x4] sm:$0xf]
        %v2147 = vld [vmem:[%s2144 + $0x8] sm:$0xf]
        %v2148 = vld [vmem:[%s2144 + $0xc] sm:$0xf]
        %v2153 = vunpack.c.l.b16 %v2145
        %v2154 = vunpack.c.l.b16 %v2146
        %v2155 = vunpack.c.l.b16 %v2147
        %v2156 = vunpack.c.l.b16 %v2148
        %v2157 = vpack.c.b16 %v2154, %v2153
        %v2158 = vpack.c.b16 %v2156, %v2155
        %2161 = vmatpush.bf16.msra.mxu0 0
        %2162 = vmatpush.bf16.msra.mxu0 0
        %2163 = vmatpush.bf16.msra.mxu0 0
        %2164 = vmatpush.bf16.msra.mxu0 0
        %2165 = vmatpush.bf16.msra.mxu0 0
        %2166 = vmatpush.bf16.msra.mxu0 0
        %2167 = vmatpush.bf16.msra.mxu0 %v2158
        %2168 = vmatpush.bf16.msra.mxu0 %v2157
        %2169 = vmatmul.bf16.gmra.mxu0 %v1376
        %v2170 = vpop.f32.mrf.mxu0
        %v2171 = vadd.f32 0.0, %v2170
        %v2172 = vpop.f32.mrf.mxu0
        %v2173 = vadd.f32 0.0, %v2172
        %2174 = vmatmul.bf16.gmra.mxu0 %v1379
        %v2175 = vpop.f32.mrf.mxu0
        %v2176 = vadd.f32 0.0, %v2175
        %v2177 = vpop.f32.mrf.mxu0
        %2178 = vdwg.mxu0
        %v2179 = vpack.c.bf16 %v2103, %v2101
        %v2180 = vpack.c.bf16 %v2106, %v2106
        %v2181 = vpack.c.bf16 %v2138, %v2136
        %v2182 = vpack.c.bf16 %v2141, %v2141
        %v2184 = vsel %vm1471, %v2179, 0
        %v2187 = vsel %vm1471, %v2180, 0
        %v2190 = vsel %vm1471, %v2181, 0
        %v2193 = vsel %vm1471, %v2182, 0
        %2195 = vmatpush.bf16.xpose.msra.mxu0 0
        %2196 = vmatpush.bf16.xpose.msra.mxu0 0
        %2197 = vmatpush.bf16.xpose.msra.mxu0 0
        %2198 = vmatpush.bf16.xpose.msra.mxu0 0
        %2199 = vmatpush.bf16.xpose.msra.mxu0 0
        %2200 = vmatpush.bf16.xpose.msra.mxu0 0
        %2201 = vmatpush.bf16.xpose.msra.mxu0 %v2193
        %2202 = vmatpush.bf16.xpose.msra.mxu0 %v2190
        %2203 = vmatmul.bf16.gmra.mxu0 %v2184
        %v2204 = vpop.f32.mrf.mxu0
        %v2205 = vadd.f32 0.0, %v2204
        %v2206 = vpop.f32.mrf.mxu0
        %v2207 = vadd.f32 0.0, %v2206
        %2208 = vmatmul.bf16.gmra.mxu0 %v2187
        %v2209 = vpop.f32.mrf.mxu0
        %v2210 = vadd.f32 0.0, %v2209
        %v2211 = vpop.f32.mrf.mxu0
        %2212 = vdwg.mxu0
        %v2213 = vsel %vm1502, %v2205, -inf
        %2214 = vmax.xlane.f32.xlu0 %v2213
        %v2215 = vpop.xlane.xlu0 %2214
        %v2216 = vsel %vm1502, %v2207, -inf
        %2217 = vmax.xlane.f32.xlu0 %v2216
        %v2218 = vpop.xlane.xlu0 %2217
        %v2219 = vsel %vm1509, %v2210, -inf
        %2220 = vmax.xlane.f32.xlu0 %v2219
        %v2221 = vpop.xlane.xlu0 %2220
        %v2222 = vsub.f32 %v2205, %v2215
        %v2223 = vsub.f32 %v2207, %v2218
        %v2224 = vsub.f32 %v2210, %v2221
        %v2225 = vmul.f32 %v2222, 1.442695
        %v2226 = vpow.pop %v2225
        %v2227 = vmul.f32 %v2223, 1.442695
        %v2228 = vpow.pop %v2227
        %v2229 = vmul.f32 %v2224, 1.442695
        %v2230 = vpow.pop %v2229
        %v2231 = vsel %vm1502, %v2226, 0.0
        %2232 = vadd.xlane.f32.xlu0 %v2231
        %v2233 = vpop.xlane.xlu0 %2232
        %v2234 = vsel %vm1502, %v2228, 0.0
        %2235 = vadd.xlane.f32.xlu0 %v2234
        %v2236 = vpop.xlane.xlu0 %2235
        %v2237 = vsel %vm1509, %v2230, 0.0
        %2238 = vadd.xlane.f32.xlu0 %v2237
        %v2239 = vpop.xlane.xlu0 %2238
        %v2240 = vrcp.pop %v2233
        %v2241 = vrcp.pop %v2236
        %v2242 = vrcp.pop %v2239
        %v2243 = vmul.f32 %v2226, %v2240
        %v2244 = vmul.f32 %v2228, %v2241
        %v2245 = vmul.f32 %v2230, %v2242
        %v2246 = vpack.c.bf16 %v2244, %v2243
        %v2247 = vpack.c.bf16 %v2245, %v2245
        %v2248 = vpack.c.bf16 %v2173, %v2171
        %v2249 = vpack.c.bf16 %v2176, %v2176
        %v2251 = vsel %vm1502, %v2246, 0
        %v2254 = vsel %vm1502, %v2247, 0
        %v2257 = vand.u32 %v2249, %v1550
        %2259 = vmatpush.bf16.msra.mxu0 0
        %2260 = vmatpush.bf16.msra.mxu0 0
        %2261 = vmatpush.bf16.msra.mxu0 0
        %2262 = vmatpush.bf16.msra.mxu0 0
        %2263 = vmatpush.bf16.msra.mxu0 0
        %2264 = vmatpush.bf16.msra.mxu0 0
        %2265 = vmatpush.bf16.msra.mxu0 %v2257
        %2266 = vmatpush.bf16.msra.mxu0 %v2248
        %2267 = vmatmul.bf16.gmra.mxu0 %v2251
        %v2268 = vpop.f32.mrf.mxu0
        %v2269 = vadd.f32 0.0, %v2268
        %v2270 = vpop.f32.mrf.mxu0
        %v2271 = vadd.f32 0.0, %v2270
        %2272 = vmatmul.bf16.gmra.mxu0 %v2254
        %v2273 = vpop.f32.mrf.mxu0
        %v2274 = vadd.f32 0.0, %v2273
        %v2275 = vpop.f32.mrf.mxu0
        %2276 = vdwg.mxu0
        %s2277 = scalar_lea.vmem %s1047, 12
        %v2278 = vld [vmem:[%s2277] sm:$0xf]
        %v2279 = vpack.c.bf16 %v2271, %v2269
        %v2280 = vpack.c.bf16 %v2274, %v2274
        %v2282 = vsel %vm1471, %v2279, 0
        %v2285 = vsel %vm1471, %v2280, 0
        %v2288 = vsel %vm1788, %v2278, 0
        %2290 = vmatpush.bf16.msra.mxu0 0
        %2291 = vmatpush.bf16.msra.mxu0 0
        %2292 = vmatpush.bf16.msra.mxu0 0
        %2293 = vmatpush.bf16.msra.mxu0 0
        %2294 = vmatpush.bf16.msra.mxu0 0
        %2295 = vmatpush.bf16.msra.mxu0 0
        %2296 = vmatpush.bf16.msra.mxu0 0
        %2297 = vmatpush.bf16.msra.mxu0 %v2288
        %2298 = vmatmul.bf16.gmra.mxu0 %v2282
        %v2299 = vpop.f32.mrf.mxu0
        %v2300 = vadd.f32 0.0, %v2299
        %v2301 = vpop.f32.mrf.mxu0
        %v2302 = vadd.f32 0.0, %v2301
        %2303 = vmatmul.bf16.gmra.mxu0 %v2285
        %v2304 = vpop.f32.mrf.mxu0
        %v2305 = vadd.f32 0.0, %v2304
        %v2306 = vpop.f32.mrf.mxu0
        %2307 = vdwg.mxu0
        %v2308 = vadd.f32 %v2071, %v2300
        %v2309 = vadd.f32 %v2072, %v2302
        %v2310 = vadd.f32 %v2073, %v2305
        %v2311 = vadd.f32 %v1265, %v2308
        %v2312 = vadd.f32 %v1266, %v2309
        %v2313 = vadd.f32 %v1267, %v2310
        %v2314 = vld [vmem:[%s1050] sm:$0x1]
        %v2316 = vperm.slane %v2314, 0
        %v2318 = vadd.f32 %v2311, %v2316
        %v2319 = vadd.f32 %v2312, %v2316
        %v2320 = vadd.f32 %v2313, %v2316
        %v2321 = vld [vmem:[%s1053] sm:$0x1]
        %v2322 = vld [vmem:[%s1056] sm:$0x1]
        %v2323 = vsel %vm1270, %v2318, 0.0
        %2324 = vadd.xlane.f32.xlu0 %v2323
        %v2325 = vpop.xlane.xlu0 %2324
        %v2326 = vsel %vm1270, %v2319, 0.0
        %2327 = vadd.xlane.f32.xlu0 %v2326
        %v2328 = vpop.xlane.xlu0 %2327
        %v2329 = vsel %vm1277, %v2320, 0.0
        %2330 = vadd.xlane.f32.xlu0 %v2329
        %v2331 = vpop.xlane.xlu0 %2330
        %v2332 = vmul.f32 %v2325, %v1287
        %v2333 = vmul.f32 %v2328, %v1287
        %v2334 = vmul.f32 %v2331, %v1287
        %v2335 = vsub.f32 %v2318, %v2332
        %v2336 = vsub.f32 %v2319, %v2333
        %v2337 = vsub.f32 %v2320, %v2334
        %v2338 = vmul.f32 %v2335, %v2335
        %v2339 = vmul.f32 %v2336, %v2336
        %v2340 = vmul.f32 %v2337, %v2337
        %v2341 = vsel %vm1270, %v2338, 0.0
        %2342 = vadd.xlane.f32.xlu0 %v2341
        %v2343 = vpop.xlane.xlu0 %2342
        %v2344 = vsel %vm1270, %v2339, 0.0
        %2345 = vadd.xlane.f32.xlu0 %v2344
        %v2346 = vpop.xlane.xlu0 %2345
        %v2347 = vsel %vm1277, %v2340, 0.0
        %2348 = vadd.xlane.f32.xlu0 %v2347
        %v2349 = vpop.xlane.xlu0 %2348
        %v2350 = vmul.f32 %v2343, %v1287
        %v2351 = vmul.f32 %v2346, %v1287
        %v2352 = vmul.f32 %v2349, %v1287
        %v2353 = vadd.f32 %v2350, 1e-05
        %v2354 = vadd.f32 %v2351, 1e-05
        %v2355 = vadd.f32 %v2352, 1e-05
        %v2356 = vrsqrt.pop %v2353
        %v2357 = vmul.f32 %v2356, %v2353
        %v2358 = vmul.f32 %v2357, %v2356
        %v2359 = vmul.f32 0.5, %v2358
        %v2360 = vsub.f32 1.5, %v2359
        %v2361 = vmul.f32 %v2356, %v2360
        %vm2362 = vweird.f32 %v2353
        %vm2363 = vweird.f32 %v2356
        %vm2364 = vmor %vm2362, %vm2363
        %v2365 = vsel %vm2364, %v2356, %v2361
        %v2366 = vrsqrt.pop %v2354
        %v2367 = vmul.f32 %v2366, %v2354
        %v2368 = vmul.f32 %v2367, %v2366
        %v2369 = vmul.f32 0.5, %v2368
        %v2370 = vsub.f32 1.5, %v2369
        %v2371 = vmul.f32 %v2366, %v2370
        %vm2372 = vweird.f32 %v2354
        %vm2373 = vweird.f32 %v2366
        %vm2374 = vmor %vm2372, %vm2373
        %v2375 = vsel %vm2374, %v2366, %v2371
        %v2376 = vrsqrt.pop %v2355
        %v2377 = vmul.f32 %v2376, %v2355
        %v2378 = vmul.f32 %v2377, %v2376
        %v2379 = vmul.f32 0.5, %v2378
        %v2380 = vsub.f32 1.5, %v2379
        %v2381 = vmul.f32 %v2376, %v2380
        %vm2382 = vweird.f32 %v2355
        %vm2383 = vweird.f32 %v2376
        %vm2384 = vmor %vm2382, %vm2383
        %v2385 = vsel %vm2384, %v2376, %v2381
        %v2386 = vmul.f32 %v2335, %v2365
        %v2387 = vmul.f32 %v2336, %v2375
        %v2388 = vmul.f32 %v2337, %v2385
        %v2390 = vperm.slane %v2321, 0
        %v2392 = vmul.f32 %v2386, %v2390
        %v2393 = vmul.f32 %v2387, %v2390
        %v2394 = vmul.f32 %v2388, %v2390
        %v2396 = vperm.slane %v2322, 0
        %v2398 = vadd.f32 %v2392, %v2396
        %v2399 = vadd.f32 %v2393, %v2396
        %v2400 = vadd.f32 %v2394, %v2396
        %v2401 = vld [vmem:[%s1061] sm:$0xf]
        %v2402 = vld [vmem:[%s1061 + $0x4] sm:$0xf]
        %v2403 = vld [vmem:[%s1061 + $0x8] sm:$0xf]
        %v2404 = vld [vmem:[%s1061 + $0xc] sm:$0xf]
        %v2405 = vpack.c.bf16 %v2399, %v2398
        %v2406 = vpack.c.bf16 %v2400, %v2400
        %v2407 = vld [vmem:[%s1064] sm:$0x1]
        %v2409 = vperm.slane %v2407, 0
        %v2415 = vunpack.c.l.b16 %v2401
        %v2416 = vunpack.c.l.b16 %v2402
        %v2417 = vunpack.c.l.b16 %v2403
        %v2418 = vunpack.c.l.b16 %v2404
        %v2419 = vpack.c.b16 %v2416, %v2415
        %v2420 = vpack.c.b16 %v2418, %v2417
        %v2424 = vsel %vm1270, %v2405, 0
        %v2427 = vsel %vm1270, %v2406, 0
        %2429 = vmatpush.bf16.msra.mxu0 0
        %2430 = vmatpush.bf16.msra.mxu0 0
        %2431 = vmatpush.bf16.msra.mxu0 0
        %2432 = vmatpush.bf16.msra.mxu0 0
        %2433 = vmatpush.bf16.msra.mxu0 0
        %2434 = vmatpush.bf16.msra.mxu0 0
        %2435 = vmatpush.bf16.msra.mxu0 %v2420
        %2436 = vmatpush.bf16.msra.mxu0 %v2419
        %2437 = vmatmul.bf16.gmra.mxu0 %v2424
        %v2438 = vpop.f32.mrf.mxu0
        %v2439 = vadd.f32 %v2409, %v2438
        %v2440 = vpop.f32.mrf.mxu0
        %v2441 = vadd.f32 %v2409, %v2440
        %2442 = vmatmul.bf16.gmra.mxu0 %v2427
        %v2443 = vpop.f32.mrf.mxu0
        %v2444 = vadd.f32 %v2409, %v2443
        %v2445 = vpop.f32.mrf.mxu0
        %2446 = vdwg.mxu0
        %v2447 = vmul.f32 %v2439, 0.5
        %v2448 = vmul.f32 %v2441, 0.5
        %v2449 = vmul.f32 %v2444, 0.5
        %v2450 = vmul.f32 %v2439, 0.70710677
        %v2451 = vmul.f32 %v2441, 0.70710677
        %v2452 = vmul.f32 %v2444, 0.70710677
        %v2453 = vmul.f32 %v2450, %v2450
        %v2454 = vmin.f32 16.0, %v2453
        %v2455 = vmul.f32 %v2454, 2.1237322e-06
        %v2456 = vadd.f32 %v2455, 0.00028619796
        %v2457 = vmul.f32 %v2454, %v2456
        %v2458 = vadd.f32 %v2457, 0.0036580483
        %v2459 = vmul.f32 %v2454, %v2458
        %v2460 = vadd.f32 %v2459, 0.05243302
        %v2461 = vmul.f32 %v2454, %v2460
        %v2462 = vadd.f32 %v2461, 0.18741608
        %v2463 = vmul.f32 %v2454, %v2462
        %v2464 = vadd.f32 %v2463, 1.1283791
        %v2465 = vmul.f32 %v2450, %v2464
        %v2466 = vmul.f32 %v2454, 3.8918573e-05
        %v2467 = vadd.f32 %v2466, 0.001143296
        %v2468 = vmul.f32 %v2454, %v2467
        %v2469 = vadd.f32 %v2468, 0.014752088
        %v2470 = vmul.f32 %v2454, %v2469
        %v2471 = vadd.f32 %v2470, 0.112945676
        %v2472 = vmul.f32 %v2454, %v2471
        %v2473 = vadd.f32 %v2472, 0.4994258
        %v2474 = vmul.f32 %v2454, %v2473
        %v2475 = vadd.f32 %v2474, 1.0
        %v2476 = vrcp.pop %v2475
        %v2477 = vmul.f32 %v2475, %v2476
        %v2478 = vsub.f32 1.0, %v2477
        %v2479 = vmul.f32 %v2476, %v2478
        %v2480 = vadd.f32 %v2476, %v2479
        %vm2481 = vweird.f32 %v2475
        %vm2482 = vweird.f32 %v2476
        %vm2483 = vmor %vm2481, %vm2482
        %v2484 = vsel %vm2483, %v2476, %v2480
        %v2485 = vand.u32 2147483647, %v2475
        %vm2486 = vcmp.eq.f32.partialorder %v2485, 8.507059e+37
        %v2487 = vand.u32 %v2475, 2147483648
        %v2488 = vor.u32 1.1754944e-38, %v2487
        %v2489 = vsel %vm2486, %v2488, %v2484
        %v2490 = vmul.f32 %v2465, %v2489
        %v2491 = vmin.f32 %v2490, 1.0
        %v2492 = vmax.f32 %v2491, -1.0
        %v2493 = vmul.f32 %v2451, %v2451
        %v2494 = vmin.f32 16.0, %v2493
        %v2495 = vmul.f32 %v2494, 2.1237322e-06
        %v2496 = vadd.f32 %v2495, 0.00028619796
        %v2497 = vmul.f32 %v2494, %v2496
        %v2498 = vadd.f32 %v2497, 0.0036580483
        %v2499 = vmul.f32 %v2494, %v2498
        %v2500 = vadd.f32 %v2499, 0.05243302
        %v2501 = vmul.f32 %v2494, %v2500
        %v2502 = vadd.f32 %v2501, 0.18741608
        %v2503 = vmul.f32 %v2494, %v2502
        %v2504 = vadd.f32 %v2503, 1.1283791
        %v2505 = vmul.f32 %v2451, %v2504
        %v2506 = vmul.f32 %v2494, 3.8918573e-05
        %v2507 = vadd.f32 %v2506, 0.001143296
        %v2508 = vmul.f32 %v2494, %v2507
        %v2509 = vadd.f32 %v2508, 0.014752088
        %v2510 = vmul.f32 %v2494, %v2509
        %v2511 = vadd.f32 %v2510, 0.112945676
        %v2512 = vmul.f32 %v2494, %v2511
        %v2513 = vadd.f32 %v2512, 0.4994258
        %v2514 = vmul.f32 %v2494, %v2513
        %v2515 = vadd.f32 %v2514, 1.0
        %v2516 = vrcp.pop %v2515
        %v2517 = vmul.f32 %v2515, %v2516
        %v2518 = vsub.f32 1.0, %v2517
        %v2519 = vmul.f32 %v2516, %v2518
        %v2520 = vadd.f32 %v2516, %v2519
        %vm2521 = vweird.f32 %v2515
        %vm2522 = vweird.f32 %v2516
        %vm2523 = vmor %vm2521, %vm2522
        %v2524 = vsel %vm2523, %v2516, %v2520
        %v2525 = vand.u32 2147483647, %v2515
        %vm2526 = vcmp.eq.f32.partialorder %v2525, 8.507059e+37
        %v2527 = vand.u32 %v2515, 2147483648
        %v2528 = vor.u32 1.1754944e-38, %v2527
        %v2529 = vsel %vm2526, %v2528, %v2524
        %v2530 = vmul.f32 %v2505, %v2529
        %v2531 = vmin.f32 %v2530, 1.0
        %v2532 = vmax.f32 %v2531, -1.0
        %v2533 = vmul.f32 %v2452, %v2452
        %v2534 = vmin.f32 16.0, %v2533
        %v2535 = vmul.f32 %v2534, 2.1237322e-06
        %v2536 = vadd.f32 %v2535, 0.00028619796
        %v2537 = vmul.f32 %v2534, %v2536
        %v2538 = vadd.f32 %v2537, 0.0036580483
        %v2539 = vmul.f32 %v2534, %v2538
        %v2540 = vadd.f32 %v2539, 0.05243302
        %v2541 = vmul.f32 %v2534, %v2540
        %v2542 = vadd.f32 %v2541, 0.18741608
        %v2543 = vmul.f32 %v2534, %v2542
        %v2544 = vadd.f32 %v2543, 1.1283791
        %v2545 = vmul.f32 %v2452, %v2544
        %v2546 = vmul.f32 %v2534, 3.8918573e-05
        %v2547 = vadd.f32 %v2546, 0.001143296
        %v2548 = vmul.f32 %v2534, %v2547
        %v2549 = vadd.f32 %v2548, 0.014752088
        %v2550 = vmul.f32 %v2534, %v2549
        %v2551 = vadd.f32 %v2550, 0.112945676
        %v2552 = vmul.f32 %v2534, %v2551
        %v2553 = vadd.f32 %v2552, 0.4994258
        %v2554 = vmul.f32 %v2534, %v2553
        %v2555 = vadd.f32 %v2554, 1.0
        %v2556 = vrcp.pop %v2555
        %v2557 = vmul.f32 %v2555, %v2556
        %v2558 = vsub.f32 1.0, %v2557
        %v2559 = vmul.f32 %v2556, %v2558
        %v2560 = vadd.f32 %v2556, %v2559
        %vm2561 = vweird.f32 %v2555
        %vm2562 = vweird.f32 %v2556
        %vm2563 = vmor %vm2561, %vm2562
        %v2564 = vsel %vm2563, %v2556, %v2560
        %v2565 = vand.u32 2147483647, %v2555
        %vm2566 = vcmp.eq.f32.partialorder %v2565, 8.507059e+37
        %v2567 = vand.u32 %v2555, 2147483648
        %v2568 = vor.u32 1.1754944e-38, %v2567
        %v2569 = vsel %vm2566, %v2568, %v2564
        %v2570 = vmul.f32 %v2545, %v2569
        %v2571 = vmin.f32 %v2570, 1.0
        %v2572 = vmax.f32 %v2571, -1.0
        %v2573 = vadd.f32 %v2492, 1.0
        %v2574 = vadd.f32 %v2532, 1.0
        %v2575 = vadd.f32 %v2572, 1.0
        %v2576 = vmul.f32 %v2447, %v2573
        %v2577 = vmul.f32 %v2448, %v2574
        %v2578 = vmul.f32 %v2449, %v2575
        %v2579 = vld [vmem:[%s1069] sm:$0xf]
        %v2580 = vld [vmem:[%s1069 + $0x4] sm:$0xf]
        %v2581 = vld [vmem:[%s1069 + $0x8] sm:$0xf]
        %v2582 = vld [vmem:[%s1069 + $0xc] sm:$0xf]
        %v2583 = vld [vmem:[%s1069 + $0x10] sm:$0xf]
        %v2584 = vld [vmem:[%s1069 + $0x14] sm:$0xf]
        %v2585 = vld [vmem:[%s1069 + $0x18] sm:$0xf]
        %v2586 = vld [vmem:[%s1069 + $0x1c] sm:$0xf]
        %v2587 = vpack.c.bf16 %v2577, %v2576
        %v2588 = vpack.c.bf16 %v2578, %v2578
        %v2597 = vunpack.c.l.b16 %v2579
        %v2598 = vunpack.c.l.b16 %v2580
        %v2599 = vunpack.c.l.b16 %v2581
        %v2600 = vunpack.c.l.b16 %v2582
        %v2601 = vunpack.c.l.b16 %v2583
        %v2602 = vunpack.c.l.b16 %v2584
        %v2603 = vunpack.c.l.b16 %v2585
        %v2604 = vunpack.c.l.b16 %v2586
        %v2605 = vpack.c.b16 %v2598, %v2597
        %v2606 = vpack.c.b16 %v2600, %v2599
        %v2607 = vpack.c.b16 %v2602, %v2601
        %v2608 = vpack.c.b16 %v2604, %v2603
        %vm2613 = vcmask 523264
        %v2615 = vsel %vm2613, %v2587, 0
        %v2618 = vsel %vm2613, %v2588, 0
        %2620 = vmatpush.bf16.msra.mxu0 0
        %2621 = vmatpush.bf16.msra.mxu0 0
        %2622 = vmatpush.bf16.msra.mxu0 0
        %2623 = vmatpush.bf16.msra.mxu0 0
        %2624 = vmatpush.bf16.msra.mxu0 %v2608
        %2625 = vmatpush.bf16.msra.mxu0 %v2607
        %2626 = vmatpush.bf16.msra.mxu0 %v2606
        %2627 = vmatpush.bf16.msra.mxu0 %v2605
        %2628 = vmatmul.bf16.gmra.mxu0 %v2615
        %v2629 = vpop.f32.mrf.mxu0
        %v2630 = vadd.f32 0.0, %v2629
        %v2631 = vpop.f32.mrf.mxu0
        %v2632 = vadd.f32 0.0, %v2631
        %2633 = vmatmul.bf16.gmra.mxu0 %v2618
        %v2634 = vpop.f32.mrf.mxu0
        %v2635 = vadd.f32 0.0, %v2634
        %v2636 = vpop.f32.mrf.mxu0
        %2637 = vdwg.mxu0
        %v2638 = vadd.f32 %v2318, %v2630
        %v2639 = vadd.f32 %v2319, %v2632
        %v2640 = vadd.f32 %v2320, %v2635
        %v2641 = vld [vmem:[%s1072] sm:$0x1]
        %v2643 = vperm.slane %v2641, 0
        %v2645 = vadd.f32 %v2638, %v2643
        %v2646 = vadd.f32 %v2639, %v2643
        %v2647 = vadd.f32 %v2640, %v2643
        %2648 = vst.msk [vmem:[#allocation2] sm:$0xff] %vm1270, %v2645
        %2649 = vst.msk [vmem:[#allocation2 + $0x8] sm:$0xff] %vm1270, %v2646
        %2650 = vst.msk [vmem:[#allocation2 + $0x10] sm:$0x7] %vm1277, %v2647
        %p2651 = scmp.eq.s32.totalorder %s47, 1
        // Predicated region
        $region137: #{vit_forward_pallas.1} parent=131 // pred_check
          %p2652 = pneg %p2651
        $region138: #{vit_forward_pallas.1} parent=131 // pred_check_branch
          %2654 = sbr.rel (%p2652) target = $region140
        $region139: #{vit_forward_pallas.1} parent=131 // pred_region
          %v2655 = vld [vmem:[#allocation2 + $0x10] sm:$0x7]
          %v2656 = vsel %vm1277, %v2655, 0.0
          %2657 = vadd.xlane.f32.xlu0 %v2656
          %v2658 = vpop.xlane.xlu0 %2657
          %vm2659 = vcmask 1042432
          %v2660 = vsel %vm2659, %v2658, 0.0
          %v2661 = vrot.slane %v2660, 4
          %v2662 = vadd.f32 %v2660, %v2661
          %v2663 = vrot.slane %v2662, 2
          %v2664 = vadd.f32 %v2662, %v2663
          %v2665 = vrot.slane %v2664, 1
          %v2666 = vadd.f32 %v2664, %v2665
          %v2667 = vrcp.pop 96.0
          %v2668 = vmul.f32 96.0, %v2667
          %v2669 = vsub.f32 1.0, %v2668
          %v2670 = vmul.f32 %v2667, %v2669
          %v2671 = vadd.f32 %v2667, %v2670
          %vm2672 = vweird.f32 %v2667
          %v2673 = vsel %vm2672, %v2667, %v2671
          %v2674 = vmul.f32 %v2666, %v2673
          %v2675 = vsub.f32 %v2655, %v2674
          %v2676 = vmul.f32 %v2675, %v2675
          %v2677 = vsel %vm1277, %v2676, 0.0
          %2678 = vadd.xlane.f32.xlu0 %v2677
          %v2679 = vpop.xlane.xlu0 %2678
          %v2680 = vsel %vm2659, %v2679, 0.0
          %v2681 = vrot.slane %v2680, 4
          %v2682 = vadd.f32 %v2680, %v2681
          %v2683 = vrot.slane %v2682, 2
          %v2684 = vadd.f32 %v2682, %v2683
          %v2685 = vrot.slane %v2684, 1
          %v2686 = vadd.f32 %v2684, %v2685
          %v2687 = vmul.f32 %v2686, %v2673
          %v2688 = vadd.f32 %v2687, 1e-05
          %v2689 = vrsqrt.pop %v2688
          %v2690 = vmul.f32 %v2689, %v2688
          %v2691 = vmul.f32 %v2690, %v2689
          %v2692 = vmul.f32 0.5, %v2691
          %v2693 = vsub.f32 1.5, %v2692
          %v2694 = vmul.f32 %v2689, %v2693
          %vm2695 = vweird.f32 %v2688
          %vm2696 = vweird.f32 %v2689
          %vm2697 = vmor %vm2695, %vm2696
          %v2698 = vsel %vm2697, %v2689, %v2694
          %v2699 = vmul.f32 %v2675, %v2698
          %v2700 = vld [vmem:[%s22] sm:$0x7]
          %v2701 = vmul.f32 %v2699, %v2700
          %v2702 = vld [vmem:[%s23] sm:$0x7]
          %v2703 = vadd.f32 %v2701, %v2702
          %v2704 = vld [vmem:[%s24] sm:$0xf]
          %v2705 = vld [vmem:[%s24 + $0x4] sm:$0xf]
          %v2706 = vld [vmem:[%s24 + $0x8] sm:$0xf]
          %v2707 = vld [vmem:[%s24 + $0xc] sm:$0xf]
          %v2708 = vpack.c.bf16 %v2703, %v2703
          %s2709 = scalar_lea.vmem %s24, 16
          %v2710 = vld [vmem:[%s2709] sm:$0xf]
          %v2711 = vld [vmem:[%s2709 + $0x4] sm:$0xf]
          %v2712 = vld [vmem:[%s2709 + $0x8] sm:$0xf]
          %v2713 = vld [vmem:[%s2709 + $0xc] sm:$0xf]
          %v2715 = vshrl.u32 %v2708, 16
          %v2721 = vunpack.c.l.b16 %v2710
          %v2722 = vunpack.c.l.b16 %v2711
          %v2723 = vunpack.c.l.b16 %v2712
          %v2724 = vunpack.c.l.b16 %v2713
          %v2725 = vpack.c.b16 %v2722, %v2721
          %v2726 = vpack.c.b16 %v2724, %v2723
          %v2730 = vsel %vm1270, %v2715, 0
          %2732 = vmatpush.bf16.msra.mxu0 0
          %2733 = vmatpush.bf16.msra.mxu0 0
          %2734 = vmatpush.bf16.msra.mxu0 0
          %2735 = vmatpush.bf16.msra.mxu0 0
          %2736 = vmatpush.bf16.msra.mxu0 0
          %2737 = vmatpush.bf16.msra.mxu0 0
          %2738 = vmatpush.bf16.msra.mxu0 %v2726
          %2739 = vmatpush.bf16.msra.mxu0 %v2725
          %2740 = vmatmul.bf16.gmra.mxu0 %v2730
          %v2741 = vpop.f32.mrf.mxu0
          %v2742 = vadd.f32 0.0, %v2741
          %v2743 = vpop.f32.mrf.mxu0
          %2744 = vdwg.mxu0
          %v2749 = vunpack.c.l.b16 %v2704
          %v2750 = vunpack.c.l.b16 %v2705
          %v2751 = vunpack.c.l.b16 %v2706
          %v2752 = vunpack.c.l.b16 %v2707
          %v2753 = vpack.c.b16 %v2750, %v2749
          %v2754 = vpack.c.b16 %v2752, %v2751
          %v2757 = vsel %vm1270, %v2708, 0
          %2759 = vmatpush.bf16.msra.mxu0 0
          %2760 = vmatpush.bf16.msra.mxu0 0
          %2761 = vmatpush.bf16.msra.mxu0 0
          %2762 = vmatpush.bf16.msra.mxu0 0
          %2763 = vmatpush.bf16.msra.mxu0 0
          %2764 = vmatpush.bf16.msra.mxu0 0
          %2765 = vmatpush.bf16.msra.mxu0 %v2754
          %2766 = vmatpush.bf16.msra.mxu0 %v2753
          %2767 = vmatmul.bf16.gmra.mxu0 %v2757
          %v2768 = vpop.f32.mrf.mxu0
          %v2769 = vadd.f32 %v2742, %v2768
          %v2770 = vpop.f32.mrf.mxu0
          %2771 = vdwg.mxu0
          %s2772 = scalar_lea.vmem %s24, 32
          %v2773 = vld [vmem:[%s2772] sm:$0xf]
          %v2774 = vld [vmem:[%s2772 + $0x4] sm:$0xf]
          %v2775 = vld [vmem:[%s2772 + $0x8] sm:$0xf]
          %v2776 = vld [vmem:[%s2772 + $0xc] sm:$0xf]
          %v2778 = vrot.slane %v2708, 1
          %v2783 = vunpack.c.l.b16 %v2773
          %v2784 = vunpack.c.l.b16 %v2774
          %v2785 = vunpack.c.l.b16 %v2775
          %v2786 = vunpack.c.l.b16 %v2776
          %v2787 = vpack.c.b16 %v2784, %v2783
          %v2788 = vpack.c.b16 %v2786, %v2785
          %v2792 = vsel %vm1270, %v2778, 0
          %2794 = vmatpush.bf16.msra.mxu0 0
          %2795 = vmatpush.bf16.msra.mxu0 0
          %2796 = vmatpush.bf16.msra.mxu0 0
          %2797 = vmatpush.bf16.msra.mxu0 0
          %2798 = vmatpush.bf16.msra.mxu0 0
          %2799 = vmatpush.bf16.msra.mxu0 0
          %2800 = vmatpush.bf16.msra.mxu0 %v2788
          %2801 = vmatpush.bf16.msra.mxu0 %v2787
          %2802 = vmatmul.bf16.gmra.mxu0 %v2792
          %v2803 = vpop.f32.mrf.mxu0
          %v2804 = vadd.f32 0.0, %v2803
          %v2805 = vpop.f32.mrf.mxu0
          %2806 = vdwg.mxu0
          %v2807 = vadd.f32 %v2769, %v2804
          %v2808 = vld [vmem:[%s25] sm:$0x1]
          %v2809 = vadd.f32 %v2807, %v2808
          %v2810 = vld [vmem:[%s26] sm:$0xf]
          %v2811 = vld [vmem:[%s26 + $0x4] sm:$0xf]
          %v2812 = vld [vmem:[%s26 + $0x8] sm:$0xf]
          %v2813 = vld [vmem:[%s26 + $0xc] sm:$0xf]
          %v2814 = vld [vmem:[%s26 + $0x10] sm:$0xf]
          %v2815 = vld [vmem:[%s26 + $0x14] sm:$0xf]
          %v2816 = vld [vmem:[%s26 + $0x18] sm:$0xf]
          %v2817 = vld [vmem:[%s26 + $0x1c] sm:$0xf]
          %v2818 = vld [vmem:[%s26 + $0x20] sm:$0xf]
          %v2819 = vld [vmem:[%s26 + $0x24] sm:$0xf]
          %v2820 = vld [vmem:[%s26 + $0x28] sm:$0xf]
          %v2821 = vld [vmem:[%s26 + $0x2c] sm:$0xf]
          %v2822 = vld [vmem:[%s26 + $0x30] sm:$0xf]
          %v2823 = vld [vmem:[%s26 + $0x34] sm:$0xf]
          %v2824 = vld [vmem:[%s26 + $0x38] sm:$0xf]
          %v2825 = vld [vmem:[%s26 + $0x3c] sm:$0xf]
          %v2826 = vpack.c.bf16 %v2809, %v2809
          %v2827 = vld [vmem:[%s27] sm:$0x1]
          %v2844 = vunpack.c.l.b16 %v2810
          %v2845 = vunpack.c.l.b16 %v2811
          %v2846 = vunpack.c.l.b16 %v2812
          %v2847 = vunpack.c.l.b16 %v2813
          %v2848 = vunpack.c.l.b16 %v2814
          %v2849 = vunpack.c.l.b16 %v2815
          %v2850 = vunpack.c.l.b16 %v2816
          %v2851 = vunpack.c.l.b16 %v2817
          %v2852 = vunpack.c.l.b16 %v2818
          %v2853 = vunpack.c.l.b16 %v2819
          %v2854 = vunpack.c.l.b16 %v2820
          %v2855 = vunpack.c.l.b16 %v2821
          %v2856 = vunpack.c.l.b16 %v2822
          %v2857 = vunpack.c.l.b16 %v2823
          %v2858 = vunpack.c.l.b16 %v2824
          %v2859 = vunpack.c.l.b16 %v2825
          %v2860 = vpack.c.b16 %v2845, %v2844
          %v2861 = vpack.c.b16 %v2847, %v2846
          %v2862 = vpack.c.b16 %v2849, %v2848
          %v2863 = vpack.c.b16 %v2851, %v2850
          %v2864 = vpack.c.b16 %v2853, %v2852
          %v2865 = vpack.c.b16 %v2855, %v2854
          %v2866 = vpack.c.b16 %v2857, %v2856
          %v2867 = vpack.c.b16 %v2859, %v2858
          %2876 = vmatpush.bf16.msra.mxu0 %v2867
          %2877 = vmatpush.bf16.msra.mxu0 %v2866
          %2878 = vmatpush.bf16.msra.mxu0 %v2865
          %2879 = vmatpush.bf16.msra.mxu0 %v2864
          %2880 = vmatpush.bf16.msra.mxu0 %v2863
          %2881 = vmatpush.bf16.msra.mxu0 %v2862
          %2882 = vmatpush.bf16.msra.mxu0 %v2861
          %2883 = vmatpush.bf16.msra.mxu0 %v2860
          %2884 = vmatmul.bf16.gmra.mxu0 %v2826
          %v2885 = vpop.f32.mrf.mxu0
          %v2886 = vadd.f32 %v2827, %v2885
          %v2887 = vpop.f32.mrf.mxu0
          %2888 = vdwg.mxu0
          %vm2889 = vcmask 73728
          %2890 = vst.msk [vmem:[%s1016] sm:$0x1] %vm2889, %v2886
        $region140: #{vit_forward_pallas.1} parent=131 // pred_fallthru
          _
        %s2891 = sand.u32 %s720, 1
        %s2892 = scalar_lea.sflag [#allocation4], %s2891
        %s2893 = sand.u32 %s720, 1
        %s2894 = scalar_lea.vmem [#allocation3], %s2893
        // Predicated region
        $region141: #{vit_forward_pallas.1} parent=131 // pred_check
          %p2895 = pneg %p730
        $region142: #{vit_forward_pallas.1} parent=131 // pred_check_branch
          %2897 = sbr.rel (%p2895) target = $region144
        $region143: #{vit_forward_pallas.1} parent=131 // pred_region
          %2899 = vsyncadd %s2892, 0
          %s2900 = scalar_lea.hbm %s28, %s46
          %s2902 = sshll.u32 %s2894, 4
          %s2903 = int_to_ptr.vmem [resolvable:$true] %s2902
          %s2904 = sshll.u32 %s2900, 4
          %s2905 = int_to_ptr.hbm [resolvable:$true] %s2904
          %2907 = dma.vmem_to_hbm [thread:$0]  %s2903, 16, %s2905, %s2892
        $region144: #{vit_forward_pallas.1} parent=131 // pred_fallthru
          _
      $region132: #{vit_forward_pallas.1} parent=5 // pred_fallthru
        _
      %p2908 = scmp.le.s32.totalorder 2, %s37
      // Predicated region
      $region145: #{vit_forward_pallas.1} parent=5 // pred_check
        %p2909 = pneg %p2908
      $region146: #{vit_forward_pallas.1} parent=5 // pred_check_branch
        %2911 = sbr.rel (%p2909) target = $region148
      $region147: #{vit_forward_pallas.1} parent=5 // pred_region
        %s2912 = ssub.s32 %s37, 2
        // Predicated region
        $region149: #{vit_forward_pallas.1} parent=147 // pred_check
          %p2913 = pneg %p736
        $region150: #{vit_forward_pallas.1} parent=147 // pred_check_branch
          %2915 = sbr.rel (%p2913) target = $region152
        $region151: #{vit_forward_pallas.1} parent=147 // pred_region
          %s2916 = sand.u32 %s721, 1
          %s2917 = scalar_lea.sflag [#allocation4], %s2916
          %s2918 = sand.u32 %s721, 1
          %s2919 = scalar_lea.vmem [#allocation3], %s2918
          %2921 = dma.done %s2917, 16
        $region152: #{vit_forward_pallas.1} parent=147 // pred_fallthru
          _
      $region148: #{vit_forward_pallas.1} parent=5 // pred_fallthru
        _
    $region6: #{vit_forward_pallas.1} parent=1 // loop_footer
      %s41 = sadd.s32 1, %s37
    $region7: #{vit_forward_pallas.1} parent=1 // loop_footer_branch
      %36 = sbr.rel target = $region3
    $region8: #{vit_forward_pallas.1} parent=1 // loop_exit
      _
    %2922 = vsyncpa [#allocation4], 1
    %s2923 = scalar_lea.sflag [#allocation4], 1
    %2924 = vsyncpa %s2923, 1

</llo_original>
